<compile_context>
chip_gen: v5e
topology: v5e:2x2
jax: 0.10.0
libtpu: 0.0.40
codegen_flags: <defaults>
</compile_context>

<pallas_src>
import functools

import jax
import jax.numpy as jnp
from jax import lax
from jax.experimental import pallas as pl
from jax.experimental.pallas import tpu as pltpu


_CFG = [(64, 64, 1), (64, 64, 1),        # layer1
        (64, 128, 2), (128, 128, 1),     # layer2
        (128, 256, 2), (256, 256, 1),    # layer3
        (256, 512, 2), (512, 512, 1)]    # layer4


def _round_up(x, m):
    return (x + m - 1) // m * m


def _pick_tm(m, n):
    # larger row tiles where the output is narrow; smaller for wide/deep layers
    if n <= 64:
        tm = 1024
    elif n <= 256:
        tm = 512
    else:
        tm = 256
    return max(128, min(tm, _round_up(m, 128)))


def _pad_rows(m, tm):
    """Round the row count up to a tile multiple with an EVEN tile count so the
    'parallel' grid axis splits evenly across v7x's two TensorCores."""
    m_pad = _round_up(m, tm)
    if (m_pad // tm) % 2 == 1:
        m_pad += tm
    return m_pad


# -------------------- runtime-resolved compile choices --------------------- #

_BUFFERED1_OK = None


def _buffered1_ok():
    """Probe whether pipeline_mode=pl.Buffered(1) is accepted (review #3)."""
    global _BUFFERED1_OK
    if _BUFFERED1_OK is None:
        try:
            def k(x_ref, o_ref):
                o_ref[...] = x_ref[...] * 2.0

            x = jnp.arange(8 * 128, dtype=jnp.float32).reshape(8, 128)
            spec = pl.BlockSpec((8, 128), lambda i: (0, 0),
                                pipeline_mode=pl.Buffered(1))
            r = pl.pallas_call(
                k,
                out_shape=jax.ShapeDtypeStruct((16, 128), jnp.float32),
                grid=(2,),
                in_specs=[spec],
                out_specs=pl.BlockSpec((8, 128), lambda i: (i, 0)),
            )(x)
            jax.block_until_ready(r)
            _BUFFERED1_OK = bool(jnp.allclose(r[:8], x * 2.0)) and \
                bool(jnp.allclose(r[8:], x * 2.0))
        except Exception:
            _BUFFERED1_OK = False
    return _BUFFERED1_OK


_VMEM_LIMIT = None


def _vmem_limit():
    """64 MiB scoped VMEM on 128-MiB parts (v5e/v6e), 32 MiB otherwise."""
    global _VMEM_LIMIT
    if _VMEM_LIMIT is None:
        try:
            cap = pltpu.get_tpu_info().vmem_capacity_bytes
        except Exception:
            cap = 0
        _VMEM_LIMIT = (64 if cap >= 100 * 1024 * 1024 else 32) * 1024 * 1024
    return _VMEM_LIMIT


def _resident_spec(block_shape):
    """Constant-index_map (resident) block; single-buffered when supported."""
    idx_map = lambda i, _n=len(block_shape): (0,) * _n
    if _buffered1_ok():
        return pl.BlockSpec(block_shape, idx_map, pipeline_mode=pl.Buffered(1))
    return pl.BlockSpec(block_shape, idx_map)


# ------------------------------ Pallas kernel ------------------------------ #

def _conv_mm_kernel(*refs, taps, row_stride, tm, relu, has_sc, has_res):
    """Fused conv-as-matmul + bias [+ 1x1-shortcut matmul] [+ residual] [+ ReLU].

    taps is None     : plain GEMM; a_ref is a streamed (tm, K) tile, w_ref is
                       (1, K, N).
    taps = (kh, kw)  : fused row-shift conv.  a_ref is the whole flattened,
                       halo-padded activation resident in VMEM.  For each of
                       the kh tap groups one aligned slab of tm+8 rows is
                       loaded; the kw column-shifted copies are stacked along
                       the contraction dim and contracted in a single deep
                       matmul against w_ref[kh] of shape (kw*K, N).
                       (3,3) => stride-1 3x3 conv on the padded grid;
                       (2,2) => stride-2 3x3 conv on the 2x2 phase-decomposed
                       grid (K already contains the 4 stacked phases).
    """
    refs = list(refs)
    a_ref = refs.pop(0)
    w_ref = refs.pop(0)
    b_ref = refs.pop(0)
    sc_ref = wsc_ref = r_ref = None
    if has_sc:
        sc_ref = refs.pop(0)
        wsc_ref = refs.pop(0)
    if has_res:
        r_ref = refs.pop(0)
    o_ref = refs.pop(0)

    if taps is None:
        acc = jnp.dot(a_ref[...], w_ref[0], preferred_element_type=jnp.float32)
    else:
        n_kh, n_kw = taps
        acc = None
        for kh in range(n_kh):
            # row_stride (padded width) and tm are multiples of 8 -> aligned.
            start = pl.multiple_of(pl.program_id(0) * tm + kh * row_stride, 8)
            grp = a_ref[pl.ds(start, tm + 8), :]
            if n_kw > 1:
                slab = jnp.concatenate(
                    [grp[kw:kw + tm, :] for kw in range(n_kw)], axis=-1)
            else:
                slab = grp[:tm, :]
            part = jnp.dot(slab, w_ref[kh], preferred_element_type=jnp.float32)
            acc = part if acc is None else acc + part

    if has_sc:  # fused 1x1 projection shortcut
        acc = acc + jnp.dot(sc_ref[...], wsc_ref[0],
                            preferred_element_type=jnp.float32)

    out = acc + b_ref[...]                       # folded-BN bias (f32)
    if has_res:                                  # identity residual
        out = out + r_ref[...].astype(jnp.float32)
    if relu:
        out = jnp.maximum(out, 0.0)
    o_ref[...] = out.astype(o_ref.dtype)


def _conv_mm(a, w_taps, bias, *, tm, m_pad, taps, row_stride, relu,
             residual=None, shortcut=None):
    r_rows, k = a.shape
    t, kk, n = w_taps.shape
    grid = (m_pad // tm,)

    if taps is None:
        a_spec = pl.BlockSpec((tm, k), lambda i: (i, 0))       # streamed tiles
    else:
        a_spec = _resident_spec((r_rows, k))                   # whole A resident
    in_specs = [a_spec,
                _resident_spec((t, kk, n)),                    # weights resident
                _resident_spec((1, n))]                        # bias resident
    args = [a, w_taps, bias.reshape(1, n).astype(jnp.float32)]

    has_sc = shortcut is not None
    has_res = residual is not None
    if has_sc:
        sc_a, sc_w = shortcut
        ksc = sc_a.shape[1]
        in_specs.append(pl.BlockSpec((tm, ksc), lambda i: (i, 0)))
        in_specs.append(_resident_spec((1, ksc, n)))
        args += [sc_a, sc_w]
    if has_res:
        in_specs.append(pl.BlockSpec((tm, n), lambda i: (i, 0)))
        args.append(residual)

    kernel = functools.partial(_conv_mm_kernel, taps=taps, row_stride=row_stride,
                               tm=tm, relu=relu, has_sc=has_sc, has_res=has_res)
    return pl.pallas_call(
        kernel,
        out_shape=jax.ShapeDtypeStruct((m_pad, n), jnp.bfloat16),
        grid=grid,
        in_specs=in_specs,
        out_specs=pl.BlockSpec((tm, n), lambda i: (i, 0)),
        compiler_params=pltpu.CompilerParams(
            dimension_semantics=("parallel",),
            vmem_limit_bytes=_vmem_limit(),
        ),
    )(*args)


# ------------------------------ conv wrappers ------------------------------ #

def _conv3x3_s1_fused(x, w, bias, relu, residual=None, shortcut=None):
    """3x3 stride-1 conv + folded-BN bias [+ fused 1x1 shortcut] [+ residual]
    [+ ReLU] on the halo-padded grid, no im2col, kw taps stacked along K."""
    nb, h, wsp, cin = x.shape
    cout = w.shape[-1]
    hp = h + 2
    wp = _round_up(wsp + 2, 8)             # aligned padded width (review #2)
    m_grid = nb * hp * wp                  # outputs computed on the padded grid
    tm = _pick_tm(m_grid, cout)
    m_pad = _pad_rows(m_grid, tm)
    halo = wp + 1                          # max backward tap reach on the grid
    r_rows = _round_up(m_pad + 2 * wp + 8, 16)

    xp = jnp.pad(x, ((0, 0), (1, 1), (1, wp - wsp - 1), (0, 0)))
    a = jnp.pad(xp.reshape(m_grid, cin),
                ((halo, r_rows - halo - m_grid), (0, 0)))
    w_taps = w.reshape(3, 3 * cin, cout)   # per-kh (kw-major, cin) stacked taps

    def to_grid(t, c):                     # lay a tensor out on the padded grid
        tp = jnp.pad(t, ((0, 0), (1, 1), (1, wp - wsp - 1), (0, 0)))
        return jnp.pad(tp.reshape(m_grid, c), ((0, m_pad - m_grid), (0, 0)))

    res = to_grid(residual, cout) if residual is not None else None
    sc = None
    if shortcut is not None:
        sx, sw = shortcut                  # sx: (nb, h, wsp, c_sc), sw: (1, c_sc, cout)
        sc = (to_grid(sx, sx.shape[-1]), sw)

    out = _conv_mm(a, w_taps, bias, tm=tm, m_pad=m_pad, taps=(3, 3),
                   row_stride=wp, relu=relu, residual=res, shortcut=sc)
    # discard the (garbage) border rows/cols of the padded output grid
    return out[:m_grid].reshape(nb, hp, wp, cout)[:, 1:h + 1, 1:wsp + 1, :]


def _conv3x3_s2_fused(x, w, bias, relu):
    """3x3 stride-2 conv via 2x2 phase decomposition (review #4): the padded
    input's even/odd rows/cols are stacked along channels, turning the strided
    conv into the same row-shift kernel with a 2x2 tap grid and K = 8*Cin."""
    nb, h, wsp, cin = x.shape
    cout = w.shape[-1]
    ho, wo = h // 2, wsp // 2
    ph_h, ph_w = ho + 1, wo + 1
    wpd = _round_up(ph_w, 8)
    m_grid = nb * ph_h * wpd
    tm = _pick_tm(m_grid, cout)
    m_pad = _pad_rows(m_grid, tm)
    r_rows = _round_up(m_pad + wpd + 8, 16)

    xp = jnp.pad(x, ((0, 0), (1, 1), (1, 1), (0, 0)))
    # phase (a, b): A[i, j] = xp[2i + a, 2j + b]; stacked on channels
    phases = [xp[:, a::2, b::2, :] for a in (0, 1) for b in (0, 1)]
    a4 = jnp.concatenate(phases, axis=-1)                   # (nb, ph_h, ph_w, 4*cin)
    a4 = jnp.pad(a4, ((0, 0), (0, 0), (0, wpd - ph_w), (0, 0)))
    a = jnp.pad(a4.reshape(m_grid, 4 * cin), ((0, r_rows - m_grid), (0, 0)))

    # tap (kh, kw) -> shift (dh, dw) = (kh//2, kw//2), phase (a, b) = (kh%2, kw%2)
    wt = jnp.zeros((2, 2, 2, 2, cin, cout), w.dtype)        # [dh, dw, a, b, ci, co]
    for kh in range(3):
        for kw in range(3):
            wt = wt.at[kh // 2, kw // 2, kh % 2, kw % 2].set(w[kh, kw])
    w_taps = wt.reshape(2, 8 * cin, cout)

    out = _conv_mm(a, w_taps, bias, tm=tm, m_pad=m_pad, taps=(2, 2),
                   row_stride=wpd, relu=relu)
    return out[:m_grid].reshape(nb, ph_h, wpd, cout)[:, :ho, :wo, :]


def _im2col(x, k, stride, pad):
    nb, h, wsp, c = x.shape
    if pad:
        x = jnp.pad(x, ((0, 0), (pad, pad), (pad, pad), (0, 0)))
    ho = (h + 2 * pad - k) // stride + 1
    wo = (wsp + 2 * pad - k) // stride + 1
    cols = []
    for kh in range(k):
        for kw in range(k):
            cols.append(x[:, kh:kh + (ho - 1) * stride + 1:stride,
                             kw:kw + (wo - 1) * stride + 1:stride, :])
    patches = jnp.concatenate(cols, axis=-1)          # tap-major (kh, kw, c)
    return patches.reshape(nb * ho * wo, k * k * c), ho, wo


def _conv_gemm(x, w, bias, stride, relu, residual=None):
    """Conv as one plain matmul (used for the tiny 3-channel stem / fallbacks)."""
    nb = x.shape[0]
    cin = x.shape[-1]
    k = w.shape[0]
    cout = w.shape[-1]
    if k == 1:
        xs = x[:, ::stride, ::stride, :]
        ho, wo = xs.shape[1], xs.shape[2]
        a = xs.reshape(nb * ho * wo, cin)
    else:
        a, ho, wo = _im2col(x, k, stride, pad=1)
    m = a.shape[0]
    tm = _pick_tm(m, cout)
    m_pad = _pad_rows(m, tm)
    a = jnp.pad(a, ((0, m_pad - m), (0, 0)))
    w_mat = w.reshape(1, k * k * cin, cout)
    res = None
    if residual is not None:
        res = jnp.pad(residual.reshape(m, cout), ((0, m_pad - m), (0, 0)))
    out = _conv_mm(a, w_mat, bias, tm=tm, m_pad=m_pad, taps=None, row_stride=0,
                   relu=relu, residual=res)
    return out[:m].reshape(nb, ho, wo, cout)


def conv_bn(x, w, bias, stride, relu, residual=None, shortcut=None):
    """Conv2d(bias=False) + folded BatchNorm [+ shortcut/residual] [+ ReLU]."""
    k = w.shape[0]
    cin = w.shape[2]
    if k == 3 and cin >= 16:
        if stride == 1:
            return _conv3x3_s1_fused(x, w, bias, relu,
                                     residual=residual, shortcut=shortcut)
        if stride == 2:
            assert residual is None and shortcut is None
            return _conv3x3_s2_fused(x, w, bias, relu)
    assert shortcut is None
    return _conv_gemm(x, w, bias, stride, relu, residual=residual)


# ------------------------------- model glue -------------------------------- #

def resblock_forward(x, blk, stride):
    out1 = conv_bn(x, blk["w1"], blk["b1"], stride, relu=True)
    if "wsc" in blk:
        # 1x1 projection shortcut fused into conv2 (review #9): strided x is a
        # second streamed LHS; its BN bias is merged into the epilogue bias.
        cin = x.shape[-1]
        cout = blk["w2"].shape[-1]
        xs = x[:, ::stride, ::stride, :]
        wsc = blk["wsc"].reshape(1, cin, cout)
        return conv_bn(out1, blk["w2"], blk["b2"] + blk["bsc"], 1, relu=True,
                       shortcut=(xs, wsc))
    # identity shortcut: conv2 + BN + residual add + final ReLU in one kernel
    return conv_bn(out1, blk["w2"], blk["b2"], 1, relu=True, residual=x)


def cnn_forward(x_nchw, params):
    x = jnp.transpose(x_nchw, (0, 2, 3, 1)).astype(jnp.bfloat16)  # NCHW -> NHWC
    w, b = params["conv1"]
    x = conv_bn(x, w, b, stride=1, relu=True)
    for blk, (_, _, stride) in zip(params["blocks"], _CFG):
        x = resblock_forward(x, blk, stride)
    # avg_pool2d(., 8) + flatten + fc are tiny (2 x 2048 x n_out): plain JAX.
    nb, h, wsp, c = x.shape
    x = x.astype(jnp.float32).reshape(nb, h // 8, 8, wsp // 8, 8, c).mean(axis=(2, 4))
    x = x.reshape(nb, -1)                        # (N, 2048) in (H, W, C) order
    # TODO(synk): the PyTorch forward's `print(out.shape)` debug print is omitted.
    return jnp.dot(x, params["fc_w"]) + params["fc_b"]


def init_params(key, n_out):
    state = {"key": key}

    def nk():
        state["key"], sub = jax.random.split(state["key"])
        return sub

    def conv_w(cin, cout, k):
        # kaiming_normal_(mode='fan_out', nonlinearity='relu'), HWIO layout
        std = (2.0 / (cout * k * k)) ** 0.5
        return std * jax.random.normal(nk(), (k, k, cin, cout), jnp.float32)

    def bn(c):
        # eval-mode BatchNorm folded to per-channel scale / bias
        gamma = 1.0 + 0.1 * jax.random.normal(nk(), (c,), jnp.float32)
        beta = 0.1 * jax.random.normal(nk(), (c,), jnp.float32)
        mean = 0.1 * jax.random.normal(nk(), (c,), jnp.float32)
        var = jax.random.uniform(nk(), (c,), jnp.float32, minval=0.5, maxval=1.5)
        scale = gamma * jax.lax.rsqrt(var + 1e-5)
        bias = beta - mean * scale
        return scale, bias

    def conv_bn_params(cin, cout, k):
        w = conv_w(cin, cout, k)
        scale, bias = bn(cout)
        # fold the BN scale into the conv weight columns, cast to bf16
        w = (w * scale[None, None, None, :]).astype(jnp.bfloat16)
        return w, bias

    params = {"conv1": conv_bn_params(3, 64, 3)}

    blocks = []
    for cin, cout, stride in _CFG:
        blk = {}
        blk["w1"], blk["b1"] = conv_bn_params(cin, cout, 3)
        blk["w2"], blk["b2"] = conv_bn_params(cout, cout, 3)
        if stride != 1 or cin != cout:
            blk["wsc"], blk["bsc"] = conv_bn_params(cin, cout, 1)
        blocks.append(blk)
    params["blocks"] = blocks

    # nn.Linear(512*4, n_out): normal(0, 0.01) weight, zero bias.
    # NOTE: declared directly in NHWC-flatten order; importing real PyTorch
    # weights would require a permutation from the CHW flatten order.
    params["fc_w"] = 0.01 * jax.random.normal(nk(), (512 * 4, n_out), jnp.float32)
    params["fc_b"] = jnp.zeros((n_out,), jnp.float32)
    return params


# ------------------------------- self test --------------------------------- #

def _selftest():
    """Check the fused conv paths against lax.conv (same bf16 operands, f32
    reference) -- loose tolerance covers only the bf16 output rounding."""
    key = jax.random.PRNGKey(42)
    k1, k2, k3, k4, k5, k6, k7 = jax.random.split(key, 7)
    cin, cout = 32, 64
    x = jax.random.normal(k1, (2, 16, 16, cin), jnp.float32).astype(jnp.bfloat16)
    w = (0.1 * jax.random.normal(k2, (3, 3, cin, cout), jnp.float32)).astype(jnp.bfloat16)
    b = 0.1 * jax.random.normal(k3, (cout,), jnp.float32)
    dn = lax.conv_dimension_numbers(x.shape, w.shape, ("NHWC", "HWIO", "NHWC"))

    def ref_conv(xx, ww, stride):
        return lax.conv_general_dilated(
            xx.astype(jnp.float32), ww.astype(jnp.float32),
            (stride, stride), ((1, 1), (1, 1)), dimension_numbers=dn)

    def close(got, want, name):
        diff = float(jnp.max(jnp.abs(got.astype(jnp.float32) - want)))
        scale = float(jnp.max(jnp.abs(want))) + 1.0
        assert diff <= 3e-2 * scale, (name, diff, scale)

    # 1) stride-1 fused (kw-stacked) conv + bias + residual + ReLU
    res = jax.random.normal(k4, (2, 16, 16, cout), jnp.float32).astype(jnp.bfloat16)
    got = conv_bn(x, w, b, 1, relu=True, residual=res)
    want = jnp.maximum(ref_conv(x, w, 1) + b + res.astype(jnp.float32), 0.0)
    close(got, want, "s1+residual")

    # 2) stride-2 phase-decomposed conv + bias + ReLU
    got = conv_bn(x, w, b, 2, relu=True)
    want = jnp.maximum(ref_conv(x, w, 2) + b, 0.0)
    close(got, want, "s2-phase")

    # 3) stride-1 fused conv with fused 1x1 projection shortcut
    x2 = jax.random.normal(k5, (2, 8, 8, cout), jnp.float32).astype(jnp.bfloat16)
    w2 = (0.1 * jax.random.normal(k6, (3, 3, cout, cout), jnp.float32)).astype(jnp.bfloat16)
    xs = x[:, ::2, ::2, :]
    wsc = (0.1 * jax.random.normal(k7, (cin, cout), jnp.float32)).astype(jnp.bfloat16)
    dn2 = lax.conv_dimension_numbers(x2.shape, w2.shape, ("NHWC", "HWIO", "NHWC"))
    got = conv_bn(x2, w2, b, 1, relu=True, shortcut=(xs, wsc.reshape(1, cin, cout)))
    proj = jnp.einsum("bhwc,co->bhwo", xs.astype(jnp.float32), wsc.astype(jnp.float32))
    want = jnp.maximum(
        lax.conv_general_dilated(x2.astype(jnp.float32), w2.astype(jnp.float32),
                                 (1, 1), ((1, 1), (1, 1)), dimension_numbers=dn2)
        + b + proj, 0.0)
    close(got, want, "s1+shortcut")


if __name__ == "__main__":
    # resolve TPU-dependent compile choices eagerly (outside any jit trace)
    _buffered1_ok()
    _vmem_limit()
    _selftest()

    key = jax.random.PRNGKey(0)
    pkey, xkey = jax.random.split(key)
    n_out = 10
    params = init_params(pkey, n_out)
    # fc expects 512*4 features after avg_pool2d(., 8) => input spatial = 128
    x = jax.random.normal(xkey, (2, 3, 128, 128), jnp.float32)
    fwd = jax.jit(cnn_forward)
    out = jax.block_until_ready(fwd(x, params))
    assert out.shape == (2, n_out), out.shape
    assert bool(jnp.all(jnp.isfinite(out)))
    print("KERNEL_OK")
</pallas_src>

<mosaic_0001>
module attributes {stable_mosaic.version = 11 : i64} {
  func.func @k(%arg0: i32, %arg1: memref<8x128xf32, #tpu.memory_space<vmem>>, %arg2: memref<8x128xf32, #tpu.memory_space<vmem>>) attributes {dimension_semantics = [#tpu.dimension_semantics<arbitrary>], iteration_bounds = array<i64: 2>, scalar_prefetch = 0 : i64, scratch_operands = 0 : i64, tpu.core_type = #tpu.core_type<tc>, window_params = [{pipeline_mode = #tpu.pipeline_mode<synchronous>, transform_indices = @transform_0, window_bounds = array<i64: 8, 128>}, {transform_indices = @transform_1, window_bounds = array<i64: 8, 128>}]} {
    %c0 = arith.constant 0 : index
    %c0_0 = arith.constant 0 : index
    %0 = vector.load %arg1[%c0, %c0_0] : memref<8x128xf32, #tpu.memory_space<vmem>>, vector<8x128xf32>
    %cst = arith.constant 2.000000e+00 : f32
    %1 = vector.broadcast %cst : f32 to vector<8x128xf32>
    %2 = arith.mulf %0, %1 : vector<8x128xf32>
    %c0_1 = arith.constant 0 : index
    %c0_2 = arith.constant 0 : index
    %3 = vector.load %arg2[%c0_1, %c0_2] : memref<8x128xf32, #tpu.memory_space<vmem>>, vector<8x128xf32>
    tpu.vector_store %arg2[%c0_1, %c0_2], %2 {strides = array<i32>} : memref<8x128xf32, #tpu.memory_space<vmem>>, vector<8x128xf32>,
    return
  }
  func.func @transform_0(%arg0: i32) -> (i32, i32) {
    %c0_i32 = arith.constant 0 : i32
    %c0_i32_0 = arith.constant 0 : i32
    %c0_i32_1 = arith.constant 0 : i32
    return %c0_i32, %c0_i32_0 : i32, i32
  }
  func.func @transform_1(%arg0: i32) -> (i32, i32) {
    %c0_i32 = arith.constant 0 : i32
    %c0_i32_0 = arith.constant 0 : i32
    return %arg0, %c0_i32 : i32, i32
  }
}

module attributes {stable_mosaic.version = 11 : i64} {
  func.func @_conv_mm_kernel(%arg0: i32, %arg1: memref<1856x32xbf16, #tpu.memory_space<vmem>>, %arg2: memref<3x96x64xbf16, #tpu.memory_space<vmem>>, %arg3: memref<1x64xf32, #tpu.memory_space<vmem>>, %arg4: memref<896x64xbf16, #tpu.memory_space<vmem>>, %arg5: memref<896x64xbf16, #tpu.memory_space<vmem>>) attributes {dimension_semantics = [#tpu.dimension_semantics<parallel>], iteration_bounds = array<i64: 2>, scalar_prefetch = 0 : i64, scratch_operands = 0 : i64, tpu.core_type = #tpu.core_type<tc>, window_params = [{pipeline_mode = #tpu.pipeline_mode<synchronous>, transform_indices = @transform_0, window_bounds = array<i64: 1856, 32>}, {pipeline_mode = #tpu.pipeline_mode<synchronous>, transform_indices = @transform_1, window_bounds = array<i64: 3, 96, 64>}, {pipeline_mode = #tpu.pipeline_mode<synchronous>, transform_indices = @transform_2, window_bounds = array<i64: 1, 64>}, {transform_indices = @transform_3, window_bounds = array<i64: 896, 64>}, {transform_indices = @transform_4, window_bounds = array<i64: 896, 64>}]} {
    %c896_i32 = arith.constant 896 : i32
    %0 = arith.muli %arg0, %c896_i32 : i32
    %c0_i32 = arith.constant 0 : i32
    %1 = arith.addi %0, %c0_i32 : i32
    %2 = tpu.assume_multiple %1, 8 : i32
    %3 = arith.index_cast %2 : i32 to index
    %c0 = arith.constant 0 : index
    %4 = vector.load %arg1[%3, %c0] : memref<1856x32xbf16, #tpu.memory_space<vmem>>, vector<904x32xbf16>
    %5 = vector.extract_strided_slice %4 {offsets = [0, 0], sizes = [896, 32], strides = [1, 1]} : vector<904x32xbf16> to vector<896x32xbf16>
    %6 = vector.extract_strided_slice %4 {offsets = [1, 0], sizes = [896, 32], strides = [1, 1]} : vector<904x32xbf16> to vector<896x32xbf16>
    %7 = vector.extract_strided_slice %4 {offsets = [2, 0], sizes = [896, 32], strides = [1, 1]} : vector<904x32xbf16> to vector<896x32xbf16>
    %8 = tpu.concatenate %5, %6, %7 in 1 : vector<896x32xbf16>, vector<896x32xbf16>, vector<896x32xbf16> -> vector<896x96xbf16>
    %c0_0 = arith.constant 0 : index
    %c0_1 = arith.constant 0 : index
    %c0_2 = arith.constant 0 : index
    %9 = vector.load %arg2[%c0_0, %c0_1, %c0_2] : memref<3x96x64xbf16, #tpu.memory_space<vmem>>, vector<1x96x64xbf16>
    %10 = vector.shape_cast %9 : vector<1x96x64xbf16> to vector<96x64xbf16>
    %cst = arith.constant dense<0.000000e+00> : vector<896x64xf32>
    %11 = tpu.matmul %8, %10, %cst {dimension_numbers = #tpu.dot_dimension_numbers<[1], [0], [0], [1], [0, 0, 1, 1], [], []>} : vector<896x96xbf16>, vector<96x64xbf16>, vector<896x64xf32> -> vector<896x64xf32>
    %c896_i32_3 = arith.constant 896 : i32
    %12 = arith.muli %arg0, %c896_i32_3 : i32
    %c24_i32 = arith.constant 24 : i32
    %13 = arith.addi %12, %c24_i32 : i32
    %14 = tpu.assume_multiple %13, 8 : i32
    %15 = arith.index_cast %14 : i32 to index
    %c0_4 = arith.constant 0 : index
    %16 = vector.load %arg1[%15, %c0_4] : memref<1856x32xbf16, #tpu.memory_space<vmem>>, vector<904x32xbf16>
    %17 = vector.extract_strided_slice %16 {offsets = [0, 0], sizes = [896, 32], strides = [1, 1]} : vector<904x32xbf16> to vector<896x32xbf16>
    %18 = vector.extract_strided_slice %16 {offsets = [1, 0], sizes = [896, 32], strides = [1, 1]} : vector<904x32xbf16> to vector<896x32xbf16>
    %19 = vector.extract_strided_slice %16 {offsets = [2, 0], sizes = [896, 32], strides = [1, 1]} : vector<904x32xbf16> to vector<896x32xbf16>
    %20 = tpu.concatenate %17, %18, %19 in 1 : vector<896x32xbf16>, vector<896x32xbf16>, vector<896x32xbf16> -> vector<896x96xbf16>
    %c1 = arith.constant 1 : index
    %c0_5 = arith.constant 0 : index
    %c0_6 = arith.constant 0 : index
    %21 = vector.load %arg2[%c1, %c0_5, %c0_6] : memref<3x96x64xbf16, #tpu.memory_space<vmem>>, vector<1x96x64xbf16>
    %22 = vector.shape_cast %21 : vector<1x96x64xbf16> to vector<96x64xbf16>
    %cst_7 = arith.constant dense<0.000000e+00> : vector<896x64xf32>
    %23 = tpu.matmul %20, %22, %cst_7 {dimension_numbers = #tpu.dot_dimension_numbers<[1], [0], [0], [1], [0, 0, 1, 1], [], []>} : vector<896x96xbf16>, vector<96x64xbf16>, vector<896x64xf32> -> vector<896x64xf32>
    %24 = arith.addf %11, %23 : vector<896x64xf32>
    %c896_i32_8 = arith.constant 896 : i32
    %25 = arith.muli %arg0, %c896_i32_8 : i32
    %c48_i32 = arith.constant 48 : i32
    %26 = arith.addi %25, %c48_i32 : i32
    %27 = tpu.assume_multiple %26, 8 : i32
    %28 = arith.index_cast %27 : i32 to index
    %c0_9 = arith.constant 0 : index
    %29 = vector.load %arg1[%28, %c0_9] : memref<1856x32xbf16, #tpu.memory_space<vmem>>, vector<904x32xbf16>
    %30 = vector.extract_strided_slice %29 {offsets = [0, 0], sizes = [896, 32], strides = [1, 1]} : vector<904x32xbf16> to vector<896x32xbf16>
    %31 = vector.extract_strided_slice %29 {offsets = [1, 0], sizes = [896, 32], strides = [1, 1]} : vector<904x32xbf16> to vector<896x32xbf16>
    %32 = vector.extract_strided_slice %29 {offsets = [2, 0], sizes = [896, 32], strides = [1, 1]} : vector<904x32xbf16> to vector<896x32xbf16>
    %33 = tpu.concatenate %30, %31, %32 in 1 : vector<896x32xbf16>, vector<896x32xbf16>, vector<896x32xbf16> -> vector<896x96xbf16>
    %c2 = arith.constant 2 : index
    %c0_10 = arith.constant 0 : index
    %c0_11 = arith.constant 0 : index
    %34 = vector.load %arg2[%c2, %c0_10, %c0_11] : memref<3x96x64xbf16, #tpu.memory_space<vmem>>, vector<1x96x64xbf16>
    %35 = vector.shape_cast %34 : vector<1x96x64xbf16> to vector<96x64xbf16>
    %cst_12 = arith.constant dense<0.000000e+00> : vector<896x64xf32>
    %36 = tpu.matmul %33, %35, %cst_12 {dimension_numbers = #tpu.dot_dimension_numbers<[1], [0], [0], [1], [0, 0, 1, 1], [], []>} : vector<896x96xbf16>, vector<96x64xbf16>, vector<896x64xf32> -> vector<896x64xf32>
    %37 = arith.addf %24, %36 : vector<896x64xf32>
    %c0_13 = arith.constant 0 : index
    %c0_14 = arith.constant 0 : index
    %38 = vector.load %arg3[%c0_13, %c0_14] : memref<1x64xf32, #tpu.memory_space<vmem>>, vector<1x64xf32>
    %39 = vector.broadcast %38 : vector<1x64xf32> to vector<896x64xf32>
    %40 = arith.addf %37, %39 : vector<896x64xf32>
    %c0_15 = arith.constant 0 : index
    %c0_16 = arith.constant 0 : index
    %41 = vector.load %arg4[%c0_15, %c0_16] : memref<896x64xbf16, #tpu.memory_space<vmem>>, vector<896x64xbf16>
    %42 = arith.extf %41 : vector<896x64xbf16> to vector<896x64xf32>
    %43 = arith.addf %40, %42 : vector<896x64xf32>
    %cst_17 = arith.constant 0.000000e+00 : f32
    %44 = vector.broadcast %cst_17 : f32 to vector<896x64xf32>
    %45 = arith.maximumf %43, %44 : vector<896x64xf32>
    %46 = arith.truncf %45 : vector<896x64xf32> to vector<896x64xbf16>
    %c0_18 = arith.constant 0 : index
    %c0_19 = arith.constant 0 : index
    %47 = vector.load %arg5[%c0_18, %c0_19] : memref<896x64xbf16, #tpu.memory_space<vmem>>, vector<896x64xbf16>
    tpu.vector_store %arg5[%c0_18, %c0_19], %46 {strides = array<i32>} : memref<896x64xbf16, #tpu.memory_space<vmem>>, vector<896x64xbf16>,
    return
  }
  func.func @transform_0(%arg0: i32) -> (i32, i32) {
    %c0_i32 = arith.constant 0 : i32
    %c0_i32_0 = arith.constant 0 : i32
    %c0_i32_1 = arith.constant 0 : i32
    return %c0_i32, %c0_i32_0 : i32, i32
  }
  func.func @transform_1(%arg0: i32) -> (i32, i32, i32) {
    %c0_i32 = arith.constant 0 : i32
    %c0_i32_0 = arith.constant 0 : i32
    %c0_i32_1 = arith.constant 0 : i32
    %c0_i32_2 = arith.constant 0 : i32
    return %c0_i32, %c0_i32_0, %c0_i32_1 : i32, i32, i32
  }
  func.func @transform_2(%arg0: i32) -> (i32, i32) {
    %c0_i32 = arith.constant 0 : i32
    %c0_i32_0 = arith.constant 0 : i32
    %c0_i32_1 = arith.constant 0 : i32
    return %c0_i32, %c0_i32_0 : i32, i32
  }
  func.func @transform_3(%arg0: i32) -> (i32, i32) {
    %c0_i32 = arith.constant 0 : i32
    %c0_i32_0 = arith.constant 0 : i32
    return %arg0, %c0_i32 : i32, i32
  }
  func.func @transform_4(%arg0: i32) -> (i32, i32) {
    %c0_i32 = arith.constant 0 : i32
    %c0_i32_0 = arith.constant 0 : i32
    return %arg0, %c0_i32 : i32, i32
  }
}

</mosaic_0001>

<llo_original>
// kernel: tpu_custom_call.1
$region0: #{tpu_custom_call.1}
  #allocation0 [shape = 'u32[]', space=smem, size = 0x4, offset = 0x4, fixed_abs, tag = 'smem constant byte address 0x4 - core index']
  #allocation1 [shape = 'u32[72,128]{1,0:T(1,128)}', space=vmem, size = 0x9000, scoped, tag = 'internal scratch']
  %s0 = inlined_call_operand.hbm [shape: f32[8,128], index: 0, kind: input, shape index: {}]
  %s1 = inlined_call_operand.hbm [shape: f32[16,128], index: 1, kind: output, shape index: {}]
  %s2 = sld [smem:[#allocation0]]
  $region41: #{tpu_custom_call.1} parent=0
    _
  %s4 = ssub.s32 1, %s2
  %s5 = scalar_select 0, %s4, %s2
  $region1: #{tpu_custom_call.1} parent=0
    #allocation2 [shape = 'u8[4096]{0}', space=vmem, size = 0x1000, scoped, tag = 'input window, operand 0, single buffered']
    #allocation3 [shape = 's32[2]{0}', space=sflag, size = 0x8, scoped, tag = 'scoped memory for tpu_custom_call.1']
    #allocation4 [shape = 's32[2]{0}', space=sflag, size = 0x8, scoped, tag = 'scoped memory for tpu_custom_call.1']
    #allocation5 [shape = 'u8[8192]{0}', space=vmem, size = 0x2000, scoped, tag = 'output window, operand 0']
    %6 = vsyncpa [#allocation3], 0
    %7 = vsyncpa [#allocation4], 0
    %s8 = scalar_lea.sflag [#allocation4], 1
    %9 = vsyncpa %s8, 0
    loop: start=0, step=1, limit=4
    $region2: #{tpu_custom_call.1} parent=1 // loop_pre_header
      _
    $region3: #{tpu_custom_call.1} parent=1 // loop_header
      %s11 = sphi 0, %s15
      %p12 = scmp.ge.s32.totalorder %s11, 4
      %s19 = sphi 0, %s19
      %s21 = sphi 0, %s19
      %s22 = sphi 0, %s21
      %s36 = sphi 0, %s22
      %s42 = sphi 0, %s44
      %s45 = sphi 0, %s42
      %s46 = sphi 0, %s45
      %s62 = sphi 0, %s46
    $region4: #{tpu_custom_call.1} parent=1 // loop_header_branch
      %14 = sbr.rel (%p12) target = $region8
    $region5: #{tpu_custom_call.1} parent=1 // loop_body
      %s16 = ssub.s32 %s11, 1
      %s17 = ssub.s32 %s11, 2
      %s18 = sadd.s32 %s11, 1
      %s20 = sadd.s32 %s19, 1
      %p23 = scmp.eq.s32.totalorder %s11, 1
      %p24 = scmp.ne.s32.totalorder %s19, %s21
      %p25 = scmp.eq.s32.totalorder %s11, 0
      %p26 = por %p24, %p25
      %p27 = scmp.ne.s32.totalorder %s19, %s21
      %p28 = scmp.eq.s32.totalorder %s16, 1
      %p29 = por %p27, %p28
      %p30 = scmp.ne.s32.totalorder %s21, %s22
      %p31 = scmp.eq.s32.totalorder %s16, 0
      %p32 = por %p30, %p31
      %p33 = scmp.ne.s32.totalorder %s21, %s22
      %p34 = scmp.eq.s32.totalorder %s17, 1
      %p35 = por %p33, %p34
      %p37 = scmp.ne.s32.totalorder %s22, %s36
      %p38 = scmp.eq.s32.totalorder %s17, 0
      %p39 = por %p37, %p38
      %s40 = ssub.s32 %s11, %s18
      %p41 = scmp.eq.s32.totalorder %s40, 0
      %s43 = sadd.s32 %s42, 1
      %s44 = scalar_select %p41, %s42, %s43
      %p47 = pneg %p41
      %p48 = scmp.eq.s32.totalorder %s11, 1
      %p49 = por %p47, %p48
      %p50 = scmp.ne.s32.totalorder %s42, %s45
      %p51 = scmp.eq.s32.totalorder %s11, 0
      %p52 = por %p50, %p51
      %p53 = scmp.ne.s32.totalorder %s42, %s45
      %p54 = scmp.eq.s32.totalorder %s16, 1
      %p55 = por %p53, %p54
      %p56 = scmp.ne.s32.totalorder %s45, %s46
      %p57 = scmp.eq.s32.totalorder %s16, 0
      %p58 = por %p56, %p57
      %p59 = scmp.ne.s32.totalorder %s45, %s46
      %p60 = scmp.eq.s32.totalorder %s17, 1
      %p61 = por %p59, %p60
      %p63 = scmp.ne.s32.totalorder %s46, %s62
      %p64 = scmp.eq.s32.totalorder %s17, 0
      %p65 = por %p63, %p64
      %p66 = scmp.le.s32.totalorder 1, %s11
      %p67 = scmp.lt.s32.totalorder %s11, 3
      %p68 = pnand %p66, %p67
      %p69 = pneg %p68
      // Predicated region
      $region9: #{tpu_custom_call.1} parent=5 // pred_check
        _
      $region10: #{tpu_custom_call.1} parent=5 // pred_check_branch
        %71 = sbr.rel (%p68) target = $region12
      $region11: #{tpu_custom_call.1} parent=5 // pred_region
        %s72 = ssub.s32 %s11, 1
        // Predicated region
        $region13: #{tpu_custom_call.1} parent=11 // pred_check
          %p73 = pneg %p32
        $region14: #{tpu_custom_call.1} parent=11 // pred_check_branch
          %75 = sbr.rel (%p73) target = $region16
        $region15: #{tpu_custom_call.1} parent=11 // pred_region
          %77 = vsyncadd [#allocation3], 0
          %s79 = sshll.u32 %s0, 4
          %s80 = int_to_ptr.hbm [resolvable:$true] %s79
          %s81 = sshll.u32 [#allocation2], 4
          %s82 = int_to_ptr.vmem [resolvable:$true] %s81
          %84 = dma.hbm_to_vmem [thread:$0]  %s80, 128, %s82, [#allocation3]
        $region16: #{tpu_custom_call.1} parent=11 // pred_fallthru
          _
      $region12: #{tpu_custom_call.1} parent=5 // pred_fallthru
        _
      %p85 = scmp.lt.s32.totalorder %s11, 2
      // Predicated region
      $region17: #{tpu_custom_call.1} parent=5 // pred_check
        %p86 = pneg %p85
      $region18: #{tpu_custom_call.1} parent=5 // pred_check_branch
        %88 = sbr.rel (%p86) target = $region20
      $region19: #{tpu_custom_call.1} parent=5 // pred_region
        _
      $region20: #{tpu_custom_call.1} parent=5 // pred_fallthru
        _
      %p89 = scmp.le.s32.totalorder 1, %s11
      %p90 = scmp.lt.s32.totalorder %s11, 3
      %p91 = pnand %p89, %p90
      %p92 = pneg %p91
      // Predicated region
      $region21: #{tpu_custom_call.1} parent=5 // pred_check
        _
      $region22: #{tpu_custom_call.1} parent=5 // pred_check_branch
        %94 = sbr.rel (%p91) target = $region24
      $region23: #{tpu_custom_call.1} parent=5 // pred_region
        %s95 = ssub.s32 %s11, 1
        // Predicated region
        $region25: #{tpu_custom_call.1} parent=23 // pred_check
          %p96 = pneg %p32
        $region26: #{tpu_custom_call.1} parent=23 // pred_check_branch
          %98 = sbr.rel (%p96) target = $region28
        $region27: #{tpu_custom_call.1} parent=23 // pred_region
          %100 = dma.done [#allocation3], 128
        $region28: #{tpu_custom_call.1} parent=23 // pred_fallthru
          _
        %p101 = pneg %p32
        %p102 = pneg %p29
        %p103 = pneg %p58
        %p104 = pneg %p55
        %s105 = sand.u32 %s45, 1
        %s106 = scalar_lea.sflag [#allocation4], %s105
        %s107 = sand.u32 %s45, 1
        %s108 = smul.addr %s107, 8
        %s109 = scalar_lea.vmem [#allocation5], %s108
        %v110 = vld [vmem:[#allocation2] sm:$0xff]
        %v111 = vmul.f32 %v110, 2.0
        %112 = vst [vmem:[%s109] sm:$0xff] %v111
        %s113 = sand.u32 %s45, 1
        %s114 = scalar_lea.sflag [#allocation4], %s113
        %s115 = sand.u32 %s45, 1
        %s116 = smul.addr %s115, 8
        %s117 = scalar_lea.vmem [#allocation5], %s116
        // Predicated region
        $region29: #{tpu_custom_call.1} parent=23 // pred_check
          %p118 = pneg %p55
        $region30: #{tpu_custom_call.1} parent=23 // pred_check_branch
          %120 = sbr.rel (%p118) target = $region32
        $region31: #{tpu_custom_call.1} parent=23 // pred_region
          %122 = vsyncadd %s114, 0
          %s123 = smul.addr %s16, 8
          %s124 = scalar_lea.hbm %s1, %s123
          %s126 = sshll.u32 %s117, 4
          %s127 = int_to_ptr.vmem [resolvable:$true] %s126
          %s128 = sshll.u32 %s124, 4
          %s129 = int_to_ptr.hbm [resolvable:$true] %s128
          %131 = dma.vmem_to_hbm [thread:$0]  %s127, 128, %s129, %s114
        $region32: #{tpu_custom_call.1} parent=23 // pred_fallthru
          _
      $region24: #{tpu_custom_call.1} parent=5 // pred_fallthru
        _
      %p132 = scmp.le.s32.totalorder 2, %s11
      // Predicated region
      $region33: #{tpu_custom_call.1} parent=5 // pred_check
        %p133 = pneg %p132
      $region34: #{tpu_custom_call.1} parent=5 // pred_check_branch
        %135 = sbr.rel (%p133) target = $region36
      $region35: #{tpu_custom_call.1} parent=5 // pred_region
        %s136 = ssub.s32 %s11, 2
        // Predicated region
        $region37: #{tpu_custom_call.1} parent=35 // pred_check
          %p137 = pneg %p61
        $region38: #{tpu_custom_call.1} parent=35 // pred_check_branch
          %139 = sbr.rel (%p137) target = $region40
        $region39: #{tpu_custom_call.1} parent=35 // pred_region
          %s140 = sand.u32 %s46, 1
          %s141 = scalar_lea.sflag [#allocation4], %s140
          %s142 = sand.u32 %s46, 1
          %s143 = smul.addr %s142, 8
          %s144 = scalar_lea.vmem [#allocation5], %s143
          %146 = dma.done %s141, 128
        $region40: #{tpu_custom_call.1} parent=35 // pred_fallthru
          _
      $region36: #{tpu_custom_call.1} parent=5 // pred_fallthru
        _
    $region6: #{tpu_custom_call.1} parent=1 // loop_footer
      %s15 = sadd.s32 1, %s11
    $region7: #{tpu_custom_call.1} parent=1 // loop_footer_branch
      %10 = sbr.rel target = $region3
    $region8: #{tpu_custom_call.1} parent=1 // loop_exit
      _
    %147 = vsyncpa [#allocation3], 1
    %s148 = scalar_lea.sflag [#allocation3], 1
    %149 = vsyncpa %s148, 1
    %150 = vsyncpa [#allocation4], 1
    %s151 = scalar_lea.sflag [#allocation4], 1
    %152 = vsyncpa %s151, 1

// kernel: tpu_custom_call.1
$region0: #{tpu_custom_call.1}
  #allocation0 [shape = 'u32[]', space=smem, size = 0x4, offset = 0x4, fixed_abs, tag = 'smem constant byte address 0x4 - core index']
  #allocation1 [shape = 'u32[72,128]{1,0:T(1,128)}', space=vmem, size = 0x9000, scoped, tag = 'internal scratch']
  %s0 = inlined_call_operand.vmem [shape: bf16[1856,32], index: 0, kind: input, shape index: {}]
  %s1 = inlined_call_operand.vmem [shape: bf16[3,96,64], index: 1, kind: input, shape index: {}]
  %s2 = inlined_call_operand.vmem [shape: f32[1,64], index: 2, kind: input, shape index: {}]
  %s3 = inlined_call_operand.vmem [shape: bf16[1792,64], index: 3, kind: input, shape index: {}]
  %s4 = inlined_call_operand.vmem [shape: bf16[1792,64], index: 4, kind: output, shape index: {}]
  %s5 = sld [smem:[#allocation0]]
  $region49: #{tpu_custom_call.1} parent=0
    _
  %s7 = ssub.s32 1, %s5
  %s8 = scalar_select 0, %s7, %s5
  loop: start=0, step=1, limit=4
  $region2: #{tpu_custom_call.1} parent=0 // loop_pre_header
    _
  $region3: #{tpu_custom_call.1} parent=0 // loop_header
    %s10 = sphi 0, %s14
    %p11 = scmp.ge.s32.totalorder %s10, 4
    %s18 = sphi 0, %s18
    %s20 = sphi 0, %s18
    %s21 = sphi 0, %s20
    %s35 = sphi 0, %s21
    %s39 = sphi 0, %s39
    %s41 = sphi 0, %s39
    %s42 = sphi 0, %s41
    %s56 = sphi 0, %s42
    %s60 = sphi 0, %s60
    %s62 = sphi 0, %s60
    %s63 = sphi 0, %s62
    %s77 = sphi 0, %s63
    %s83 = sphi 0, %s85
    %s86 = sphi 0, %s83
    %s87 = sphi 0, %s86
    %s103 = sphi 0, %s87
    %s109 = sphi 0, %s111
    %s112 = sphi 0, %s109
    %s113 = sphi 0, %s112
    %s129 = sphi 0, %s113
  $region4: #{tpu_custom_call.1} parent=0 // loop_header_branch
    %13 = sbr.rel (%p11) target = $region8
  $region5: #{tpu_custom_call.1} parent=0 // loop_body
    %s15 = ssub.s32 %s10, 1
    %s16 = ssub.s32 %s10, 2
    %s17 = sadd.s32 %s10, 1
    %s19 = sadd.s32 %s18, 1
    %p22 = scmp.eq.s32.totalorder %s10, 1
    %p23 = scmp.ne.s32.totalorder %s18, %s20
    %p24 = scmp.eq.s32.totalorder %s10, 0
    %p25 = por %p23, %p24
    %p26 = scmp.ne.s32.totalorder %s18, %s20
    %p27 = scmp.eq.s32.totalorder %s15, 1
    %p28 = por %p26, %p27
    %p29 = scmp.ne.s32.totalorder %s20, %s21
    %p30 = scmp.eq.s32.totalorder %s15, 0
    %p31 = por %p29, %p30
    %p32 = scmp.ne.s32.totalorder %s20, %s21
    %p33 = scmp.eq.s32.totalorder %s16, 1
    %p34 = por %p32, %p33
    %p36 = scmp.ne.s32.totalorder %s21, %s35
    %p37 = scmp.eq.s32.totalorder %s16, 0
    %p38 = por %p36, %p37
    %s40 = sadd.s32 %s39, 1
    %p43 = scmp.eq.s32.totalorder %s10, 1
    %p44 = scmp.ne.s32.totalorder %s39, %s41
    %p45 = scmp.eq.s32.totalorder %s10, 0
    %p46 = por %p44, %p45
    %p47 = scmp.ne.s32.totalorder %s39, %s41
    %p48 = scmp.eq.s32.totalorder %s15, 1
    %p49 = por %p47, %p48
    %p50 = scmp.ne.s32.totalorder %s41, %s42
    %p51 = scmp.eq.s32.totalorder %s15, 0
    %p52 = por %p50, %p51
    %p53 = scmp.ne.s32.totalorder %s41, %s42
    %p54 = scmp.eq.s32.totalorder %s16, 1
    %p55 = por %p53, %p54
    %p57 = scmp.ne.s32.totalorder %s42, %s56
    %p58 = scmp.eq.s32.totalorder %s16, 0
    %p59 = por %p57, %p58
    %s61 = sadd.s32 %s60, 1
    %p64 = scmp.eq.s32.totalorder %s10, 1
    %p65 = scmp.ne.s32.totalorder %s60, %s62
    %p66 = scmp.eq.s32.totalorder %s10, 0
    %p67 = por %p65, %p66
    %p68 = scmp.ne.s32.totalorder %s60, %s62
    %p69 = scmp.eq.s32.totalorder %s15, 1
    %p70 = por %p68, %p69
    %p71 = scmp.ne.s32.totalorder %s62, %s63
    %p72 = scmp.eq.s32.totalorder %s15, 0
    %p73 = por %p71, %p72
    %p74 = scmp.ne.s32.totalorder %s62, %s63
    %p75 = scmp.eq.s32.totalorder %s16, 1
    %p76 = por %p74, %p75
    %p78 = scmp.ne.s32.totalorder %s63, %s77
    %p79 = scmp.eq.s32.totalorder %s16, 0
    %p80 = por %p78, %p79
    %s81 = ssub.s32 %s10, %s17
    %p82 = scmp.eq.s32.totalorder %s81, 0
    %s84 = sadd.s32 %s83, 1
    %s85 = scalar_select %p82, %s83, %s84
    %p88 = pneg %p82
    %p89 = scmp.eq.s32.totalorder %s10, 1
    %p90 = por %p88, %p89
    %p91 = scmp.ne.s32.totalorder %s83, %s86
    %p92 = scmp.eq.s32.totalorder %s10, 0
    %p93 = por %p91, %p92
    %p94 = scmp.ne.s32.totalorder %s83, %s86
    %p95 = scmp.eq.s32.totalorder %s15, 1
    %p96 = por %p94, %p95
    %p97 = scmp.ne.s32.totalorder %s86, %s87
    %p98 = scmp.eq.s32.totalorder %s15, 0
    %p99 = por %p97, %p98
    %p100 = scmp.ne.s32.totalorder %s86, %s87
    %p101 = scmp.eq.s32.totalorder %s16, 1
    %p102 = por %p100, %p101
    %p104 = scmp.ne.s32.totalorder %s87, %s103
    %p105 = scmp.eq.s32.totalorder %s16, 0
    %p106 = por %p104, %p105
    %s107 = ssub.s32 %s10, %s17
    %p108 = scmp.eq.s32.totalorder %s107, 0
    %s110 = sadd.s32 %s109, 1
    %s111 = scalar_select %p108, %s109, %s110
    %p114 = pneg %p108
    %p115 = scmp.eq.s32.totalorder %s10, 1
    %p116 = por %p114, %p115
    %p117 = scmp.ne.s32.totalorder %s109, %s112
    %p118 = scmp.eq.s32.totalorder %s10, 0
    %p119 = por %p117, %p118
    %p120 = scmp.ne.s32.totalorder %s109, %s112
    %p121 = scmp.eq.s32.totalorder %s15, 1
    %p122 = por %p120, %p121
    %p123 = scmp.ne.s32.totalorder %s112, %s113
    %p124 = scmp.eq.s32.totalorder %s15, 0
    %p125 = por %p123, %p124
    %p126 = scmp.ne.s32.totalorder %s112, %s113
    %p127 = scmp.eq.s32.totalorder %s16, 1
    %p128 = por %p126, %p127
    %p130 = scmp.ne.s32.totalorder %s113, %s129
    %p131 = scmp.eq.s32.totalorder %s16, 0
    %p132 = por %p130, %p131
    %p133 = scmp.le.s32.totalorder 1, %s10
    %p134 = scmp.lt.s32.totalorder %s10, 3
    %p135 = pnand %p133, %p134
    %p136 = pneg %p135
    // Predicated region
    $region9: #{tpu_custom_call.1} parent=5 // pred_check
      _
    $region10: #{tpu_custom_call.1} parent=5 // pred_check_branch
      %138 = sbr.rel (%p135) target = $region12
    $region11: #{tpu_custom_call.1} parent=5 // pred_region
      %s139 = ssub.s32 %s10, 1
      // Predicated region
      $region13: #{tpu_custom_call.1} parent=11 // pred_check
        %p140 = pneg %p31
      $region14: #{tpu_custom_call.1} parent=11 // pred_check_branch
        %142 = sbr.rel (%p140) target = $region16
      $region15: #{tpu_custom_call.1} parent=11 // pred_region
        _
      $region16: #{tpu_custom_call.1} parent=11 // pred_fallthru
        _
      // Predicated region
      $region17: #{tpu_custom_call.1} parent=11 // pred_check
        %p143 = pneg %p52
      $region18: #{tpu_custom_call.1} parent=11 // pred_check_branch
        %145 = sbr.rel (%p143) target = $region20
      $region19: #{tpu_custom_call.1} parent=11 // pred_region
        _
      $region20: #{tpu_custom_call.1} parent=11 // pred_fallthru
        _
      // Predicated region
      $region21: #{tpu_custom_call.1} parent=11 // pred_check
        %p146 = pneg %p73
      $region22: #{tpu_custom_call.1} parent=11 // pred_check_branch
        %148 = sbr.rel (%p146) target = $region24
      $region23: #{tpu_custom_call.1} parent=11 // pred_region
        _
      $region24: #{tpu_custom_call.1} parent=11 // pred_fallthru
        _
    $region12: #{tpu_custom_call.1} parent=5 // pred_fallthru
      _
    %p149 = scmp.lt.s32.totalorder %s10, 2
    // Predicated region
    $region25: #{tpu_custom_call.1} parent=5 // pred_check
      %p150 = pneg %p149
    $region26: #{tpu_custom_call.1} parent=5 // pred_check_branch
      %152 = sbr.rel (%p150) target = $region28
    $region27: #{tpu_custom_call.1} parent=5 // pred_region
      // Predicated region
      $region29: #{tpu_custom_call.1} parent=27 // pred_check
        %p153 = pneg %p93
      $region30: #{tpu_custom_call.1} parent=27 // pred_check_branch
        %155 = sbr.rel (%p153) target = $region32
      $region31: #{tpu_custom_call.1} parent=27 // pred_region
        %s156 = smul.u32 112, %s10
        %p157 = scmp.lt.s32.totalorder %s156, 223
        %s158 = scalar_select %p157, %s156, 223
        %s159 = smul.addr %s158, 4
        %s160 = scalar_lea.vmem %s3, %s159
        %s161 = smul.u32 112, %s10
      $region32: #{tpu_custom_call.1} parent=27 // pred_fallthru
        _
    $region28: #{tpu_custom_call.1} parent=5 // pred_fallthru
      _
    %p162 = scmp.le.s32.totalorder 1, %s10
    %p163 = scmp.lt.s32.totalorder %s10, 3
    %p164 = pnand %p162, %p163
    %p165 = pneg %p164
    // Predicated region
    $region33: #{tpu_custom_call.1} parent=5 // pred_check
      _
    $region34: #{tpu_custom_call.1} parent=5 // pred_check_branch
      %167 = sbr.rel (%p164) target = $region36
    $region35: #{tpu_custom_call.1} parent=5 // pred_region
      %s168 = ssub.s32 %s10, 1
      %p169 = pneg %p31
      %p170 = pneg %p28
      %p171 = pneg %p52
      %p172 = pneg %p49
      %p173 = pneg %p73
      %p174 = pneg %p70
      %s175 = smul.u32 112, %s15
      %p176 = scmp.lt.s32.totalorder %s175, 223
      %s177 = scalar_select %p176, %s175, 223
      %s178 = smul.addr %s177, 4
      %s179 = scalar_lea.vmem %s3, %s178
      %p180 = pneg %p99
      %p181 = pneg %p96
      %p182 = pneg %p125
      %p183 = pneg %p122
      %s184 = smul.u32 112, %s15
      %p185 = scmp.lt.s32.totalorder %s184, 223
      %s186 = scalar_select %p185, %s184, 223
      %s187 = smul.addr %s186, 4
      %s188 = scalar_lea.vmem %s4, %s187
      %s189 = smul.u32 112, %s15
      %p190 = scmp.lt.s32.totalorder %s189, 223
      %s191 = scalar_select %p190, %s189, 223
      %s192 = smul.addr %s191, 4
      %s193 = scalar_lea.vmem %s3, %s192
      %s194 = smul.u32 112, %s15
      %s195 = smul.u32 112, %s15
      %p196 = scmp.lt.s32.totalorder %s195, 223
      %s197 = scalar_select %p196, %s195, 223
      %s198 = smul.addr %s197, 4
      %s199 = scalar_lea.vmem %s4, %s198
      %s200 = smul.u32 112, %s15
      %s202 = smul.u32 %s15, 896
      %s203 = sshra.s32 %s202, 3
      %s204 = sand.u32 %s202, 7
      %s205 = smul.addr %s203, 4
      %s206 = scalar_lea.vmem %s0, %s205
      %v207 = vld [vmem:[%s206] sm:$0xf]
      %v208 = vld [vmem:[%s206 + $0x4] sm:$0xf]
      %v209 = vld [vmem:[%s206 + $0x8] sm:$0xf]
      %v210 = vld [vmem:[%s206 + $0xc] sm:$0xf]
      %v211 = vld [vmem:[%s206 + $0x10] sm:$0xf]
      %v212 = vld [vmem:[%s206 + $0x14] sm:$0xf]
      %v213 = vld [vmem:[%s206 + $0x18] sm:$0xf]
      %v214 = vld [vmem:[%s206 + $0x1c] sm:$0xf]
      %v215 = vld [vmem:[%s206 + $0x20] sm:$0xf]
      %v216 = vld [vmem:[%s206 + $0x24] sm:$0xf]
      %v217 = vld [vmem:[%s206 + $0x28] sm:$0xf]
      %v218 = vld [vmem:[%s206 + $0x2c] sm:$0xf]
      %v219 = vld [vmem:[%s206 + $0x30] sm:$0xf]
      %v220 = vld [vmem:[%s206 + $0x34] sm:$0xf]
      %v221 = vld [vmem:[%s206 + $0x38] sm:$0xf]
      %v222 = vld [vmem:[%s206 + $0x3c] sm:$0xf]
      %v223 = vld [vmem:[%s206 + $0x40] sm:$0xf]
      %v224 = vld [vmem:[%s206 + $0x44] sm:$0xf]
      %v225 = vld [vmem:[%s206 + $0x48] sm:$0xf]
      %v226 = vld [vmem:[%s206 + $0x4c] sm:$0xf]
      %v227 = vld [vmem:[%s206 + $0x50] sm:$0xf]
      %v228 = vld [vmem:[%s206 + $0x54] sm:$0xf]
      %v229 = vld [vmem:[%s206 + $0x58] sm:$0xf]
      %v230 = vld [vmem:[%s206 + $0x5c] sm:$0xf]
      %v231 = vld [vmem:[%s206 + $0x60] sm:$0xf]
      %v232 = vld [vmem:[%s206 + $0x64] sm:$0xf]
      %v233 = vld [vmem:[%s206 + $0x68] sm:$0xf]
      %v234 = vld [vmem:[%s206 + $0x6c] sm:$0xf]
      %v235 = vld [vmem:[%s206 + $0x70] sm:$0xf]
      %v236 = vld [vmem:[%s206 + $0x74] sm:$0xf]
      %v237 = vld [vmem:[%s206 + $0x78] sm:$0xf]
      %v238 = vld [vmem:[%s206 + $0x7c] sm:$0xf]
      %v239 = vld [vmem:[%s206 + $0x80] sm:$0xf]
      %v240 = vld [vmem:[%s206 + $0x84] sm:$0xf]
      %v241 = vld [vmem:[%s206 + $0x88] sm:$0xf]
      %v242 = vld [vmem:[%s206 + $0x8c] sm:$0xf]
      %v243 = vld [vmem:[%s206 + $0x90] sm:$0xf]
      %v244 = vld [vmem:[%s206 + $0x94] sm:$0xf]
      %v245 = vld [vmem:[%s206 + $0x98] sm:$0xf]
      %v246 = vld [vmem:[%s206 + $0x9c] sm:$0xf]
      %v247 = vld [vmem:[%s206 + $0xa0] sm:$0xf]
      %v248 = vld [vmem:[%s206 + $0xa4] sm:$0xf]
      %v249 = vld [vmem:[%s206 + $0xa8] sm:$0xf]
      %v250 = vld [vmem:[%s206 + $0xac] sm:$0xf]
      %v251 = vld [vmem:[%s206 + $0xb0] sm:$0xf]
      %v252 = vld [vmem:[%s206 + $0xb4] sm:$0xf]
      %v253 = vld [vmem:[%s206 + $0xb8] sm:$0xf]
      %v254 = vld [vmem:[%s206 + $0xbc] sm:$0xf]
      %v255 = vld [vmem:[%s206 + $0xc0] sm:$0xf]
      %v256 = vld [vmem:[%s206 + $0xc4] sm:$0xf]
      %v257 = vld [vmem:[%s206 + $0xc8] sm:$0xf]
      %v258 = vld [vmem:[%s206 + $0xcc] sm:$0xf]
      %v259 = vld [vmem:[%s206 + $0xd0] sm:$0xf]
      %v260 = vld [vmem:[%s206 + $0xd4] sm:$0xf]
      %v261 = vld [vmem:[%s206 + $0xd8] sm:$0xf]
      %v262 = vld [vmem:[%s206 + $0xdc] sm:$0xf]
      %v263 = vld [vmem:[%s206 + $0xe0] sm:$0xf]
      %v264 = vld [vmem:[%s206 + $0xe4] sm:$0xf]
      %v265 = vld [vmem:[%s206 + $0xe8] sm:$0xf]
      %v266 = vld [vmem:[%s206 + $0xec] sm:$0xf]
      %v267 = vld [vmem:[%s206 + $0xf0] sm:$0xf]
      %v268 = vld [vmem:[%s206 + $0xf4] sm:$0xf]
      %v269 = vld [vmem:[%s206 + $0xf8] sm:$0xf]
      %v270 = vld [vmem:[%s206 + $0xfc] sm:$0xf]
      %v271 = vld [vmem:[%s206 + $0x100] sm:$0xf]
      %v272 = vld [vmem:[%s206 + $0x104] sm:$0xf]
      %v273 = vld [vmem:[%s206 + $0x108] sm:$0xf]
      %v274 = vld [vmem:[%s206 + $0x10c] sm:$0xf]
      %v275 = vld [vmem:[%s206 + $0x110] sm:$0xf]
      %v276 = vld [vmem:[%s206 + $0x114] sm:$0xf]
      %v277 = vld [vmem:[%s206 + $0x118] sm:$0xf]
      %v278 = vld [vmem:[%s206 + $0x11c] sm:$0xf]
      %v279 = vld [vmem:[%s206 + $0x120] sm:$0xf]
      %v280 = vld [vmem:[%s206 + $0x124] sm:$0xf]
      %v281 = vld [vmem:[%s206 + $0x128] sm:$0xf]
      %v282 = vld [vmem:[%s206 + $0x12c] sm:$0xf]
      %v283 = vld [vmem:[%s206 + $0x130] sm:$0xf]
      %v284 = vld [vmem:[%s206 + $0x134] sm:$0xf]
      %v285 = vld [vmem:[%s206 + $0x138] sm:$0xf]
      %v286 = vld [vmem:[%s206 + $0x13c] sm:$0xf]
      %v287 = vld [vmem:[%s206 + $0x140] sm:$0xf]
      %v288 = vld [vmem:[%s206 + $0x144] sm:$0xf]
      %v289 = vld [vmem:[%s206 + $0x148] sm:$0xf]
      %v290 = vld [vmem:[%s206 + $0x14c] sm:$0xf]
      %v291 = vld [vmem:[%s206 + $0x150] sm:$0xf]
      %v292 = vld [vmem:[%s206 + $0x154] sm:$0xf]
      %v293 = vld [vmem:[%s206 + $0x158] sm:$0xf]
      %v294 = vld [vmem:[%s206 + $0x15c] sm:$0xf]
      %v295 = vld [vmem:[%s206 + $0x160] sm:$0xf]
      %v296 = vld [vmem:[%s206 + $0x164] sm:$0xf]
      %v297 = vld [vmem:[%s206 + $0x168] sm:$0xf]
      %v298 = vld [vmem:[%s206 + $0x16c] sm:$0xf]
      %v299 = vld [vmem:[%s206 + $0x170] sm:$0xf]
      %v300 = vld [vmem:[%s206 + $0x174] sm:$0xf]
      %v301 = vld [vmem:[%s206 + $0x178] sm:$0xf]
      %v302 = vld [vmem:[%s206 + $0x17c] sm:$0xf]
      %v303 = vld [vmem:[%s206 + $0x180] sm:$0xf]
      %v304 = vld [vmem:[%s206 + $0x184] sm:$0xf]
      %v305 = vld [vmem:[%s206 + $0x188] sm:$0xf]
      %v306 = vld [vmem:[%s206 + $0x18c] sm:$0xf]
      %v307 = vld [vmem:[%s206 + $0x190] sm:$0xf]
      %v308 = vld [vmem:[%s206 + $0x194] sm:$0xf]
      %v309 = vld [vmem:[%s206 + $0x198] sm:$0xf]
      %v310 = vld [vmem:[%s206 + $0x19c] sm:$0xf]
      %v311 = vld [vmem:[%s206 + $0x1a0] sm:$0xf]
      %v312 = vld [vmem:[%s206 + $0x1a4] sm:$0xf]
      %v313 = vld [vmem:[%s206 + $0x1a8] sm:$0xf]
      %v314 = vld [vmem:[%s206 + $0x1ac] sm:$0xf]
      %v315 = vld [vmem:[%s206 + $0x1b0] sm:$0xf]
      %v316 = vld [vmem:[%s206 + $0x1b4] sm:$0xf]
      %v317 = vld [vmem:[%s206 + $0x1b8] sm:$0xf]
      %v318 = vld [vmem:[%s206 + $0x1bc] sm:$0xf]
      %v319 = vld [vmem:[%s206 + $0x1c0] sm:$0xf]
      %v432 = vunpack.c.l.b16 %v207
      %v433 = vunpack.c.l.b16 %v208
      %v434 = vunpack.c.l.b16 %v209
      %v435 = vunpack.c.l.b16 %v210
      %v436 = vunpack.c.l.b16 %v211
      %v437 = vunpack.c.l.b16 %v212
      %v438 = vunpack.c.l.b16 %v213
      %v439 = vunpack.c.l.b16 %v214
      %v440 = vunpack.c.l.b16 %v215
      %v441 = vunpack.c.l.b16 %v216
      %v442 = vunpack.c.l.b16 %v217
      %v443 = vunpack.c.l.b16 %v218
      %v444 = vunpack.c.l.b16 %v219
      %v445 = vunpack.c.l.b16 %v220
      %v446 = vunpack.c.l.b16 %v221
      %v447 = vunpack.c.l.b16 %v222
      %v448 = vunpack.c.l.b16 %v223
      %v449 = vunpack.c.l.b16 %v224
      %v450 = vunpack.c.l.b16 %v225
      %v451 = vunpack.c.l.b16 %v226
      %v452 = vunpack.c.l.b16 %v227
      %v453 = vunpack.c.l.b16 %v228
      %v454 = vunpack.c.l.b16 %v229
      %v455 = vunpack.c.l.b16 %v230
      %v456 = vunpack.c.l.b16 %v231
      %v457 = vunpack.c.l.b16 %v232
      %v458 = vunpack.c.l.b16 %v233
      %v459 = vunpack.c.l.b16 %v234
      %v460 = vunpack.c.l.b16 %v235
      %v461 = vunpack.c.l.b16 %v236
      %v462 = vunpack.c.l.b16 %v237
      %v463 = vunpack.c.l.b16 %v238
      %v464 = vunpack.c.l.b16 %v239
      %v465 = vunpack.c.l.b16 %v240
      %v466 = vunpack.c.l.b16 %v241
      %v467 = vunpack.c.l.b16 %v242
      %v468 = vunpack.c.l.b16 %v243
      %v469 = vunpack.c.l.b16 %v244
      %v470 = vunpack.c.l.b16 %v245
      %v471 = vunpack.c.l.b16 %v246
      %v472 = vunpack.c.l.b16 %v247
      %v473 = vunpack.c.l.b16 %v248
      %v474 = vunpack.c.l.b16 %v249
      %v475 = vunpack.c.l.b16 %v250
      %v476 = vunpack.c.l.b16 %v251
      %v477 = vunpack.c.l.b16 %v252
      %v478 = vunpack.c.l.b16 %v253
      %v479 = vunpack.c.l.b16 %v254
      %v480 = vunpack.c.l.b16 %v255
      %v481 = vunpack.c.l.b16 %v256
      %v482 = vunpack.c.l.b16 %v257
      %v483 = vunpack.c.l.b16 %v258
      %v484 = vunpack.c.l.b16 %v259
      %v485 = vunpack.c.l.b16 %v260
      %v486 = vunpack.c.l.b16 %v261
      %v487 = vunpack.c.l.b16 %v262
      %v488 = vunpack.c.l.b16 %v263
      %v489 = vunpack.c.l.b16 %v264
      %v490 = vunpack.c.l.b16 %v265
      %v491 = vunpack.c.l.b16 %v266
      %v492 = vunpack.c.l.b16 %v267
      %v493 = vunpack.c.l.b16 %v268
      %v494 = vunpack.c.l.b16 %v269
      %v495 = vunpack.c.l.b16 %v270
      %v496 = vunpack.c.l.b16 %v271
      %v497 = vunpack.c.l.b16 %v272
      %v498 = vunpack.c.l.b16 %v273
      %v499 = vunpack.c.l.b16 %v274
      %v500 = vunpack.c.l.b16 %v275
      %v501 = vunpack.c.l.b16 %v276
      %v502 = vunpack.c.l.b16 %v277
      %v503 = vunpack.c.l.b16 %v278
      %v504 = vunpack.c.l.b16 %v279
      %v505 = vunpack.c.l.b16 %v280
      %v506 = vunpack.c.l.b16 %v281
      %v507 = vunpack.c.l.b16 %v282
      %v508 = vunpack.c.l.b16 %v283
      %v509 = vunpack.c.l.b16 %v284
      %v510 = vunpack.c.l.b16 %v285
      %v511 = vunpack.c.l.b16 %v286
      %v512 = vunpack.c.l.b16 %v287
      %v513 = vunpack.c.l.b16 %v288
      %v514 = vunpack.c.l.b16 %v289
      %v515 = vunpack.c.l.b16 %v290
      %v516 = vunpack.c.l.b16 %v291
      %v517 = vunpack.c.l.b16 %v292
      %v518 = vunpack.c.l.b16 %v293
      %v519 = vunpack.c.l.b16 %v294
      %v520 = vunpack.c.l.b16 %v295
      %v521 = vunpack.c.l.b16 %v296
      %v522 = vunpack.c.l.b16 %v297
      %v523 = vunpack.c.l.b16 %v298
      %v524 = vunpack.c.l.b16 %v299
      %v525 = vunpack.c.l.b16 %v300
      %v526 = vunpack.c.l.b16 %v301
      %v527 = vunpack.c.l.b16 %v302
      %v528 = vunpack.c.l.b16 %v303
      %v529 = vunpack.c.l.b16 %v304
      %v530 = vunpack.c.l.b16 %v305
      %v531 = vunpack.c.l.b16 %v306
      %v532 = vunpack.c.l.b16 %v307
      %v533 = vunpack.c.l.b16 %v308
      %v534 = vunpack.c.l.b16 %v309
      %v535 = vunpack.c.l.b16 %v310
      %v536 = vunpack.c.l.b16 %v311
      %v537 = vunpack.c.l.b16 %v312
      %v538 = vunpack.c.l.b16 %v313
      %v539 = vunpack.c.l.b16 %v314
      %v540 = vunpack.c.l.b16 %v315
      %v541 = vunpack.c.l.b16 %v316
      %v542 = vunpack.c.l.b16 %v317
      %v543 = vunpack.c.l.b16 %v318
      %v544 = vpack.c.b16 %v433, %v432
      %v545 = vpack.c.b16 %v435, %v434
      %v546 = vpack.c.b16 %v437, %v436
      %v547 = vpack.c.b16 %v439, %v438
      %v548 = vpack.c.b16 %v441, %v440
      %v549 = vpack.c.b16 %v443, %v442
      %v550 = vpack.c.b16 %v445, %v444
      %v551 = vpack.c.b16 %v447, %v446
      %v552 = vpack.c.b16 %v449, %v448
      %v553 = vpack.c.b16 %v451, %v450
      %v554 = vpack.c.b16 %v453, %v452
      %v555 = vpack.c.b16 %v455, %v454
      %v556 = vpack.c.b16 %v457, %v456
      %v557 = vpack.c.b16 %v459, %v458
      %v558 = vpack.c.b16 %v461, %v460
      %v559 = vpack.c.b16 %v463, %v462
      %v560 = vpack.c.b16 %v465, %v464
      %v561 = vpack.c.b16 %v467, %v466
      %v562 = vpack.c.b16 %v469, %v468
      %v563 = vpack.c.b16 %v471, %v470
      %v564 = vpack.c.b16 %v473, %v472
      %v565 = vpack.c.b16 %v475, %v474
      %v566 = vpack.c.b16 %v477, %v476
      %v567 = vpack.c.b16 %v479, %v478
      %v568 = vpack.c.b16 %v481, %v480
      %v569 = vpack.c.b16 %v483, %v482
      %v570 = vpack.c.b16 %v485, %v484
      %v571 = vpack.c.b16 %v487, %v486
      %v572 = vpack.c.b16 %v489, %v488
      %v573 = vpack.c.b16 %v491, %v490
      %v574 = vpack.c.b16 %v493, %v492
      %v575 = vpack.c.b16 %v495, %v494
      %v576 = vpack.c.b16 %v497, %v496
      %v577 = vpack.c.b16 %v499, %v498
      %v578 = vpack.c.b16 %v501, %v500
      %v579 = vpack.c.b16 %v503, %v502
      %v580 = vpack.c.b16 %v505, %v504
      %v581 = vpack.c.b16 %v507, %v506
      %v582 = vpack.c.b16 %v509, %v508
      %v583 = vpack.c.b16 %v511, %v510
      %v584 = vpack.c.b16 %v513, %v512
      %v585 = vpack.c.b16 %v515, %v514
      %v586 = vpack.c.b16 %v517, %v516
      %v587 = vpack.c.b16 %v519, %v518
      %v588 = vpack.c.b16 %v521, %v520
      %v589 = vpack.c.b16 %v523, %v522
      %v590 = vpack.c.b16 %v525, %v524
      %v591 = vpack.c.b16 %v527, %v526
      %v592 = vpack.c.b16 %v529, %v528
      %v593 = vpack.c.b16 %v531, %v530
      %v594 = vpack.c.b16 %v533, %v532
      %v595 = vpack.c.b16 %v535, %v534
      %v596 = vpack.c.b16 %v537, %v536
      %v597 = vpack.c.b16 %v539, %v538
      %v598 = vpack.c.b16 %v541, %v540
      %v599 = vpack.c.b16 %v543, %v542
      %v601 = vunpack.c.l.b16 %v319
      %v602 = vpack.c.b16 %v601, %v601
      %vm603 = vsmask.f32 7424
      %v605 = vshrl.u32 %v544, 16
      %v607 = vshll.u32 %v544, 16
      %v609 = vrot.slane %v607, 1
      %v610 = vor.u32 %v605, %v609
      %v612 = vshll.u32 %v545, 16
      %v614 = vrot.slane %v612, 1
      %v615 = vsel %vm603, %v610, %v614
      %v616 = vshrl.u32 %v545, 16
      %v618 = vor.u32 %v616, %v614
      %v620 = vshll.u32 %v546, 16
      %v622 = vrot.slane %v620, 1
      %v623 = vsel %vm603, %v618, %v622
      %v624 = vshrl.u32 %v546, 16
      %v626 = vor.u32 %v624, %v622
      %v628 = vshll.u32 %v547, 16
      %v630 = vrot.slane %v628, 1
      %v631 = vsel %vm603, %v626, %v630
      %v632 = vshrl.u32 %v547, 16
      %v634 = vor.u32 %v632, %v630
      %v636 = vshll.u32 %v548, 16
      %v638 = vrot.slane %v636, 1
      %v639 = vsel %vm603, %v634, %v638
      %v640 = vshrl.u32 %v548, 16
      %v642 = vor.u32 %v640, %v638
      %v644 = vshll.u32 %v549, 16
      %v646 = vrot.slane %v644, 1
      %v647 = vsel %vm603, %v642, %v646
      %v648 = vshrl.u32 %v549, 16
      %v650 = vor.u32 %v648, %v646
      %v652 = vshll.u32 %v550, 16
      %v654 = vrot.slane %v652, 1
      %v655 = vsel %vm603, %v650, %v654
      %v656 = vshrl.u32 %v550, 16
      %v658 = vor.u32 %v656, %v654
      %v660 = vshll.u32 %v551, 16
      %v662 = vrot.slane %v660, 1
      %v663 = vsel %vm603, %v658, %v662
      %v664 = vshrl.u32 %v551, 16
      %v666 = vor.u32 %v664, %v662
      %v668 = vshll.u32 %v552, 16
      %v670 = vrot.slane %v668, 1
      %v671 = vsel %vm603, %v666, %v670
      %v672 = vshrl.u32 %v552, 16
      %v674 = vor.u32 %v672, %v670
      %v676 = vshll.u32 %v553, 16
      %v678 = vrot.slane %v676, 1
      %v679 = vsel %vm603, %v674, %v678
      %v680 = vshrl.u32 %v553, 16
      %v682 = vor.u32 %v680, %v678
      %v684 = vshll.u32 %v554, 16
      %v686 = vrot.slane %v684, 1
      %v687 = vsel %vm603, %v682, %v686
      %v688 = vshrl.u32 %v554, 16
      %v690 = vor.u32 %v688, %v686
      %v692 = vshll.u32 %v555, 16
      %v694 = vrot.slane %v692, 1
      %v695 = vsel %vm603, %v690, %v694
      %v696 = vshrl.u32 %v555, 16
      %v698 = vor.u32 %v696, %v694
      %v700 = vshll.u32 %v556, 16
      %v702 = vrot.slane %v700, 1
      %v703 = vsel %vm603, %v698, %v702
      %v704 = vshrl.u32 %v556, 16
      %v706 = vor.u32 %v704, %v702
      %v708 = vshll.u32 %v557, 16
      %v710 = vrot.slane %v708, 1
      %v711 = vsel %vm603, %v706, %v710
      %v712 = vshrl.u32 %v557, 16
      %v714 = vor.u32 %v712, %v710
      %v716 = vshll.u32 %v558, 16
      %v718 = vrot.slane %v716, 1
      %v719 = vsel %vm603, %v714, %v718
      %v720 = vshrl.u32 %v558, 16
      %v722 = vor.u32 %v720, %v718
      %v724 = vshll.u32 %v559, 16
      %v726 = vrot.slane %v724, 1
      %v727 = vsel %vm603, %v722, %v726
      %v728 = vshrl.u32 %v559, 16
      %v730 = vor.u32 %v728, %v726
      %v732 = vshll.u32 %v560, 16
      %v734 = vrot.slane %v732, 1
      %v735 = vsel %vm603, %v730, %v734
      %v736 = vshrl.u32 %v560, 16
      %v738 = vor.u32 %v736, %v734
      %v740 = vshll.u32 %v561, 16
      %v742 = vrot.slane %v740, 1
      %v743 = vsel %vm603, %v738, %v742
      %v744 = vshrl.u32 %v561, 16
      %v746 = vor.u32 %v744, %v742
      %v748 = vshll.u32 %v562, 16
      %v750 = vrot.slane %v748, 1
      %v751 = vsel %vm603, %v746, %v750
      %v752 = vshrl.u32 %v562, 16
      %v754 = vor.u32 %v752, %v750
      %v756 = vshll.u32 %v563, 16
      %v758 = vrot.slane %v756, 1
      %v759 = vsel %vm603, %v754, %v758
      %v760 = vshrl.u32 %v563, 16
      %v762 = vor.u32 %v760, %v758
      %v764 = vshll.u32 %v564, 16
      %v766 = vrot.slane %v764, 1
      %v767 = vsel %vm603, %v762, %v766
      %v768 = vshrl.u32 %v564, 16
      %v770 = vor.u32 %v768, %v766
      %v772 = vshll.u32 %v565, 16
      %v774 = vrot.slane %v772, 1
      %v775 = vsel %vm603, %v770, %v774
      %v776 = vshrl.u32 %v565, 16
      %v778 = vor.u32 %v776, %v774
      %v780 = vshll.u32 %v566, 16
      %v782 = vrot.slane %v780, 1
      %v783 = vsel %vm603, %v778, %v782
      %v784 = vshrl.u32 %v566, 16
      %v786 = vor.u32 %v784, %v782
      %v788 = vshll.u32 %v567, 16
      %v790 = vrot.slane %v788, 1
      %v791 = vsel %vm603, %v786, %v790
      %v792 = vshrl.u32 %v567, 16
      %v794 = vor.u32 %v792, %v790
      %v796 = vshll.u32 %v568, 16
      %v798 = vrot.slane %v796, 1
      %v799 = vsel %vm603, %v794, %v798
      %v800 = vshrl.u32 %v568, 16
      %v802 = vor.u32 %v800, %v798
      %v804 = vshll.u32 %v569, 16
      %v806 = vrot.slane %v804, 1
      %v807 = vsel %vm603, %v802, %v806
      %v808 = vshrl.u32 %v569, 16
      %v810 = vor.u32 %v808, %v806
      %v812 = vshll.u32 %v570, 16
      %v814 = vrot.slane %v812, 1
      %v815 = vsel %vm603, %v810, %v814
      %v816 = vshrl.u32 %v570, 16
      %v818 = vor.u32 %v816, %v814
      %v820 = vshll.u32 %v571, 16
      %v822 = vrot.slane %v820, 1
      %v823 = vsel %vm603, %v818, %v822
      %v824 = vshrl.u32 %v571, 16
      %v826 = vor.u32 %v824, %v822
      %v828 = vshll.u32 %v572, 16
      %v830 = vrot.slane %v828, 1
      %v831 = vsel %vm603, %v826, %v830
      %v832 = vshrl.u32 %v572, 16
      %v834 = vor.u32 %v832, %v830
      %v836 = vshll.u32 %v573, 16
      %v838 = vrot.slane %v836, 1
      %v839 = vsel %vm603, %v834, %v838
      %v840 = vshrl.u32 %v573, 16
      %v842 = vor.u32 %v840, %v838
      %v844 = vshll.u32 %v574, 16
      %v846 = vrot.slane %v844, 1
      %v847 = vsel %vm603, %v842, %v846
      %v848 = vshrl.u32 %v574, 16
      %v850 = vor.u32 %v848, %v846
      %v852 = vshll.u32 %v575, 16
      %v854 = vrot.slane %v852, 1
      %v855 = vsel %vm603, %v850, %v854
      %v856 = vshrl.u32 %v575, 16
      %v858 = vor.u32 %v856, %v854
      %v860 = vshll.u32 %v576, 16
      %v862 = vrot.slane %v860, 1
      %v863 = vsel %vm603, %v858, %v862
      %v864 = vshrl.u32 %v576, 16
      %v866 = vor.u32 %v864, %v862
      %v868 = vshll.u32 %v577, 16
      %v870 = vrot.slane %v868, 1
      %v871 = vsel %vm603, %v866, %v870
      %v872 = vshrl.u32 %v577, 16
      %v874 = vor.u32 %v872, %v870
      %v876 = vshll.u32 %v578, 16
      %v878 = vrot.slane %v876, 1
      %v879 = vsel %vm603, %v874, %v878
      %v880 = vshrl.u32 %v578, 16
      %v882 = vor.u32 %v880, %v878
      %v884 = vshll.u32 %v579, 16
      %v886 = vrot.slane %v884, 1
      %v887 = vsel %vm603, %v882, %v886
      %v888 = vshrl.u32 %v579, 16
      %v890 = vor.u32 %v888, %v886
      %v892 = vshll.u32 %v580, 16
      %v894 = vrot.slane %v892, 1
      %v895 = vsel %vm603, %v890, %v894
      %v896 = vshrl.u32 %v580, 16
      %v898 = vor.u32 %v896, %v894
      %v900 = vshll.u32 %v581, 16
      %v902 = vrot.slane %v900, 1
      %v903 = vsel %vm603, %v898, %v902
      %v904 = vshrl.u32 %v581, 16
      %v906 = vor.u32 %v904, %v902
      %v908 = vshll.u32 %v582, 16
      %v910 = vrot.slane %v908, 1
      %v911 = vsel %vm603, %v906, %v910
      %v912 = vshrl.u32 %v582, 16
      %v914 = vor.u32 %v912, %v910
      %v916 = vshll.u32 %v583, 16
      %v918 = vrot.slane %v916, 1
      %v919 = vsel %vm603, %v914, %v918
      %v920 = vshrl.u32 %v583, 16
      %v922 = vor.u32 %v920, %v918
      %v924 = vshll.u32 %v584, 16
      %v926 = vrot.slane %v924, 1
      %v927 = vsel %vm603, %v922, %v926
      %v928 = vshrl.u32 %v584, 16
      %v930 = vor.u32 %v928, %v926
      %v932 = vshll.u32 %v585, 16
      %v934 = vrot.slane %v932, 1
      %v935 = vsel %vm603, %v930, %v934
      %v936 = vshrl.u32 %v585, 16
      %v938 = vor.u32 %v936, %v934
      %v940 = vshll.u32 %v586, 16
      %v942 = vrot.slane %v940, 1
      %v943 = vsel %vm603, %v938, %v942
      %v944 = vshrl.u32 %v586, 16
      %v946 = vor.u32 %v944, %v942
      %v948 = vshll.u32 %v587, 16
      %v950 = vrot.slane %v948, 1
      %v951 = vsel %vm603, %v946, %v950
      %v952 = vshrl.u32 %v587, 16
      %v954 = vor.u32 %v952, %v950
      %v956 = vshll.u32 %v588, 16
      %v958 = vrot.slane %v956, 1
      %v959 = vsel %vm603, %v954, %v958
      %v960 = vshrl.u32 %v588, 16
      %v962 = vor.u32 %v960, %v958
      %v964 = vshll.u32 %v589, 16
      %v966 = vrot.slane %v964, 1
      %v967 = vsel %vm603, %v962, %v966
      %v968 = vshrl.u32 %v589, 16
      %v970 = vor.u32 %v968, %v966
      %v972 = vshll.u32 %v590, 16
      %v974 = vrot.slane %v972, 1
      %v975 = vsel %vm603, %v970, %v974
      %v976 = vshrl.u32 %v590, 16
      %v978 = vor.u32 %v976, %v974
      %v980 = vshll.u32 %v591, 16
      %v982 = vrot.slane %v980, 1
      %v983 = vsel %vm603, %v978, %v982
      %v984 = vshrl.u32 %v591, 16
      %v986 = vor.u32 %v984, %v982
      %v988 = vshll.u32 %v592, 16
      %v990 = vrot.slane %v988, 1
      %v991 = vsel %vm603, %v986, %v990
      %v992 = vshrl.u32 %v592, 16
      %v994 = vor.u32 %v992, %v990
      %v996 = vshll.u32 %v593, 16
      %v998 = vrot.slane %v996, 1
      %v999 = vsel %vm603, %v994, %v998
      %v1000 = vshrl.u32 %v593, 16
      %v1002 = vor.u32 %v1000, %v998
      %v1004 = vshll.u32 %v594, 16
      %v1006 = vrot.slane %v1004, 1
      %v1007 = vsel %vm603, %v1002, %v1006
      %v1008 = vshrl.u32 %v594, 16
      %v1010 = vor.u32 %v1008, %v1006
      %v1012 = vshll.u32 %v595, 16
      %v1014 = vrot.slane %v1012, 1
      %v1015 = vsel %vm603, %v1010, %v1014
      %v1016 = vshrl.u32 %v595, 16
      %v1018 = vor.u32 %v1016, %v1014
      %v1020 = vshll.u32 %v596, 16
      %v1022 = vrot.slane %v1020, 1
      %v1023 = vsel %vm603, %v1018, %v1022
      %v1024 = vshrl.u32 %v596, 16
      %v1026 = vor.u32 %v1024, %v1022
      %v1028 = vshll.u32 %v597, 16
      %v1030 = vrot.slane %v1028, 1
      %v1031 = vsel %vm603, %v1026, %v1030
      %v1032 = vshrl.u32 %v597, 16
      %v1034 = vor.u32 %v1032, %v1030
      %v1036 = vshll.u32 %v598, 16
      %v1038 = vrot.slane %v1036, 1
      %v1039 = vsel %vm603, %v1034, %v1038
      %v1040 = vshrl.u32 %v598, 16
      %v1042 = vor.u32 %v1040, %v1038
      %v1044 = vshll.u32 %v599, 16
      %v1046 = vrot.slane %v1044, 1
      %v1047 = vsel %vm603, %v1042, %v1046
      %v1048 = vshrl.u32 %v599, 16
      %v1050 = vor.u32 %v1048, %v1046
      %v1052 = vshll.u32 %v602, 16
      %v1054 = vrot.slane %v1052, 1
      %v1055 = vsel %vm603, %v1050, %v1054
      %1056 = vrot.lane.b32.xlu0 %v615, 32
      %v1057 = vpop.permute.xlu0 %1056
      %1058 = vrot.lane.b32.xlu0 %v623, 32
      %v1059 = vpop.permute.xlu0 %1058
      %1060 = vrot.lane.b32.xlu0 %v631, 32
      %v1061 = vpop.permute.xlu0 %1060
      %1062 = vrot.lane.b32.xlu0 %v639, 32
      %v1063 = vpop.permute.xlu0 %1062
      %1064 = vrot.lane.b32.xlu0 %v647, 32
      %v1065 = vpop.permute.xlu0 %1064
      %1066 = vrot.lane.b32.xlu0 %v655, 32
      %v1067 = vpop.permute.xlu0 %1066
      %1068 = vrot.lane.b32.xlu0 %v663, 32
      %v1069 = vpop.permute.xlu0 %1068
      %1070 = vrot.lane.b32.xlu0 %v671, 32
      %v1071 = vpop.permute.xlu0 %1070
      %1072 = vrot.lane.b32.xlu0 %v679, 32
      %v1073 = vpop.permute.xlu0 %1072
      %1074 = vrot.lane.b32.xlu0 %v687, 32
      %v1075 = vpop.permute.xlu0 %1074
      %1076 = vrot.lane.b32.xlu0 %v695, 32
      %v1077 = vpop.permute.xlu0 %1076
      %1078 = vrot.lane.b32.xlu0 %v703, 32
      %v1079 = vpop.permute.xlu0 %1078
      %1080 = vrot.lane.b32.xlu0 %v711, 32
      %v1081 = vpop.permute.xlu0 %1080
      %1082 = vrot.lane.b32.xlu0 %v719, 32
      %v1083 = vpop.permute.xlu0 %1082
      %1084 = vrot.lane.b32.xlu0 %v727, 32
      %v1085 = vpop.permute.xlu0 %1084
      %1086 = vrot.lane.b32.xlu0 %v735, 32
      %v1087 = vpop.permute.xlu0 %1086
      %1088 = vrot.lane.b32.xlu0 %v743, 32
      %v1089 = vpop.permute.xlu0 %1088
      %1090 = vrot.lane.b32.xlu0 %v751, 32
      %v1091 = vpop.permute.xlu0 %1090
      %1092 = vrot.lane.b32.xlu0 %v759, 32
      %v1093 = vpop.permute.xlu0 %1092
      %1094 = vrot.lane.b32.xlu0 %v767, 32
      %v1095 = vpop.permute.xlu0 %1094
      %1096 = vrot.lane.b32.xlu0 %v775, 32
      %v1097 = vpop.permute.xlu0 %1096
      %1098 = vrot.lane.b32.xlu0 %v783, 32
      %v1099 = vpop.permute.xlu0 %1098
      %1100 = vrot.lane.b32.xlu0 %v791, 32
      %v1101 = vpop.permute.xlu0 %1100
      %1102 = vrot.lane.b32.xlu0 %v799, 32
      %v1103 = vpop.permute.xlu0 %1102
      %1104 = vrot.lane.b32.xlu0 %v807, 32
      %v1105 = vpop.permute.xlu0 %1104
      %1106 = vrot.lane.b32.xlu0 %v815, 32
      %v1107 = vpop.permute.xlu0 %1106
      %1108 = vrot.lane.b32.xlu0 %v823, 32
      %v1109 = vpop.permute.xlu0 %1108
      %1110 = vrot.lane.b32.xlu0 %v831, 32
      %v1111 = vpop.permute.xlu0 %1110
      %1112 = vrot.lane.b32.xlu0 %v839, 32
      %v1113 = vpop.permute.xlu0 %1112
      %1114 = vrot.lane.b32.xlu0 %v847, 32
      %v1115 = vpop.permute.xlu0 %1114
      %1116 = vrot.lane.b32.xlu0 %v855, 32
      %v1117 = vpop.permute.xlu0 %1116
      %1118 = vrot.lane.b32.xlu0 %v863, 32
      %v1119 = vpop.permute.xlu0 %1118
      %1120 = vrot.lane.b32.xlu0 %v871, 32
      %v1121 = vpop.permute.xlu0 %1120
      %1122 = vrot.lane.b32.xlu0 %v879, 32
      %v1123 = vpop.permute.xlu0 %1122
      %1124 = vrot.lane.b32.xlu0 %v887, 32
      %v1125 = vpop.permute.xlu0 %1124
      %1126 = vrot.lane.b32.xlu0 %v895, 32
      %v1127 = vpop.permute.xlu0 %1126
      %1128 = vrot.lane.b32.xlu0 %v903, 32
      %v1129 = vpop.permute.xlu0 %1128
      %1130 = vrot.lane.b32.xlu0 %v911, 32
      %v1131 = vpop.permute.xlu0 %1130
      %1132 = vrot.lane.b32.xlu0 %v919, 32
      %v1133 = vpop.permute.xlu0 %1132
      %1134 = vrot.lane.b32.xlu0 %v927, 32
      %v1135 = vpop.permute.xlu0 %1134
      %1136 = vrot.lane.b32.xlu0 %v935, 32
      %v1137 = vpop.permute.xlu0 %1136
      %1138 = vrot.lane.b32.xlu0 %v943, 32
      %v1139 = vpop.permute.xlu0 %1138
      %1140 = vrot.lane.b32.xlu0 %v951, 32
      %v1141 = vpop.permute.xlu0 %1140
      %1142 = vrot.lane.b32.xlu0 %v959, 32
      %v1143 = vpop.permute.xlu0 %1142
      %1144 = vrot.lane.b32.xlu0 %v967, 32
      %v1145 = vpop.permute.xlu0 %1144
      %1146 = vrot.lane.b32.xlu0 %v975, 32
      %v1147 = vpop.permute.xlu0 %1146
      %1148 = vrot.lane.b32.xlu0 %v983, 32
      %v1149 = vpop.permute.xlu0 %1148
      %1150 = vrot.lane.b32.xlu0 %v991, 32
      %v1151 = vpop.permute.xlu0 %1150
      %1152 = vrot.lane.b32.xlu0 %v999, 32
      %v1153 = vpop.permute.xlu0 %1152
      %1154 = vrot.lane.b32.xlu0 %v1007, 32
      %v1155 = vpop.permute.xlu0 %1154
      %1156 = vrot.lane.b32.xlu0 %v1015, 32
      %v1157 = vpop.permute.xlu0 %1156
      %1158 = vrot.lane.b32.xlu0 %v1023, 32
      %v1159 = vpop.permute.xlu0 %1158
      %1160 = vrot.lane.b32.xlu0 %v1031, 32
      %v1161 = vpop.permute.xlu0 %1160
      %1162 = vrot.lane.b32.xlu0 %v1039, 32
      %v1163 = vpop.permute.xlu0 %1162
      %1164 = vrot.lane.b32.xlu0 %v1047, 32
      %v1165 = vpop.permute.xlu0 %1164
      %1166 = vrot.lane.b32.xlu0 %v1055, 32
      %v1167 = vpop.permute.xlu0 %1166
      %vm1168 = vcmask 1046528
      %v1169 = vrot.slane %v544, 1
      %v1170 = vrot.slane %v545, 1
      %v1171 = vsel %vm1168, %v1169, %v1170
      %v1172 = vrot.slane %v546, 1
      %v1173 = vsel %vm1168, %v1170, %v1172
      %v1174 = vrot.slane %v547, 1
      %v1175 = vsel %vm1168, %v1172, %v1174
      %v1176 = vrot.slane %v548, 1
      %v1177 = vsel %vm1168, %v1174, %v1176
      %v1178 = vrot.slane %v549, 1
      %v1179 = vsel %vm1168, %v1176, %v1178
      %v1180 = vrot.slane %v550, 1
      %v1181 = vsel %vm1168, %v1178, %v1180
      %v1182 = vrot.slane %v551, 1
      %v1183 = vsel %vm1168, %v1180, %v1182
      %v1184 = vrot.slane %v552, 1
      %v1185 = vsel %vm1168, %v1182, %v1184
      %v1186 = vrot.slane %v553, 1
      %v1187 = vsel %vm1168, %v1184, %v1186
      %v1188 = vrot.slane %v554, 1
      %v1189 = vsel %vm1168, %v1186, %v1188
      %v1190 = vrot.slane %v555, 1
      %v1191 = vsel %vm1168, %v1188, %v1190
      %v1192 = vrot.slane %v556, 1
      %v1193 = vsel %vm1168, %v1190, %v1192
      %v1194 = vrot.slane %v557, 1
      %v1195 = vsel %vm1168, %v1192, %v1194
      %v1196 = vrot.slane %v558, 1
      %v1197 = vsel %vm1168, %v1194, %v1196
      %v1198 = vrot.slane %v559, 1
      %v1199 = vsel %vm1168, %v1196, %v1198
      %v1200 = vrot.slane %v560, 1
      %v1201 = vsel %vm1168, %v1198, %v1200
      %v1202 = vrot.slane %v561, 1
      %v1203 = vsel %vm1168, %v1200, %v1202
      %v1204 = vrot.slane %v562, 1
      %v1205 = vsel %vm1168, %v1202, %v1204
      %v1206 = vrot.slane %v563, 1
      %v1207 = vsel %vm1168, %v1204, %v1206
      %v1208 = vrot.slane %v564, 1
      %v1209 = vsel %vm1168, %v1206, %v1208
      %v1210 = vrot.slane %v565, 1
      %v1211 = vsel %vm1168, %v1208, %v1210
      %v1212 = vrot.slane %v566, 1
      %v1213 = vsel %vm1168, %v1210, %v1212
      %v1214 = vrot.slane %v567, 1
      %v1215 = vsel %vm1168, %v1212, %v1214
      %v1216 = vrot.slane %v568, 1
      %v1217 = vsel %vm1168, %v1214, %v1216
      %v1218 = vrot.slane %v569, 1
      %v1219 = vsel %vm1168, %v1216, %v1218
      %v1220 = vrot.slane %v570, 1
      %v1221 = vsel %vm1168, %v1218, %v1220
      %v1222 = vrot.slane %v571, 1
      %v1223 = vsel %vm1168, %v1220, %v1222
      %v1224 = vrot.slane %v572, 1
      %v1225 = vsel %vm1168, %v1222, %v1224
      %v1226 = vrot.slane %v573, 1
      %v1227 = vsel %vm1168, %v1224, %v1226
      %v1228 = vrot.slane %v574, 1
      %v1229 = vsel %vm1168, %v1226, %v1228
      %v1230 = vrot.slane %v575, 1
      %v1231 = vsel %vm1168, %v1228, %v1230
      %v1232 = vrot.slane %v576, 1
      %v1233 = vsel %vm1168, %v1230, %v1232
      %v1234 = vrot.slane %v577, 1
      %v1235 = vsel %vm1168, %v1232, %v1234
      %v1236 = vrot.slane %v578, 1
      %v1237 = vsel %vm1168, %v1234, %v1236
      %v1238 = vrot.slane %v579, 1
      %v1239 = vsel %vm1168, %v1236, %v1238
      %v1240 = vrot.slane %v580, 1
      %v1241 = vsel %vm1168, %v1238, %v1240
      %v1242 = vrot.slane %v581, 1
      %v1243 = vsel %vm1168, %v1240, %v1242
      %v1244 = vrot.slane %v582, 1
      %v1245 = vsel %vm1168, %v1242, %v1244
      %v1246 = vrot.slane %v583, 1
      %v1247 = vsel %vm1168, %v1244, %v1246
      %v1248 = vrot.slane %v584, 1
      %v1249 = vsel %vm1168, %v1246, %v1248
      %v1250 = vrot.slane %v585, 1
      %v1251 = vsel %vm1168, %v1248, %v1250
      %v1252 = vrot.slane %v586, 1
      %v1253 = vsel %vm1168, %v1250, %v1252
      %v1254 = vrot.slane %v587, 1
      %v1255 = vsel %vm1168, %v1252, %v1254
      %v1256 = vrot.slane %v588, 1
      %v1257 = vsel %vm1168, %v1254, %v1256
      %v1258 = vrot.slane %v589, 1
      %v1259 = vsel %vm1168, %v1256, %v1258
      %v1260 = vrot.slane %v590, 1
      %v1261 = vsel %vm1168, %v1258, %v1260
      %v1262 = vrot.slane %v591, 1
      %v1263 = vsel %vm1168, %v1260, %v1262
      %v1264 = vrot.slane %v592, 1
      %v1265 = vsel %vm1168, %v1262, %v1264
      %v1266 = vrot.slane %v593, 1
      %v1267 = vsel %vm1168, %v1264, %v1266
      %v1268 = vrot.slane %v594, 1
      %v1269 = vsel %vm1168, %v1266, %v1268
      %v1270 = vrot.slane %v595, 1
      %v1271 = vsel %vm1168, %v1268, %v1270
      %v1272 = vrot.slane %v596, 1
      %v1273 = vsel %vm1168, %v1270, %v1272
      %v1274 = vrot.slane %v597, 1
      %v1275 = vsel %vm1168, %v1272, %v1274
      %v1276 = vrot.slane %v598, 1
      %v1277 = vsel %vm1168, %v1274, %v1276
      %v1278 = vrot.slane %v599, 1
      %v1279 = vsel %vm1168, %v1276, %v1278
      %v1280 = vrot.slane %v602, 1
      %v1281 = vsel %vm1168, %v1278, %v1280
      %1282 = vrot.lane.b32.xlu0 %v1171, 64
      %v1283 = vpop.permute.xlu0 %1282
      %1284 = vrot.lane.b32.xlu0 %v1173, 64
      %v1285 = vpop.permute.xlu0 %1284
      %1286 = vrot.lane.b32.xlu0 %v1175, 64
      %v1287 = vpop.permute.xlu0 %1286
      %1288 = vrot.lane.b32.xlu0 %v1177, 64
      %v1289 = vpop.permute.xlu0 %1288
      %1290 = vrot.lane.b32.xlu0 %v1179, 64
      %v1291 = vpop.permute.xlu0 %1290
      %1292 = vrot.lane.b32.xlu0 %v1181, 64
      %v1293 = vpop.permute.xlu0 %1292
      %1294 = vrot.lane.b32.xlu0 %v1183, 64
      %v1295 = vpop.permute.xlu0 %1294
      %1296 = vrot.lane.b32.xlu0 %v1185, 64
      %v1297 = vpop.permute.xlu0 %1296
      %1298 = vrot.lane.b32.xlu0 %v1187, 64
      %v1299 = vpop.permute.xlu0 %1298
      %1300 = vrot.lane.b32.xlu0 %v1189, 64
      %v1301 = vpop.permute.xlu0 %1300
      %1302 = vrot.lane.b32.xlu0 %v1191, 64
      %v1303 = vpop.permute.xlu0 %1302
      %1304 = vrot.lane.b32.xlu0 %v1193, 64
      %v1305 = vpop.permute.xlu0 %1304
      %1306 = vrot.lane.b32.xlu0 %v1195, 64
      %v1307 = vpop.permute.xlu0 %1306
      %1308 = vrot.lane.b32.xlu0 %v1197, 64
      %v1309 = vpop.permute.xlu0 %1308
      %1310 = vrot.lane.b32.xlu0 %v1199, 64
      %v1311 = vpop.permute.xlu0 %1310
      %1312 = vrot.lane.b32.xlu0 %v1201, 64
      %v1313 = vpop.permute.xlu0 %1312
      %1314 = vrot.lane.b32.xlu0 %v1203, 64
      %v1315 = vpop.permute.xlu0 %1314
      %1316 = vrot.lane.b32.xlu0 %v1205, 64
      %v1317 = vpop.permute.xlu0 %1316
      %1318 = vrot.lane.b32.xlu0 %v1207, 64
      %v1319 = vpop.permute.xlu0 %1318
      %1320 = vrot.lane.b32.xlu0 %v1209, 64
      %v1321 = vpop.permute.xlu0 %1320
      %1322 = vrot.lane.b32.xlu0 %v1211, 64
      %v1323 = vpop.permute.xlu0 %1322
      %1324 = vrot.lane.b32.xlu0 %v1213, 64
      %v1325 = vpop.permute.xlu0 %1324
      %1326 = vrot.lane.b32.xlu0 %v1215, 64
      %v1327 = vpop.permute.xlu0 %1326
      %1328 = vrot.lane.b32.xlu0 %v1217, 64
      %v1329 = vpop.permute.xlu0 %1328
      %1330 = vrot.lane.b32.xlu0 %v1219, 64
      %v1331 = vpop.permute.xlu0 %1330
      %1332 = vrot.lane.b32.xlu0 %v1221, 64
      %v1333 = vpop.permute.xlu0 %1332
      %1334 = vrot.lane.b32.xlu0 %v1223, 64
      %v1335 = vpop.permute.xlu0 %1334
      %1336 = vrot.lane.b32.xlu0 %v1225, 64
      %v1337 = vpop.permute.xlu0 %1336
      %1338 = vrot.lane.b32.xlu0 %v1227, 64
      %v1339 = vpop.permute.xlu0 %1338
      %1340 = vrot.lane.b32.xlu0 %v1229, 64
      %v1341 = vpop.permute.xlu0 %1340
      %1342 = vrot.lane.b32.xlu0 %v1231, 64
      %v1343 = vpop.permute.xlu0 %1342
      %1344 = vrot.lane.b32.xlu0 %v1233, 64
      %v1345 = vpop.permute.xlu0 %1344
      %1346 = vrot.lane.b32.xlu0 %v1235, 64
      %v1347 = vpop.permute.xlu0 %1346
      %1348 = vrot.lane.b32.xlu0 %v1237, 64
      %v1349 = vpop.permute.xlu0 %1348
      %1350 = vrot.lane.b32.xlu0 %v1239, 64
      %v1351 = vpop.permute.xlu0 %1350
      %1352 = vrot.lane.b32.xlu0 %v1241, 64
      %v1353 = vpop.permute.xlu0 %1352
      %1354 = vrot.lane.b32.xlu0 %v1243, 64
      %v1355 = vpop.permute.xlu0 %1354
      %1356 = vrot.lane.b32.xlu0 %v1245, 64
      %v1357 = vpop.permute.xlu0 %1356
      %1358 = vrot.lane.b32.xlu0 %v1247, 64
      %v1359 = vpop.permute.xlu0 %1358
      %1360 = vrot.lane.b32.xlu0 %v1249, 64
      %v1361 = vpop.permute.xlu0 %1360
      %1362 = vrot.lane.b32.xlu0 %v1251, 64
      %v1363 = vpop.permute.xlu0 %1362
      %1364 = vrot.lane.b32.xlu0 %v1253, 64
      %v1365 = vpop.permute.xlu0 %1364
      %1366 = vrot.lane.b32.xlu0 %v1255, 64
      %v1367 = vpop.permute.xlu0 %1366
      %1368 = vrot.lane.b32.xlu0 %v1257, 64
      %v1369 = vpop.permute.xlu0 %1368
      %1370 = vrot.lane.b32.xlu0 %v1259, 64
      %v1371 = vpop.permute.xlu0 %1370
      %1372 = vrot.lane.b32.xlu0 %v1261, 64
      %v1373 = vpop.permute.xlu0 %1372
      %1374 = vrot.lane.b32.xlu0 %v1263, 64
      %v1375 = vpop.permute.xlu0 %1374
      %1376 = vrot.lane.b32.xlu0 %v1265, 64
      %v1377 = vpop.permute.xlu0 %1376
      %1378 = vrot.lane.b32.xlu0 %v1267, 64
      %v1379 = vpop.permute.xlu0 %1378
      %1380 = vrot.lane.b32.xlu0 %v1269, 64
      %v1381 = vpop.permute.xlu0 %1380
      %1382 = vrot.lane.b32.xlu0 %v1271, 64
      %v1383 = vpop.permute.xlu0 %1382
      %1384 = vrot.lane.b32.xlu0 %v1273, 64
      %v1385 = vpop.permute.xlu0 %1384
      %1386 = vrot.lane.b32.xlu0 %v1275, 64
      %v1387 = vpop.permute.xlu0 %1386
      %1388 = vrot.lane.b32.xlu0 %v1277, 64
      %v1389 = vpop.permute.xlu0 %1388
      %1390 = vrot.lane.b32.xlu0 %v1279, 64
      %v1391 = vpop.permute.xlu0 %1390
      %1392 = vrot.lane.b32.xlu0 %v1281, 64
      %v1393 = vpop.permute.xlu0 %1392
      %vm1394 = vcmask 261120
      %v1396 = vsel %vm1394, %v544, %v1057
      %v1398 = vsel %vm1394, %v545, %v1059
      %v1400 = vsel %vm1394, %v546, %v1061
      %v1402 = vsel %vm1394, %v547, %v1063
      %v1404 = vsel %vm1394, %v548, %v1065
      %v1406 = vsel %vm1394, %v549, %v1067
      %v1408 = vsel %vm1394, %v550, %v1069
      %v1410 = vsel %vm1394, %v551, %v1071
      %v1412 = vsel %vm1394, %v552, %v1073
      %v1414 = vsel %vm1394, %v553, %v1075
      %v1416 = vsel %vm1394, %v554, %v1077
      %v1418 = vsel %vm1394, %v555, %v1079
      %v1420 = vsel %vm1394, %v556, %v1081
      %v1422 = vsel %vm1394, %v557, %v1083
      %v1424 = vsel %vm1394, %v558, %v1085
      %v1426 = vsel %vm1394, %v559, %v1087
      %v1428 = vsel %vm1394, %v560, %v1089
      %v1430 = vsel %vm1394, %v561, %v1091
      %v1432 = vsel %vm1394, %v562, %v1093
      %v1434 = vsel %vm1394, %v563, %v1095
      %v1436 = vsel %vm1394, %v564, %v1097
      %v1438 = vsel %vm1394, %v565, %v1099
      %v1440 = vsel %vm1394, %v566, %v1101
      %v1442 = vsel %vm1394, %v567, %v1103
      %v1444 = vsel %vm1394, %v568, %v1105
      %v1446 = vsel %vm1394, %v569, %v1107
      %v1448 = vsel %vm1394, %v570, %v1109
      %v1450 = vsel %vm1394, %v571, %v1111
      %v1452 = vsel %vm1394, %v572, %v1113
      %v1454 = vsel %vm1394, %v573, %v1115
      %v1456 = vsel %vm1394, %v574, %v1117
      %v1458 = vsel %vm1394, %v575, %v1119
      %v1460 = vsel %vm1394, %v576, %v1121
      %v1462 = vsel %vm1394, %v577, %v1123
      %v1464 = vsel %vm1394, %v578, %v1125
      %v1466 = vsel %vm1394, %v579, %v1127
      %v1468 = vsel %vm1394, %v580, %v1129
      %v1470 = vsel %vm1394, %v581, %v1131
      %v1472 = vsel %vm1394, %v582, %v1133
      %v1474 = vsel %vm1394, %v583, %v1135
      %v1476 = vsel %vm1394, %v584, %v1137
      %v1478 = vsel %vm1394, %v585, %v1139
      %v1480 = vsel %vm1394, %v586, %v1141
      %v1482 = vsel %vm1394, %v587, %v1143
      %v1484 = vsel %vm1394, %v588, %v1145
      %v1486 = vsel %vm1394, %v589, %v1147
      %v1488 = vsel %vm1394, %v590, %v1149
      %v1490 = vsel %vm1394, %v591, %v1151
      %v1492 = vsel %vm1394, %v592, %v1153
      %v1494 = vsel %vm1394, %v593, %v1155
      %v1496 = vsel %vm1394, %v594, %v1157
      %v1498 = vsel %vm1394, %v595, %v1159
      %v1500 = vsel %vm1394, %v596, %v1161
      %v1502 = vsel %vm1394, %v597, %v1163
      %v1504 = vsel %vm1394, %v598, %v1165
      %v1506 = vsel %vm1394, %v599, %v1167
      %vm1507 = vcmask 523264
      %v1509 = vsel %vm1507, %v1396, %v1283
      %v1511 = vsel %vm1507, %v1398, %v1285
      %v1513 = vsel %vm1507, %v1400, %v1287
      %v1515 = vsel %vm1507, %v1402, %v1289
      %v1517 = vsel %vm1507, %v1404, %v1291
      %v1519 = vsel %vm1507, %v1406, %v1293
      %v1521 = vsel %vm1507, %v1408, %v1295
      %v1523 = vsel %vm1507, %v1410, %v1297
      %v1525 = vsel %vm1507, %v1412, %v1299
      %v1527 = vsel %vm1507, %v1414, %v1301
      %v1529 = vsel %vm1507, %v1416, %v1303
      %v1531 = vsel %vm1507, %v1418, %v1305
      %v1533 = vsel %vm1507, %v1420, %v1307
      %v1535 = vsel %vm1507, %v1422, %v1309
      %v1537 = vsel %vm1507, %v1424, %v1311
      %v1539 = vsel %vm1507, %v1426, %v1313
      %v1541 = vsel %vm1507, %v1428, %v1315
      %v1543 = vsel %vm1507, %v1430, %v1317
      %v1545 = vsel %vm1507, %v1432, %v1319
      %v1547 = vsel %vm1507, %v1434, %v1321
      %v1549 = vsel %vm1507, %v1436, %v1323
      %v1551 = vsel %vm1507, %v1438, %v1325
      %v1553 = vsel %vm1507, %v1440, %v1327
      %v1555 = vsel %vm1507, %v1442, %v1329
      %v1557 = vsel %vm1507, %v1444, %v1331
      %v1559 = vsel %vm1507, %v1446, %v1333
      %v1561 = vsel %vm1507, %v1448, %v1335
      %v1563 = vsel %vm1507, %v1450, %v1337
      %v1565 = vsel %vm1507, %v1452, %v1339
      %v1567 = vsel %vm1507, %v1454, %v1341
      %v1569 = vsel %vm1507, %v1456, %v1343
      %v1571 = vsel %vm1507, %v1458, %v1345
      %v1573 = vsel %vm1507, %v1460, %v1347
      %v1575 = vsel %vm1507, %v1462, %v1349
      %v1577 = vsel %vm1507, %v1464, %v1351
      %v1579 = vsel %vm1507, %v1466, %v1353
      %v1581 = vsel %vm1507, %v1468, %v1355
      %v1583 = vsel %vm1507, %v1470, %v1357
      %v1585 = vsel %vm1507, %v1472, %v1359
      %v1587 = vsel %vm1507, %v1474, %v1361
      %v1589 = vsel %vm1507, %v1476, %v1363
      %v1591 = vsel %vm1507, %v1478, %v1365
      %v1593 = vsel %vm1507, %v1480, %v1367
      %v1595 = vsel %vm1507, %v1482, %v1369
      %v1597 = vsel %vm1507, %v1484, %v1371
      %v1599 = vsel %vm1507, %v1486, %v1373
      %v1601 = vsel %vm1507, %v1488, %v1375
      %v1603 = vsel %vm1507, %v1490, %v1377
      %v1605 = vsel %vm1507, %v1492, %v1379
      %v1607 = vsel %vm1507, %v1494, %v1381
      %v1609 = vsel %vm1507, %v1496, %v1383
      %v1611 = vsel %vm1507, %v1498, %v1385
      %v1613 = vsel %vm1507, %v1500, %v1387
      %v1615 = vsel %vm1507, %v1502, %v1389
      %v1617 = vsel %vm1507, %v1504, %v1391
      %v1619 = vsel %vm1507, %v1506, %v1393
      %v1620 = vld [vmem:[%s1] sm:$0xf]
      %v1621 = vld [vmem:[%s1 + $0x4] sm:$0xf]
      %v1622 = vld [vmem:[%s1 + $0x8] sm:$0xf]
      %v1623 = vld [vmem:[%s1 + $0xc] sm:$0xf]
      %v1624 = vld [vmem:[%s1 + $0x10] sm:$0xf]
      %v1625 = vld [vmem:[%s1 + $0x14] sm:$0xf]
      %v1626 = vld [vmem:[%s1 + $0x18] sm:$0xf]
      %v1627 = vld [vmem:[%s1 + $0x1c] sm:$0xf]
      %v1628 = vld [vmem:[%s1 + $0x20] sm:$0xf]
      %v1629 = vld [vmem:[%s1 + $0x24] sm:$0xf]
      %v1630 = vld [vmem:[%s1 + $0x28] sm:$0xf]
      %v1631 = vld [vmem:[%s1 + $0x2c] sm:$0xf]
      %s1632 = sadd.s32 %s202, 24
      %s1633 = sshra.s32 %s1632, 3
      %s1634 = sand.u32 %s1632, 7
      %s1635 = smul.addr %s1633, 4
      %s1636 = scalar_lea.vmem %s0, %s1635
      %v1637 = vld [vmem:[%s1636] sm:$0xf]
      %v1638 = vld [vmem:[%s1636 + $0x4] sm:$0xf]
      %v1639 = vld [vmem:[%s1636 + $0x8] sm:$0xf]
      %v1640 = vld [vmem:[%s1636 + $0xc] sm:$0xf]
      %v1641 = vld [vmem:[%s1636 + $0x10] sm:$0xf]
      %v1642 = vld [vmem:[%s1636 + $0x14] sm:$0xf]
      %v1643 = vld [vmem:[%s1636 + $0x18] sm:$0xf]
      %v1644 = vld [vmem:[%s1636 + $0x1c] sm:$0xf]
      %v1645 = vld [vmem:[%s1636 + $0x20] sm:$0xf]
      %v1646 = vld [vmem:[%s1636 + $0x24] sm:$0xf]
      %v1647 = vld [vmem:[%s1636 + $0x28] sm:$0xf]
      %v1648 = vld [vmem:[%s1636 + $0x2c] sm:$0xf]
      %v1649 = vld [vmem:[%s1636 + $0x30] sm:$0xf]
      %v1650 = vld [vmem:[%s1636 + $0x34] sm:$0xf]
      %v1651 = vld [vmem:[%s1636 + $0x38] sm:$0xf]
      %v1652 = vld [vmem:[%s1636 + $0x3c] sm:$0xf]
      %v1653 = vld [vmem:[%s1636 + $0x40] sm:$0xf]
      %v1654 = vld [vmem:[%s1636 + $0x44] sm:$0xf]
      %v1655 = vld [vmem:[%s1636 + $0x48] sm:$0xf]
      %v1656 = vld [vmem:[%s1636 + $0x4c] sm:$0xf]
      %v1657 = vld [vmem:[%s1636 + $0x50] sm:$0xf]
      %v1658 = vld [vmem:[%s1636 + $0x54] sm:$0xf]
      %v1659 = vld [vmem:[%s1636 + $0x58] sm:$0xf]
      %v1660 = vld [vmem:[%s1636 + $0x5c] sm:$0xf]
      %v1661 = vld [vmem:[%s1636 + $0x60] sm:$0xf]
      %v1662 = vld [vmem:[%s1636 + $0x64] sm:$0xf]
      %v1663 = vld [vmem:[%s1636 + $0x68] sm:$0xf]
      %v1664 = vld [vmem:[%s1636 + $0x6c] sm:$0xf]
      %v1665 = vld [vmem:[%s1636 + $0x70] sm:$0xf]
      %v1666 = vld [vmem:[%s1636 + $0x74] sm:$0xf]
      %v1667 = vld [vmem:[%s1636 + $0x78] sm:$0xf]
      %v1668 = vld [vmem:[%s1636 + $0x7c] sm:$0xf]
      %v1669 = vld [vmem:[%s1636 + $0x80] sm:$0xf]
      %v1670 = vld [vmem:[%s1636 + $0x84] sm:$0xf]
      %v1671 = vld [vmem:[%s1636 + $0x88] sm:$0xf]
      %v1672 = vld [vmem:[%s1636 + $0x8c] sm:$0xf]
      %v1673 = vld [vmem:[%s1636 + $0x90] sm:$0xf]
      %v1674 = vld [vmem:[%s1636 + $0x94] sm:$0xf]
      %v1675 = vld [vmem:[%s1636 + $0x98] sm:$0xf]
      %v1676 = vld [vmem:[%s1636 + $0x9c] sm:$0xf]
      %v1677 = vld [vmem:[%s1636 + $0xa0] sm:$0xf]
      %v1678 = vld [vmem:[%s1636 + $0xa4] sm:$0xf]
      %v1679 = vld [vmem:[%s1636 + $0xa8] sm:$0xf]
      %v1680 = vld [vmem:[%s1636 + $0xac] sm:$0xf]
      %v1681 = vld [vmem:[%s1636 + $0xb0] sm:$0xf]
      %v1682 = vld [vmem:[%s1636 + $0xb4] sm:$0xf]
      %v1683 = vld [vmem:[%s1636 + $0xb8] sm:$0xf]
      %v1684 = vld [vmem:[%s1636 + $0xbc] sm:$0xf]
      %v1685 = vld [vmem:[%s1636 + $0xc0] sm:$0xf]
      %v1686 = vld [vmem:[%s1636 + $0xc4] sm:$0xf]
      %v1687 = vld [vmem:[%s1636 + $0xc8] sm:$0xf]
      %v1688 = vld [vmem:[%s1636 + $0xcc] sm:$0xf]
      %v1689 = vld [vmem:[%s1636 + $0xd0] sm:$0xf]
      %v1690 = vld [vmem:[%s1636 + $0xd4] sm:$0xf]
      %v1691 = vld [vmem:[%s1636 + $0xd8] sm:$0xf]
      %v1692 = vld [vmem:[%s1636 + $0xdc] sm:$0xf]
      %v1693 = vld [vmem:[%s1636 + $0xe0] sm:$0xf]
      %v1694 = vld [vmem:[%s1636 + $0xe4] sm:$0xf]
      %v1695 = vld [vmem:[%s1636 + $0xe8] sm:$0xf]
      %v1696 = vld [vmem:[%s1636 + $0xec] sm:$0xf]
      %v1697 = vld [vmem:[%s1636 + $0xf0] sm:$0xf]
      %v1698 = vld [vmem:[%s1636 + $0xf4] sm:$0xf]
      %v1699 = vld [vmem:[%s1636 + $0xf8] sm:$0xf]
      %v1700 = vld [vmem:[%s1636 + $0xfc] sm:$0xf]
      %v1701 = vld [vmem:[%s1636 + $0x100] sm:$0xf]
      %v1702 = vld [vmem:[%s1636 + $0x104] sm:$0xf]
      %v1703 = vld [vmem:[%s1636 + $0x108] sm:$0xf]
      %v1704 = vld [vmem:[%s1636 + $0x10c] sm:$0xf]
      %v1705 = vld [vmem:[%s1636 + $0x110] sm:$0xf]
      %v1706 = vld [vmem:[%s1636 + $0x114] sm:$0xf]
      %v1707 = vld [vmem:[%s1636 + $0x118] sm:$0xf]
      %v1708 = vld [vmem:[%s1636 + $0x11c] sm:$0xf]
      %v1709 = vld [vmem:[%s1636 + $0x120] sm:$0xf]
      %v1710 = vld [vmem:[%s1636 + $0x124] sm:$0xf]
      %v1711 = vld [vmem:[%s1636 + $0x128] sm:$0xf]
      %v1712 = vld [vmem:[%s1636 + $0x12c] sm:$0xf]
      %v1713 = vld [vmem:[%s1636 + $0x130] sm:$0xf]
      %v1714 = vld [vmem:[%s1636 + $0x134] sm:$0xf]
      %v1715 = vld [vmem:[%s1636 + $0x138] sm:$0xf]
      %v1716 = vld [vmem:[%s1636 + $0x13c] sm:$0xf]
      %v1717 = vld [vmem:[%s1636 + $0x140] sm:$0xf]
      %v1718 = vld [vmem:[%s1636 + $0x144] sm:$0xf]
      %v1719 = vld [vmem:[%s1636 + $0x148] sm:$0xf]
      %v1720 = vld [vmem:[%s1636 + $0x14c] sm:$0xf]
      %v1721 = vld [vmem:[%s1636 + $0x150] sm:$0xf]
      %v1722 = vld [vmem:[%s1636 + $0x154] sm:$0xf]
      %v1723 = vld [vmem:[%s1636 + $0x158] sm:$0xf]
      %v1724 = vld [vmem:[%s1636 + $0x15c] sm:$0xf]
      %v1725 = vld [vmem:[%s1636 + $0x160] sm:$0xf]
      %v1726 = vld [vmem:[%s1636 + $0x164] sm:$0xf]
      %v1727 = vld [vmem:[%s1636 + $0x168] sm:$0xf]
      %v1728 = vld [vmem:[%s1636 + $0x16c] sm:$0xf]
      %v1729 = vld [vmem:[%s1636 + $0x170] sm:$0xf]
      %v1730 = vld [vmem:[%s1636 + $0x174] sm:$0xf]
      %v1731 = vld [vmem:[%s1636 + $0x178] sm:$0xf]
      %v1732 = vld [vmem:[%s1636 + $0x17c] sm:$0xf]
      %v1733 = vld [vmem:[%s1636 + $0x180] sm:$0xf]
      %v1734 = vld [vmem:[%s1636 + $0x184] sm:$0xf]
      %v1735 = vld [vmem:[%s1636 + $0x188] sm:$0xf]
      %v1736 = vld [vmem:[%s1636 + $0x18c] sm:$0xf]
      %v1737 = vld [vmem:[%s1636 + $0x190] sm:$0xf]
      %v1738 = vld [vmem:[%s1636 + $0x194] sm:$0xf]
      %v1739 = vld [vmem:[%s1636 + $0x198] sm:$0xf]
      %v1740 = vld [vmem:[%s1636 + $0x19c] sm:$0xf]
      %v1741 = vld [vmem:[%s1636 + $0x1a0] sm:$0xf]
      %v1742 = vld [vmem:[%s1636 + $0x1a4] sm:$0xf]
      %v1743 = vld [vmem:[%s1636 + $0x1a8] sm:$0xf]
      %v1744 = vld [vmem:[%s1636 + $0x1ac] sm:$0xf]
      %v1745 = vld [vmem:[%s1636 + $0x1b0] sm:$0xf]
      %v1746 = vld [vmem:[%s1636 + $0x1b4] sm:$0xf]
      %v1747 = vld [vmem:[%s1636 + $0x1b8] sm:$0xf]
      %v1748 = vld [vmem:[%s1636 + $0x1bc] sm:$0xf]
      %v1749 = vld [vmem:[%s1636 + $0x1c0] sm:$0xf]
      %v1862 = vunpack.c.l.b16 %v1637
      %v1863 = vunpack.c.l.b16 %v1638
      %v1864 = vunpack.c.l.b16 %v1639
      %v1865 = vunpack.c.l.b16 %v1640
      %v1866 = vunpack.c.l.b16 %v1641
      %v1867 = vunpack.c.l.b16 %v1642
      %v1868 = vunpack.c.l.b16 %v1643
      %v1869 = vunpack.c.l.b16 %v1644
      %v1870 = vunpack.c.l.b16 %v1645
      %v1871 = vunpack.c.l.b16 %v1646
      %v1872 = vunpack.c.l.b16 %v1647
      %v1873 = vunpack.c.l.b16 %v1648
      %v1874 = vunpack.c.l.b16 %v1649
      %v1875 = vunpack.c.l.b16 %v1650
      %v1876 = vunpack.c.l.b16 %v1651
      %v1877 = vunpack.c.l.b16 %v1652
      %v1878 = vunpack.c.l.b16 %v1653
      %v1879 = vunpack.c.l.b16 %v1654
      %v1880 = vunpack.c.l.b16 %v1655
      %v1881 = vunpack.c.l.b16 %v1656
      %v1882 = vunpack.c.l.b16 %v1657
      %v1883 = vunpack.c.l.b16 %v1658
      %v1884 = vunpack.c.l.b16 %v1659
      %v1885 = vunpack.c.l.b16 %v1660
      %v1886 = vunpack.c.l.b16 %v1661
      %v1887 = vunpack.c.l.b16 %v1662
      %v1888 = vunpack.c.l.b16 %v1663
      %v1889 = vunpack.c.l.b16 %v1664
      %v1890 = vunpack.c.l.b16 %v1665
      %v1891 = vunpack.c.l.b16 %v1666
      %v1892 = vunpack.c.l.b16 %v1667
      %v1893 = vunpack.c.l.b16 %v1668
      %v1894 = vunpack.c.l.b16 %v1669
      %v1895 = vunpack.c.l.b16 %v1670
      %v1896 = vunpack.c.l.b16 %v1671
      %v1897 = vunpack.c.l.b16 %v1672
      %v1898 = vunpack.c.l.b16 %v1673
      %v1899 = vunpack.c.l.b16 %v1674
      %v1900 = vunpack.c.l.b16 %v1675
      %v1901 = vunpack.c.l.b16 %v1676
      %v1902 = vunpack.c.l.b16 %v1677
      %v1903 = vunpack.c.l.b16 %v1678
      %v1904 = vunpack.c.l.b16 %v1679
      %v1905 = vunpack.c.l.b16 %v1680
      %v1906 = vunpack.c.l.b16 %v1681
      %v1907 = vunpack.c.l.b16 %v1682
      %v1908 = vunpack.c.l.b16 %v1683
      %v1909 = vunpack.c.l.b16 %v1684
      %v1910 = vunpack.c.l.b16 %v1685
      %v1911 = vunpack.c.l.b16 %v1686
      %v1912 = vunpack.c.l.b16 %v1687
      %v1913 = vunpack.c.l.b16 %v1688
      %v1914 = vunpack.c.l.b16 %v1689
      %v1915 = vunpack.c.l.b16 %v1690
      %v1916 = vunpack.c.l.b16 %v1691
      %v1917 = vunpack.c.l.b16 %v1692
      %v1918 = vunpack.c.l.b16 %v1693
      %v1919 = vunpack.c.l.b16 %v1694
      %v1920 = vunpack.c.l.b16 %v1695
      %v1921 = vunpack.c.l.b16 %v1696
      %v1922 = vunpack.c.l.b16 %v1697
      %v1923 = vunpack.c.l.b16 %v1698
      %v1924 = vunpack.c.l.b16 %v1699
      %v1925 = vunpack.c.l.b16 %v1700
      %v1926 = vunpack.c.l.b16 %v1701
      %v1927 = vunpack.c.l.b16 %v1702
      %v1928 = vunpack.c.l.b16 %v1703
      %v1929 = vunpack.c.l.b16 %v1704
      %v1930 = vunpack.c.l.b16 %v1705
      %v1931 = vunpack.c.l.b16 %v1706
      %v1932 = vunpack.c.l.b16 %v1707
      %v1933 = vunpack.c.l.b16 %v1708
      %v1934 = vunpack.c.l.b16 %v1709
      %v1935 = vunpack.c.l.b16 %v1710
      %v1936 = vunpack.c.l.b16 %v1711
      %v1937 = vunpack.c.l.b16 %v1712
      %v1938 = vunpack.c.l.b16 %v1713
      %v1939 = vunpack.c.l.b16 %v1714
      %v1940 = vunpack.c.l.b16 %v1715
      %v1941 = vunpack.c.l.b16 %v1716
      %v1942 = vunpack.c.l.b16 %v1717
      %v1943 = vunpack.c.l.b16 %v1718
      %v1944 = vunpack.c.l.b16 %v1719
      %v1945 = vunpack.c.l.b16 %v1720
      %v1946 = vunpack.c.l.b16 %v1721
      %v1947 = vunpack.c.l.b16 %v1722
      %v1948 = vunpack.c.l.b16 %v1723
      %v1949 = vunpack.c.l.b16 %v1724
      %v1950 = vunpack.c.l.b16 %v1725
      %v1951 = vunpack.c.l.b16 %v1726
      %v1952 = vunpack.c.l.b16 %v1727
      %v1953 = vunpack.c.l.b16 %v1728
      %v1954 = vunpack.c.l.b16 %v1729
      %v1955 = vunpack.c.l.b16 %v1730
      %v1956 = vunpack.c.l.b16 %v1731
      %v1957 = vunpack.c.l.b16 %v1732
      %v1958 = vunpack.c.l.b16 %v1733
      %v1959 = vunpack.c.l.b16 %v1734
      %v1960 = vunpack.c.l.b16 %v1735
      %v1961 = vunpack.c.l.b16 %v1736
      %v1962 = vunpack.c.l.b16 %v1737
      %v1963 = vunpack.c.l.b16 %v1738
      %v1964 = vunpack.c.l.b16 %v1739
      %v1965 = vunpack.c.l.b16 %v1740
      %v1966 = vunpack.c.l.b16 %v1741
      %v1967 = vunpack.c.l.b16 %v1742
      %v1968 = vunpack.c.l.b16 %v1743
      %v1969 = vunpack.c.l.b16 %v1744
      %v1970 = vunpack.c.l.b16 %v1745
      %v1971 = vunpack.c.l.b16 %v1746
      %v1972 = vunpack.c.l.b16 %v1747
      %v1973 = vunpack.c.l.b16 %v1748
      %v1974 = vpack.c.b16 %v1863, %v1862
      %v1975 = vpack.c.b16 %v1865, %v1864
      %v1976 = vpack.c.b16 %v1867, %v1866
      %v1977 = vpack.c.b16 %v1869, %v1868
      %v1978 = vpack.c.b16 %v1871, %v1870
      %v1979 = vpack.c.b16 %v1873, %v1872
      %v1980 = vpack.c.b16 %v1875, %v1874
      %v1981 = vpack.c.b16 %v1877, %v1876
      %v1982 = vpack.c.b16 %v1879, %v1878
      %v1983 = vpack.c.b16 %v1881, %v1880
      %v1984 = vpack.c.b16 %v1883, %v1882
      %v1985 = vpack.c.b16 %v1885, %v1884
      %v1986 = vpack.c.b16 %v1887, %v1886
      %v1987 = vpack.c.b16 %v1889, %v1888
      %v1988 = vpack.c.b16 %v1891, %v1890
      %v1989 = vpack.c.b16 %v1893, %v1892
      %v1990 = vpack.c.b16 %v1895, %v1894
      %v1991 = vpack.c.b16 %v1897, %v1896
      %v1992 = vpack.c.b16 %v1899, %v1898
      %v1993 = vpack.c.b16 %v1901, %v1900
      %v1994 = vpack.c.b16 %v1903, %v1902
      %v1995 = vpack.c.b16 %v1905, %v1904
      %v1996 = vpack.c.b16 %v1907, %v1906
      %v1997 = vpack.c.b16 %v1909, %v1908
      %v1998 = vpack.c.b16 %v1911, %v1910
      %v1999 = vpack.c.b16 %v1913, %v1912
      %v2000 = vpack.c.b16 %v1915, %v1914
      %v2001 = vpack.c.b16 %v1917, %v1916
      %v2002 = vpack.c.b16 %v1919, %v1918
      %v2003 = vpack.c.b16 %v1921, %v1920
      %v2004 = vpack.c.b16 %v1923, %v1922
      %v2005 = vpack.c.b16 %v1925, %v1924
      %v2006 = vpack.c.b16 %v1927, %v1926
      %v2007 = vpack.c.b16 %v1929, %v1928
      %v2008 = vpack.c.b16 %v1931, %v1930
      %v2009 = vpack.c.b16 %v1933, %v1932
      %v2010 = vpack.c.b16 %v1935, %v1934
      %v2011 = vpack.c.b16 %v1937, %v1936
      %v2012 = vpack.c.b16 %v1939, %v1938
      %v2013 = vpack.c.b16 %v1941, %v1940
      %v2014 = vpack.c.b16 %v1943, %v1942
      %v2015 = vpack.c.b16 %v1945, %v1944
      %v2016 = vpack.c.b16 %v1947, %v1946
      %v2017 = vpack.c.b16 %v1949, %v1948
      %v2018 = vpack.c.b16 %v1951, %v1950
      %v2019 = vpack.c.b16 %v1953, %v1952
      %v2020 = vpack.c.b16 %v1955, %v1954
      %v2021 = vpack.c.b16 %v1957, %v1956
      %v2022 = vpack.c.b16 %v1959, %v1958
      %v2023 = vpack.c.b16 %v1961, %v1960
      %v2024 = vpack.c.b16 %v1963, %v1962
      %v2025 = vpack.c.b16 %v1965, %v1964
      %v2026 = vpack.c.b16 %v1967, %v1966
      %v2027 = vpack.c.b16 %v1969, %v1968
      %v2028 = vpack.c.b16 %v1971, %v1970
      %v2029 = vpack.c.b16 %v1973, %v1972
      %v2031 = vunpack.c.l.b16 %v1749
      %v2032 = vpack.c.b16 %v2031, %v2031
      %v2034 = vshrl.u32 %v1974, 16
      %v2036 = vshll.u32 %v1974, 16
      %v2038 = vrot.slane %v2036, 1
      %v2039 = vor.u32 %v2034, %v2038
      %v2041 = vshll.u32 %v1975, 16
      %v2043 = vrot.slane %v2041, 1
      %v2044 = vsel %vm603, %v2039, %v2043
      %v2045 = vshrl.u32 %v1975, 16
      %v2047 = vor.u32 %v2045, %v2043
      %v2049 = vshll.u32 %v1976, 16
      %v2051 = vrot.slane %v2049, 1
      %v2052 = vsel %vm603, %v2047, %v2051
      %v2053 = vshrl.u32 %v1976, 16
      %v2055 = vor.u32 %v2053, %v2051
      %v2057 = vshll.u32 %v1977, 16
      %v2059 = vrot.slane %v2057, 1
      %v2060 = vsel %vm603, %v2055, %v2059
      %v2061 = vshrl.u32 %v1977, 16
      %v2063 = vor.u32 %v2061, %v2059
      %v2065 = vshll.u32 %v1978, 16
      %v2067 = vrot.slane %v2065, 1
      %v2068 = vsel %vm603, %v2063, %v2067
      %v2069 = vshrl.u32 %v1978, 16
      %v2071 = vor.u32 %v2069, %v2067
      %v2073 = vshll.u32 %v1979, 16
      %v2075 = vrot.slane %v2073, 1
      %v2076 = vsel %vm603, %v2071, %v2075
      %v2077 = vshrl.u32 %v1979, 16
      %v2079 = vor.u32 %v2077, %v2075
      %v2081 = vshll.u32 %v1980, 16
      %v2083 = vrot.slane %v2081, 1
      %v2084 = vsel %vm603, %v2079, %v2083
      %v2085 = vshrl.u32 %v1980, 16
      %v2087 = vor.u32 %v2085, %v2083
      %v2089 = vshll.u32 %v1981, 16
      %v2091 = vrot.slane %v2089, 1
      %v2092 = vsel %vm603, %v2087, %v2091
      %v2093 = vshrl.u32 %v1981, 16
      %v2095 = vor.u32 %v2093, %v2091
      %v2097 = vshll.u32 %v1982, 16
      %v2099 = vrot.slane %v2097, 1
      %v2100 = vsel %vm603, %v2095, %v2099
      %v2101 = vshrl.u32 %v1982, 16
      %v2103 = vor.u32 %v2101, %v2099
      %v2105 = vshll.u32 %v1983, 16
      %v2107 = vrot.slane %v2105, 1
      %v2108 = vsel %vm603, %v2103, %v2107
      %v2109 = vshrl.u32 %v1983, 16
      %v2111 = vor.u32 %v2109, %v2107
      %v2113 = vshll.u32 %v1984, 16
      %v2115 = vrot.slane %v2113, 1
      %v2116 = vsel %vm603, %v2111, %v2115
      %v2117 = vshrl.u32 %v1984, 16
      %v2119 = vor.u32 %v2117, %v2115
      %v2121 = vshll.u32 %v1985, 16
      %v2123 = vrot.slane %v2121, 1
      %v2124 = vsel %vm603, %v2119, %v2123
      %v2125 = vshrl.u32 %v1985, 16
      %v2127 = vor.u32 %v2125, %v2123
      %v2129 = vshll.u32 %v1986, 16
      %v2131 = vrot.slane %v2129, 1
      %v2132 = vsel %vm603, %v2127, %v2131
      %v2133 = vshrl.u32 %v1986, 16
      %v2135 = vor.u32 %v2133, %v2131
      %v2137 = vshll.u32 %v1987, 16
      %v2139 = vrot.slane %v2137, 1
      %v2140 = vsel %vm603, %v2135, %v2139
      %v2141 = vshrl.u32 %v1987, 16
      %v2143 = vor.u32 %v2141, %v2139
      %v2145 = vshll.u32 %v1988, 16
      %v2147 = vrot.slane %v2145, 1
      %v2148 = vsel %vm603, %v2143, %v2147
      %v2149 = vshrl.u32 %v1988, 16
      %v2151 = vor.u32 %v2149, %v2147
      %v2153 = vshll.u32 %v1989, 16
      %v2155 = vrot.slane %v2153, 1
      %v2156 = vsel %vm603, %v2151, %v2155
      %v2157 = vshrl.u32 %v1989, 16
      %v2159 = vor.u32 %v2157, %v2155
      %v2161 = vshll.u32 %v1990, 16
      %v2163 = vrot.slane %v2161, 1
      %v2164 = vsel %vm603, %v2159, %v2163
      %v2165 = vshrl.u32 %v1990, 16
      %v2167 = vor.u32 %v2165, %v2163
      %v2169 = vshll.u32 %v1991, 16
      %v2171 = vrot.slane %v2169, 1
      %v2172 = vsel %vm603, %v2167, %v2171
      %v2173 = vshrl.u32 %v1991, 16
      %v2175 = vor.u32 %v2173, %v2171
      %v2177 = vshll.u32 %v1992, 16
      %v2179 = vrot.slane %v2177, 1
      %v2180 = vsel %vm603, %v2175, %v2179
      %v2181 = vshrl.u32 %v1992, 16
      %v2183 = vor.u32 %v2181, %v2179
      %v2185 = vshll.u32 %v1993, 16
      %v2187 = vrot.slane %v2185, 1
      %v2188 = vsel %vm603, %v2183, %v2187
      %v2189 = vshrl.u32 %v1993, 16
      %v2191 = vor.u32 %v2189, %v2187
      %v2193 = vshll.u32 %v1994, 16
      %v2195 = vrot.slane %v2193, 1
      %v2196 = vsel %vm603, %v2191, %v2195
      %v2197 = vshrl.u32 %v1994, 16
      %v2199 = vor.u32 %v2197, %v2195
      %v2201 = vshll.u32 %v1995, 16
      %v2203 = vrot.slane %v2201, 1
      %v2204 = vsel %vm603, %v2199, %v2203
      %v2205 = vshrl.u32 %v1995, 16
      %v2207 = vor.u32 %v2205, %v2203
      %v2209 = vshll.u32 %v1996, 16
      %v2211 = vrot.slane %v2209, 1
      %v2212 = vsel %vm603, %v2207, %v2211
      %v2213 = vshrl.u32 %v1996, 16
      %v2215 = vor.u32 %v2213, %v2211
      %v2217 = vshll.u32 %v1997, 16
      %v2219 = vrot.slane %v2217, 1
      %v2220 = vsel %vm603, %v2215, %v2219
      %v2221 = vshrl.u32 %v1997, 16
      %v2223 = vor.u32 %v2221, %v2219
      %v2225 = vshll.u32 %v1998, 16
      %v2227 = vrot.slane %v2225, 1
      %v2228 = vsel %vm603, %v2223, %v2227
      %v2229 = vshrl.u32 %v1998, 16
      %v2231 = vor.u32 %v2229, %v2227
      %v2233 = vshll.u32 %v1999, 16
      %v2235 = vrot.slane %v2233, 1
      %v2236 = vsel %vm603, %v2231, %v2235
      %v2237 = vshrl.u32 %v1999, 16
      %v2239 = vor.u32 %v2237, %v2235
      %v2241 = vshll.u32 %v2000, 16
      %v2243 = vrot.slane %v2241, 1
      %v2244 = vsel %vm603, %v2239, %v2243
      %v2245 = vshrl.u32 %v2000, 16
      %v2247 = vor.u32 %v2245, %v2243
      %v2249 = vshll.u32 %v2001, 16
      %v2251 = vrot.slane %v2249, 1
      %v2252 = vsel %vm603, %v2247, %v2251
      %v2253 = vshrl.u32 %v2001, 16
      %v2255 = vor.u32 %v2253, %v2251
      %v2257 = vshll.u32 %v2002, 16
      %v2259 = vrot.slane %v2257, 1
      %v2260 = vsel %vm603, %v2255, %v2259
      %v2261 = vshrl.u32 %v2002, 16
      %v2263 = vor.u32 %v2261, %v2259
      %v2265 = vshll.u32 %v2003, 16
      %v2267 = vrot.slane %v2265, 1
      %v2268 = vsel %vm603, %v2263, %v2267
      %v2269 = vshrl.u32 %v2003, 16
      %v2271 = vor.u32 %v2269, %v2267
      %v2273 = vshll.u32 %v2004, 16
      %v2275 = vrot.slane %v2273, 1
      %v2276 = vsel %vm603, %v2271, %v2275
      %v2277 = vshrl.u32 %v2004, 16
      %v2279 = vor.u32 %v2277, %v2275
      %v2281 = vshll.u32 %v2005, 16
      %v2283 = vrot.slane %v2281, 1
      %v2284 = vsel %vm603, %v2279, %v2283
      %v2285 = vshrl.u32 %v2005, 16
      %v2287 = vor.u32 %v2285, %v2283
      %v2289 = vshll.u32 %v2006, 16
      %v2291 = vrot.slane %v2289, 1
      %v2292 = vsel %vm603, %v2287, %v2291
      %v2293 = vshrl.u32 %v2006, 16
      %v2295 = vor.u32 %v2293, %v2291
      %v2297 = vshll.u32 %v2007, 16
      %v2299 = vrot.slane %v2297, 1
      %v2300 = vsel %vm603, %v2295, %v2299
      %v2301 = vshrl.u32 %v2007, 16
      %v2303 = vor.u32 %v2301, %v2299
      %v2305 = vshll.u32 %v2008, 16
      %v2307 = vrot.slane %v2305, 1
      %v2308 = vsel %vm603, %v2303, %v2307
      %v2309 = vshrl.u32 %v2008, 16
      %v2311 = vor.u32 %v2309, %v2307
      %v2313 = vshll.u32 %v2009, 16
      %v2315 = vrot.slane %v2313, 1
      %v2316 = vsel %vm603, %v2311, %v2315
      %v2317 = vshrl.u32 %v2009, 16
      %v2319 = vor.u32 %v2317, %v2315
      %v2321 = vshll.u32 %v2010, 16
      %v2323 = vrot.slane %v2321, 1
      %v2324 = vsel %vm603, %v2319, %v2323
      %v2325 = vshrl.u32 %v2010, 16
      %v2327 = vor.u32 %v2325, %v2323
      %v2329 = vshll.u32 %v2011, 16
      %v2331 = vrot.slane %v2329, 1
      %v2332 = vsel %vm603, %v2327, %v2331
      %v2333 = vshrl.u32 %v2011, 16
      %v2335 = vor.u32 %v2333, %v2331
      %v2337 = vshll.u32 %v2012, 16
      %v2339 = vrot.slane %v2337, 1
      %v2340 = vsel %vm603, %v2335, %v2339
      %v2341 = vshrl.u32 %v2012, 16
      %v2343 = vor.u32 %v2341, %v2339
      %v2345 = vshll.u32 %v2013, 16
      %v2347 = vrot.slane %v2345, 1
      %v2348 = vsel %vm603, %v2343, %v2347
      %v2349 = vshrl.u32 %v2013, 16
      %v2351 = vor.u32 %v2349, %v2347
      %v2353 = vshll.u32 %v2014, 16
      %v2355 = vrot.slane %v2353, 1
      %v2356 = vsel %vm603, %v2351, %v2355
      %v2357 = vshrl.u32 %v2014, 16
      %v2359 = vor.u32 %v2357, %v2355
      %v2361 = vshll.u32 %v2015, 16
      %v2363 = vrot.slane %v2361, 1
      %v2364 = vsel %vm603, %v2359, %v2363
      %v2365 = vshrl.u32 %v2015, 16
      %v2367 = vor.u32 %v2365, %v2363
      %v2369 = vshll.u32 %v2016, 16
      %v2371 = vrot.slane %v2369, 1
      %v2372 = vsel %vm603, %v2367, %v2371
      %v2373 = vshrl.u32 %v2016, 16
      %v2375 = vor.u32 %v2373, %v2371
      %v2377 = vshll.u32 %v2017, 16
      %v2379 = vrot.slane %v2377, 1
      %v2380 = vsel %vm603, %v2375, %v2379
      %v2381 = vshrl.u32 %v2017, 16
      %v2383 = vor.u32 %v2381, %v2379
      %v2385 = vshll.u32 %v2018, 16
      %v2387 = vrot.slane %v2385, 1
      %v2388 = vsel %vm603, %v2383, %v2387
      %v2389 = vshrl.u32 %v2018, 16
      %v2391 = vor.u32 %v2389, %v2387
      %v2393 = vshll.u32 %v2019, 16
      %v2395 = vrot.slane %v2393, 1
      %v2396 = vsel %vm603, %v2391, %v2395
      %v2397 = vshrl.u32 %v2019, 16
      %v2399 = vor.u32 %v2397, %v2395
      %v2401 = vshll.u32 %v2020, 16
      %v2403 = vrot.slane %v2401, 1
      %v2404 = vsel %vm603, %v2399, %v2403
      %v2405 = vshrl.u32 %v2020, 16
      %v2407 = vor.u32 %v2405, %v2403
      %v2409 = vshll.u32 %v2021, 16
      %v2411 = vrot.slane %v2409, 1
      %v2412 = vsel %vm603, %v2407, %v2411
      %v2413 = vshrl.u32 %v2021, 16
      %v2415 = vor.u32 %v2413, %v2411
      %v2417 = vshll.u32 %v2022, 16
      %v2419 = vrot.slane %v2417, 1
      %v2420 = vsel %vm603, %v2415, %v2419
      %v2421 = vshrl.u32 %v2022, 16
      %v2423 = vor.u32 %v2421, %v2419
      %v2425 = vshll.u32 %v2023, 16
      %v2427 = vrot.slane %v2425, 1
      %v2428 = vsel %vm603, %v2423, %v2427
      %v2429 = vshrl.u32 %v2023, 16
      %v2431 = vor.u32 %v2429, %v2427
      %v2433 = vshll.u32 %v2024, 16
      %v2435 = vrot.slane %v2433, 1
      %v2436 = vsel %vm603, %v2431, %v2435
      %v2437 = vshrl.u32 %v2024, 16
      %v2439 = vor.u32 %v2437, %v2435
      %v2441 = vshll.u32 %v2025, 16
      %v2443 = vrot.slane %v2441, 1
      %v2444 = vsel %vm603, %v2439, %v2443
      %v2445 = vshrl.u32 %v2025, 16
      %v2447 = vor.u32 %v2445, %v2443
      %v2449 = vshll.u32 %v2026, 16
      %v2451 = vrot.slane %v2449, 1
      %v2452 = vsel %vm603, %v2447, %v2451
      %v2453 = vshrl.u32 %v2026, 16
      %v2455 = vor.u32 %v2453, %v2451
      %v2457 = vshll.u32 %v2027, 16
      %v2459 = vrot.slane %v2457, 1
      %v2460 = vsel %vm603, %v2455, %v2459
      %v2461 = vshrl.u32 %v2027, 16
      %v2463 = vor.u32 %v2461, %v2459
      %v2465 = vshll.u32 %v2028, 16
      %v2467 = vrot.slane %v2465, 1
      %v2468 = vsel %vm603, %v2463, %v2467
      %v2469 = vshrl.u32 %v2028, 16
      %v2471 = vor.u32 %v2469, %v2467
      %v2473 = vshll.u32 %v2029, 16
      %v2475 = vrot.slane %v2473, 1
      %v2476 = vsel %vm603, %v2471, %v2475
      %v2477 = vshrl.u32 %v2029, 16
      %v2479 = vor.u32 %v2477, %v2475
      %v2481 = vshll.u32 %v2032, 16
      %v2483 = vrot.slane %v2481, 1
      %v2484 = vsel %vm603, %v2479, %v2483
      %2485 = vrot.lane.b32.xlu0 %v2044, 32
      %v2486 = vpop.permute.xlu0 %2485
      %2487 = vrot.lane.b32.xlu0 %v2052, 32
      %v2488 = vpop.permute.xlu0 %2487
      %2489 = vrot.lane.b32.xlu0 %v2060, 32
      %v2490 = vpop.permute.xlu0 %2489
      %2491 = vrot.lane.b32.xlu0 %v2068, 32
      %v2492 = vpop.permute.xlu0 %2491
      %2493 = vrot.lane.b32.xlu0 %v2076, 32
      %v2494 = vpop.permute.xlu0 %2493
      %2495 = vrot.lane.b32.xlu0 %v2084, 32
      %v2496 = vpop.permute.xlu0 %2495
      %2497 = vrot.lane.b32.xlu0 %v2092, 32
      %v2498 = vpop.permute.xlu0 %2497
      %2499 = vrot.lane.b32.xlu0 %v2100, 32
      %v2500 = vpop.permute.xlu0 %2499
      %2501 = vrot.lane.b32.xlu0 %v2108, 32
      %v2502 = vpop.permute.xlu0 %2501
      %2503 = vrot.lane.b32.xlu0 %v2116, 32
      %v2504 = vpop.permute.xlu0 %2503
      %2505 = vrot.lane.b32.xlu0 %v2124, 32
      %v2506 = vpop.permute.xlu0 %2505
      %2507 = vrot.lane.b32.xlu0 %v2132, 32
      %v2508 = vpop.permute.xlu0 %2507
      %2509 = vrot.lane.b32.xlu0 %v2140, 32
      %v2510 = vpop.permute.xlu0 %2509
      %2511 = vrot.lane.b32.xlu0 %v2148, 32
      %v2512 = vpop.permute.xlu0 %2511
      %2513 = vrot.lane.b32.xlu0 %v2156, 32
      %v2514 = vpop.permute.xlu0 %2513
      %2515 = vrot.lane.b32.xlu0 %v2164, 32
      %v2516 = vpop.permute.xlu0 %2515
      %2517 = vrot.lane.b32.xlu0 %v2172, 32
      %v2518 = vpop.permute.xlu0 %2517
      %2519 = vrot.lane.b32.xlu0 %v2180, 32
      %v2520 = vpop.permute.xlu0 %2519
      %2521 = vrot.lane.b32.xlu0 %v2188, 32
      %v2522 = vpop.permute.xlu0 %2521
      %2523 = vrot.lane.b32.xlu0 %v2196, 32
      %v2524 = vpop.permute.xlu0 %2523
      %2525 = vrot.lane.b32.xlu0 %v2204, 32
      %v2526 = vpop.permute.xlu0 %2525
      %2527 = vrot.lane.b32.xlu0 %v2212, 32
      %v2528 = vpop.permute.xlu0 %2527
      %2529 = vrot.lane.b32.xlu0 %v2220, 32
      %v2530 = vpop.permute.xlu0 %2529
      %2531 = vrot.lane.b32.xlu0 %v2228, 32
      %v2532 = vpop.permute.xlu0 %2531
      %2533 = vrot.lane.b32.xlu0 %v2236, 32
      %v2534 = vpop.permute.xlu0 %2533
      %2535 = vrot.lane.b32.xlu0 %v2244, 32
      %v2536 = vpop.permute.xlu0 %2535
      %2537 = vrot.lane.b32.xlu0 %v2252, 32
      %v2538 = vpop.permute.xlu0 %2537
      %2539 = vrot.lane.b32.xlu0 %v2260, 32
      %v2540 = vpop.permute.xlu0 %2539
      %2541 = vrot.lane.b32.xlu0 %v2268, 32
      %v2542 = vpop.permute.xlu0 %2541
      %2543 = vrot.lane.b32.xlu0 %v2276, 32
      %v2544 = vpop.permute.xlu0 %2543
      %2545 = vrot.lane.b32.xlu0 %v2284, 32
      %v2546 = vpop.permute.xlu0 %2545
      %2547 = vrot.lane.b32.xlu0 %v2292, 32
      %v2548 = vpop.permute.xlu0 %2547
      %2549 = vrot.lane.b32.xlu0 %v2300, 32
      %v2550 = vpop.permute.xlu0 %2549
      %2551 = vrot.lane.b32.xlu0 %v2308, 32
      %v2552 = vpop.permute.xlu0 %2551
      %2553 = vrot.lane.b32.xlu0 %v2316, 32
      %v2554 = vpop.permute.xlu0 %2553
      %2555 = vrot.lane.b32.xlu0 %v2324, 32
      %v2556 = vpop.permute.xlu0 %2555
      %2557 = vrot.lane.b32.xlu0 %v2332, 32
      %v2558 = vpop.permute.xlu0 %2557
      %2559 = vrot.lane.b32.xlu0 %v2340, 32
      %v2560 = vpop.permute.xlu0 %2559
      %2561 = vrot.lane.b32.xlu0 %v2348, 32
      %v2562 = vpop.permute.xlu0 %2561
      %2563 = vrot.lane.b32.xlu0 %v2356, 32
      %v2564 = vpop.permute.xlu0 %2563
      %2565 = vrot.lane.b32.xlu0 %v2364, 32
      %v2566 = vpop.permute.xlu0 %2565
      %2567 = vrot.lane.b32.xlu0 %v2372, 32
      %v2568 = vpop.permute.xlu0 %2567
      %2569 = vrot.lane.b32.xlu0 %v2380, 32
      %v2570 = vpop.permute.xlu0 %2569
      %2571 = vrot.lane.b32.xlu0 %v2388, 32
      %v2572 = vpop.permute.xlu0 %2571
      %2573 = vrot.lane.b32.xlu0 %v2396, 32
      %v2574 = vpop.permute.xlu0 %2573
      %2575 = vrot.lane.b32.xlu0 %v2404, 32
      %v2576 = vpop.permute.xlu0 %2575
      %2577 = vrot.lane.b32.xlu0 %v2412, 32
      %v2578 = vpop.permute.xlu0 %2577
      %2579 = vrot.lane.b32.xlu0 %v2420, 32
      %v2580 = vpop.permute.xlu0 %2579
      %2581 = vrot.lane.b32.xlu0 %v2428, 32
      %v2582 = vpop.permute.xlu0 %2581
      %2583 = vrot.lane.b32.xlu0 %v2436, 32
      %v2584 = vpop.permute.xlu0 %2583
      %2585 = vrot.lane.b32.xlu0 %v2444, 32
      %v2586 = vpop.permute.xlu0 %2585
      %2587 = vrot.lane.b32.xlu0 %v2452, 32
      %v2588 = vpop.permute.xlu0 %2587
      %2589 = vrot.lane.b32.xlu0 %v2460, 32
      %v2590 = vpop.permute.xlu0 %2589
      %2591 = vrot.lane.b32.xlu0 %v2468, 32
      %v2592 = vpop.permute.xlu0 %2591
      %2593 = vrot.lane.b32.xlu0 %v2476, 32
      %v2594 = vpop.permute.xlu0 %2593
      %2595 = vrot.lane.b32.xlu0 %v2484, 32
      %v2596 = vpop.permute.xlu0 %2595
      %v2597 = vrot.slane %v1974, 1
      %v2598 = vrot.slane %v1975, 1
      %v2599 = vsel %vm1168, %v2597, %v2598
      %v2600 = vrot.slane %v1976, 1
      %v2601 = vsel %vm1168, %v2598, %v2600
      %v2602 = vrot.slane %v1977, 1
      %v2603 = vsel %vm1168, %v2600, %v2602
      %v2604 = vrot.slane %v1978, 1
      %v2605 = vsel %vm1168, %v2602, %v2604
      %v2606 = vrot.slane %v1979, 1
      %v2607 = vsel %vm1168, %v2604, %v2606
      %v2608 = vrot.slane %v1980, 1
      %v2609 = vsel %vm1168, %v2606, %v2608
      %v2610 = vrot.slane %v1981, 1
      %v2611 = vsel %vm1168, %v2608, %v2610
      %v2612 = vrot.slane %v1982, 1
      %v2613 = vsel %vm1168, %v2610, %v2612
      %v2614 = vrot.slane %v1983, 1
      %v2615 = vsel %vm1168, %v2612, %v2614
      %v2616 = vrot.slane %v1984, 1
      %v2617 = vsel %vm1168, %v2614, %v2616
      %v2618 = vrot.slane %v1985, 1
      %v2619 = vsel %vm1168, %v2616, %v2618
      %v2620 = vrot.slane %v1986, 1
      %v2621 = vsel %vm1168, %v2618, %v2620
      %v2622 = vrot.slane %v1987, 1
      %v2623 = vsel %vm1168, %v2620, %v2622
      %v2624 = vrot.slane %v1988, 1
      %v2625 = vsel %vm1168, %v2622, %v2624
      %v2626 = vrot.slane %v1989, 1
      %v2627 = vsel %vm1168, %v2624, %v2626
      %v2628 = vrot.slane %v1990, 1
      %v2629 = vsel %vm1168, %v2626, %v2628
      %v2630 = vrot.slane %v1991, 1
      %v2631 = vsel %vm1168, %v2628, %v2630
      %v2632 = vrot.slane %v1992, 1
      %v2633 = vsel %vm1168, %v2630, %v2632
      %v2634 = vrot.slane %v1993, 1
      %v2635 = vsel %vm1168, %v2632, %v2634
      %v2636 = vrot.slane %v1994, 1
      %v2637 = vsel %vm1168, %v2634, %v2636
      %v2638 = vrot.slane %v1995, 1
      %v2639 = vsel %vm1168, %v2636, %v2638
      %v2640 = vrot.slane %v1996, 1
      %v2641 = vsel %vm1168, %v2638, %v2640
      %v2642 = vrot.slane %v1997, 1
      %v2643 = vsel %vm1168, %v2640, %v2642
      %v2644 = vrot.slane %v1998, 1
      %v2645 = vsel %vm1168, %v2642, %v2644
      %v2646 = vrot.slane %v1999, 1
      %v2647 = vsel %vm1168, %v2644, %v2646
      %v2648 = vrot.slane %v2000, 1
      %v2649 = vsel %vm1168, %v2646, %v2648
      %v2650 = vrot.slane %v2001, 1
      %v2651 = vsel %vm1168, %v2648, %v2650
      %v2652 = vrot.slane %v2002, 1
      %v2653 = vsel %vm1168, %v2650, %v2652
      %v2654 = vrot.slane %v2003, 1
      %v2655 = vsel %vm1168, %v2652, %v2654
      %v2656 = vrot.slane %v2004, 1
      %v2657 = vsel %vm1168, %v2654, %v2656
      %v2658 = vrot.slane %v2005, 1
      %v2659 = vsel %vm1168, %v2656, %v2658
      %v2660 = vrot.slane %v2006, 1
      %v2661 = vsel %vm1168, %v2658, %v2660
      %v2662 = vrot.slane %v2007, 1
      %v2663 = vsel %vm1168, %v2660, %v2662
      %v2664 = vrot.slane %v2008, 1
      %v2665 = vsel %vm1168, %v2662, %v2664
      %v2666 = vrot.slane %v2009, 1
      %v2667 = vsel %vm1168, %v2664, %v2666
      %v2668 = vrot.slane %v2010, 1
      %v2669 = vsel %vm1168, %v2666, %v2668
      %v2670 = vrot.slane %v2011, 1
      %v2671 = vsel %vm1168, %v2668, %v2670
      %v2672 = vrot.slane %v2012, 1
      %v2673 = vsel %vm1168, %v2670, %v2672
      %v2674 = vrot.slane %v2013, 1
      %v2675 = vsel %vm1168, %v2672, %v2674
      %v2676 = vrot.slane %v2014, 1
      %v2677 = vsel %vm1168, %v2674, %v2676
      %v2678 = vrot.slane %v2015, 1
      %v2679 = vsel %vm1168, %v2676, %v2678
      %v2680 = vrot.slane %v2016, 1
      %v2681 = vsel %vm1168, %v2678, %v2680
      %v2682 = vrot.slane %v2017, 1
      %v2683 = vsel %vm1168, %v2680, %v2682
      %v2684 = vrot.slane %v2018, 1
      %v2685 = vsel %vm1168, %v2682, %v2684
      %v2686 = vrot.slane %v2019, 1
      %v2687 = vsel %vm1168, %v2684, %v2686
      %v2688 = vrot.slane %v2020, 1
      %v2689 = vsel %vm1168, %v2686, %v2688
      %v2690 = vrot.slane %v2021, 1
      %v2691 = vsel %vm1168, %v2688, %v2690
      %v2692 = vrot.slane %v2022, 1
      %v2693 = vsel %vm1168, %v2690, %v2692
      %v2694 = vrot.slane %v2023, 1
      %v2695 = vsel %vm1168, %v2692, %v2694
      %v2696 = vrot.slane %v2024, 1
      %v2697 = vsel %vm1168, %v2694, %v2696
      %v2698 = vrot.slane %v2025, 1
      %v2699 = vsel %vm1168, %v2696, %v2698
      %v2700 = vrot.slane %v2026, 1
      %v2701 = vsel %vm1168, %v2698, %v2700
      %v2702 = vrot.slane %v2027, 1
      %v2703 = vsel %vm1168, %v2700, %v2702
      %v2704 = vrot.slane %v2028, 1
      %v2705 = vsel %vm1168, %v2702, %v2704
      %v2706 = vrot.slane %v2029, 1
      %v2707 = vsel %vm1168, %v2704, %v2706
      %v2708 = vrot.slane %v2032, 1
      %v2709 = vsel %vm1168, %v2706, %v2708
      %2710 = vrot.lane.b32.xlu0 %v2599, 64
      %v2711 = vpop.permute.xlu0 %2710
      %2712 = vrot.lane.b32.xlu0 %v2601, 64
      %v2713 = vpop.permute.xlu0 %2712
      %2714 = vrot.lane.b32.xlu0 %v2603, 64
      %v2715 = vpop.permute.xlu0 %2714
      %2716 = vrot.lane.b32.xlu0 %v2605, 64
      %v2717 = vpop.permute.xlu0 %2716
      %2718 = vrot.lane.b32.xlu0 %v2607, 64
      %v2719 = vpop.permute.xlu0 %2718
      %2720 = vrot.lane.b32.xlu0 %v2609, 64
      %v2721 = vpop.permute.xlu0 %2720
      %2722 = vrot.lane.b32.xlu0 %v2611, 64
      %v2723 = vpop.permute.xlu0 %2722
      %2724 = vrot.lane.b32.xlu0 %v2613, 64
      %v2725 = vpop.permute.xlu0 %2724
      %2726 = vrot.lane.b32.xlu0 %v2615, 64
      %v2727 = vpop.permute.xlu0 %2726
      %2728 = vrot.lane.b32.xlu0 %v2617, 64
      %v2729 = vpop.permute.xlu0 %2728
      %2730 = vrot.lane.b32.xlu0 %v2619, 64
      %v2731 = vpop.permute.xlu0 %2730
      %2732 = vrot.lane.b32.xlu0 %v2621, 64
      %v2733 = vpop.permute.xlu0 %2732
      %2734 = vrot.lane.b32.xlu0 %v2623, 64
      %v2735 = vpop.permute.xlu0 %2734
      %2736 = vrot.lane.b32.xlu0 %v2625, 64
      %v2737 = vpop.permute.xlu0 %2736
      %2738 = vrot.lane.b32.xlu0 %v2627, 64
      %v2739 = vpop.permute.xlu0 %2738
      %2740 = vrot.lane.b32.xlu0 %v2629, 64
      %v2741 = vpop.permute.xlu0 %2740
      %2742 = vrot.lane.b32.xlu0 %v2631, 64
      %v2743 = vpop.permute.xlu0 %2742
      %2744 = vrot.lane.b32.xlu0 %v2633, 64
      %v2745 = vpop.permute.xlu0 %2744
      %2746 = vrot.lane.b32.xlu0 %v2635, 64
      %v2747 = vpop.permute.xlu0 %2746
      %2748 = vrot.lane.b32.xlu0 %v2637, 64
      %v2749 = vpop.permute.xlu0 %2748
      %2750 = vrot.lane.b32.xlu0 %v2639, 64
      %v2751 = vpop.permute.xlu0 %2750
      %2752 = vrot.lane.b32.xlu0 %v2641, 64
      %v2753 = vpop.permute.xlu0 %2752
      %2754 = vrot.lane.b32.xlu0 %v2643, 64
      %v2755 = vpop.permute.xlu0 %2754
      %2756 = vrot.lane.b32.xlu0 %v2645, 64
      %v2757 = vpop.permute.xlu0 %2756
      %2758 = vrot.lane.b32.xlu0 %v2647, 64
      %v2759 = vpop.permute.xlu0 %2758
      %2760 = vrot.lane.b32.xlu0 %v2649, 64
      %v2761 = vpop.permute.xlu0 %2760
      %2762 = vrot.lane.b32.xlu0 %v2651, 64
      %v2763 = vpop.permute.xlu0 %2762
      %2764 = vrot.lane.b32.xlu0 %v2653, 64
      %v2765 = vpop.permute.xlu0 %2764
      %2766 = vrot.lane.b32.xlu0 %v2655, 64
      %v2767 = vpop.permute.xlu0 %2766
      %2768 = vrot.lane.b32.xlu0 %v2657, 64
      %v2769 = vpop.permute.xlu0 %2768
      %2770 = vrot.lane.b32.xlu0 %v2659, 64
      %v2771 = vpop.permute.xlu0 %2770
      %2772 = vrot.lane.b32.xlu0 %v2661, 64
      %v2773 = vpop.permute.xlu0 %2772
      %2774 = vrot.lane.b32.xlu0 %v2663, 64
      %v2775 = vpop.permute.xlu0 %2774
      %2776 = vrot.lane.b32.xlu0 %v2665, 64
      %v2777 = vpop.permute.xlu0 %2776
      %2778 = vrot.lane.b32.xlu0 %v2667, 64
      %v2779 = vpop.permute.xlu0 %2778
      %2780 = vrot.lane.b32.xlu0 %v2669, 64
      %v2781 = vpop.permute.xlu0 %2780
      %2782 = vrot.lane.b32.xlu0 %v2671, 64
      %v2783 = vpop.permute.xlu0 %2782
      %2784 = vrot.lane.b32.xlu0 %v2673, 64
      %v2785 = vpop.permute.xlu0 %2784
      %2786 = vrot.lane.b32.xlu0 %v2675, 64
      %v2787 = vpop.permute.xlu0 %2786
      %2788 = vrot.lane.b32.xlu0 %v2677, 64
      %v2789 = vpop.permute.xlu0 %2788
      %2790 = vrot.lane.b32.xlu0 %v2679, 64
      %v2791 = vpop.permute.xlu0 %2790
      %2792 = vrot.lane.b32.xlu0 %v2681, 64
      %v2793 = vpop.permute.xlu0 %2792
      %2794 = vrot.lane.b32.xlu0 %v2683, 64
      %v2795 = vpop.permute.xlu0 %2794
      %2796 = vrot.lane.b32.xlu0 %v2685, 64
      %v2797 = vpop.permute.xlu0 %2796
      %2798 = vrot.lane.b32.xlu0 %v2687, 64
      %v2799 = vpop.permute.xlu0 %2798
      %2800 = vrot.lane.b32.xlu0 %v2689, 64
      %v2801 = vpop.permute.xlu0 %2800
      %2802 = vrot.lane.b32.xlu0 %v2691, 64
      %v2803 = vpop.permute.xlu0 %2802
      %2804 = vrot.lane.b32.xlu0 %v2693, 64
      %v2805 = vpop.permute.xlu0 %2804
      %2806 = vrot.lane.b32.xlu0 %v2695, 64
      %v2807 = vpop.permute.xlu0 %2806
      %2808 = vrot.lane.b32.xlu0 %v2697, 64
      %v2809 = vpop.permute.xlu0 %2808
      %2810 = vrot.lane.b32.xlu0 %v2699, 64
      %v2811 = vpop.permute.xlu0 %2810
      %2812 = vrot.lane.b32.xlu0 %v2701, 64
      %v2813 = vpop.permute.xlu0 %2812
      %2814 = vrot.lane.b32.xlu0 %v2703, 64
      %v2815 = vpop.permute.xlu0 %2814
      %2816 = vrot.lane.b32.xlu0 %v2705, 64
      %v2817 = vpop.permute.xlu0 %2816
      %2818 = vrot.lane.b32.xlu0 %v2707, 64
      %v2819 = vpop.permute.xlu0 %2818
      %2820 = vrot.lane.b32.xlu0 %v2709, 64
      %v2821 = vpop.permute.xlu0 %2820
      %v2823 = vsel %vm1394, %v1974, %v2486
      %v2825 = vsel %vm1394, %v1975, %v2488
      %v2827 = vsel %vm1394, %v1976, %v2490
      %v2829 = vsel %vm1394, %v1977, %v2492
      %v2831 = vsel %vm1394, %v1978, %v2494
      %v2833 = vsel %vm1394, %v1979, %v2496
      %v2835 = vsel %vm1394, %v1980, %v2498
      %v2837 = vsel %vm1394, %v1981, %v2500
      %v2839 = vsel %vm1394, %v1982, %v2502
      %v2841 = vsel %vm1394, %v1983, %v2504
      %v2843 = vsel %vm1394, %v1984, %v2506
      %v2845 = vsel %vm1394, %v1985, %v2508
      %v2847 = vsel %vm1394, %v1986, %v2510
      %v2849 = vsel %vm1394, %v1987, %v2512
      %v2851 = vsel %vm1394, %v1988, %v2514
      %v2853 = vsel %vm1394, %v1989, %v2516
      %v2855 = vsel %vm1394, %v1990, %v2518
      %v2857 = vsel %vm1394, %v1991, %v2520
      %v2859 = vsel %vm1394, %v1992, %v2522
      %v2861 = vsel %vm1394, %v1993, %v2524
      %v2863 = vsel %vm1394, %v1994, %v2526
      %v2865 = vsel %vm1394, %v1995, %v2528
      %v2867 = vsel %vm1394, %v1996, %v2530
      %v2869 = vsel %vm1394, %v1997, %v2532
      %v2871 = vsel %vm1394, %v1998, %v2534
      %v2873 = vsel %vm1394, %v1999, %v2536
      %v2875 = vsel %vm1394, %v2000, %v2538
      %v2877 = vsel %vm1394, %v2001, %v2540
      %v2879 = vsel %vm1394, %v2002, %v2542
      %v2881 = vsel %vm1394, %v2003, %v2544
      %v2883 = vsel %vm1394, %v2004, %v2546
      %v2885 = vsel %vm1394, %v2005, %v2548
      %v2887 = vsel %vm1394, %v2006, %v2550
      %v2889 = vsel %vm1394, %v2007, %v2552
      %v2891 = vsel %vm1394, %v2008, %v2554
      %v2893 = vsel %vm1394, %v2009, %v2556
      %v2895 = vsel %vm1394, %v2010, %v2558
      %v2897 = vsel %vm1394, %v2011, %v2560
      %v2899 = vsel %vm1394, %v2012, %v2562
      %v2901 = vsel %vm1394, %v2013, %v2564
      %v2903 = vsel %vm1394, %v2014, %v2566
      %v2905 = vsel %vm1394, %v2015, %v2568
      %v2907 = vsel %vm1394, %v2016, %v2570
      %v2909 = vsel %vm1394, %v2017, %v2572
      %v2911 = vsel %vm1394, %v2018, %v2574
      %v2913 = vsel %vm1394, %v2019, %v2576
      %v2915 = vsel %vm1394, %v2020, %v2578
      %v2917 = vsel %vm1394, %v2021, %v2580
      %v2919 = vsel %vm1394, %v2022, %v2582
      %v2921 = vsel %vm1394, %v2023, %v2584
      %v2923 = vsel %vm1394, %v2024, %v2586
      %v2925 = vsel %vm1394, %v2025, %v2588
      %v2927 = vsel %vm1394, %v2026, %v2590
      %v2929 = vsel %vm1394, %v2027, %v2592
      %v2931 = vsel %vm1394, %v2028, %v2594
      %v2933 = vsel %vm1394, %v2029, %v2596
      %v2935 = vsel %vm1507, %v2823, %v2711
      %v2937 = vsel %vm1507, %v2825, %v2713
      %v2939 = vsel %vm1507, %v2827, %v2715
      %v2941 = vsel %vm1507, %v2829, %v2717
      %v2943 = vsel %vm1507, %v2831, %v2719
      %v2945 = vsel %vm1507, %v2833, %v2721
      %v2947 = vsel %vm1507, %v2835, %v2723
      %v2949 = vsel %vm1507, %v2837, %v2725
      %v2951 = vsel %vm1507, %v2839, %v2727
      %v2953 = vsel %vm1507, %v2841, %v2729
      %v2955 = vsel %vm1507, %v2843, %v2731
      %v2957 = vsel %vm1507, %v2845, %v2733
      %v2959 = vsel %vm1507, %v2847, %v2735
      %v2961 = vsel %vm1507, %v2849, %v2737
      %v2963 = vsel %vm1507, %v2851, %v2739
      %v2965 = vsel %vm1507, %v2853, %v2741
      %v2967 = vsel %vm1507, %v2855, %v2743
      %v2969 = vsel %vm1507, %v2857, %v2745
      %v2971 = vsel %vm1507, %v2859, %v2747
      %v2973 = vsel %vm1507, %v2861, %v2749
      %v2975 = vsel %vm1507, %v2863, %v2751
      %v2977 = vsel %vm1507, %v2865, %v2753
      %v2979 = vsel %vm1507, %v2867, %v2755
      %v2981 = vsel %vm1507, %v2869, %v2757
      %v2983 = vsel %vm1507, %v2871, %v2759
      %v2985 = vsel %vm1507, %v2873, %v2761
      %v2987 = vsel %vm1507, %v2875, %v2763
      %v2989 = vsel %vm1507, %v2877, %v2765
      %v2991 = vsel %vm1507, %v2879, %v2767
      %v2993 = vsel %vm1507, %v2881, %v2769
      %v2995 = vsel %vm1507, %v2883, %v2771
      %v2997 = vsel %vm1507, %v2885, %v2773
      %v2999 = vsel %vm1507, %v2887, %v2775
      %v3001 = vsel %vm1507, %v2889, %v2777
      %v3003 = vsel %vm1507, %v2891, %v2779
      %v3005 = vsel %vm1507, %v2893, %v2781
      %v3007 = vsel %vm1507, %v2895, %v2783
      %v3009 = vsel %vm1507, %v2897, %v2785
      %v3011 = vsel %vm1507, %v2899, %v2787
      %v3013 = vsel %vm1507, %v2901, %v2789
      %v3015 = vsel %vm1507, %v2903, %v2791
      %v3017 = vsel %vm1507, %v2905, %v2793
      %v3019 = vsel %vm1507, %v2907, %v2795
      %v3021 = vsel %vm1507, %v2909, %v2797
      %v3023 = vsel %vm1507, %v2911, %v2799
      %v3025 = vsel %vm1507, %v2913, %v2801
      %v3027 = vsel %vm1507, %v2915, %v2803
      %v3029 = vsel %vm1507, %v2917, %v2805
      %v3031 = vsel %vm1507, %v2919, %v2807
      %v3033 = vsel %vm1507, %v2921, %v2809
      %v3035 = vsel %vm1507, %v2923, %v2811
      %v3037 = vsel %vm1507, %v2925, %v2813
      %v3039 = vsel %vm1507, %v2927, %v2815
      %v3041 = vsel %vm1507, %v2929, %v2817
      %v3043 = vsel %vm1507, %v2931, %v2819
      %v3045 = vsel %vm1507, %v2933, %v2821
      %s3046 = scalar_lea.vmem %s1, 48
      %v3047 = vld [vmem:[%s3046] sm:$0xf]
      %v3048 = vld [vmem:[%s3046 + $0x4] sm:$0xf]
      %v3049 = vld [vmem:[%s3046 + $0x8] sm:$0xf]
      %v3050 = vld [vmem:[%s3046 + $0xc] sm:$0xf]
      %v3051 = vld [vmem:[%s3046 + $0x10] sm:$0xf]
      %v3052 = vld [vmem:[%s3046 + $0x14] sm:$0xf]
      %v3053 = vld [vmem:[%s3046 + $0x18] sm:$0xf]
      %v3054 = vld [vmem:[%s3046 + $0x1c] sm:$0xf]
      %v3055 = vld [vmem:[%s3046 + $0x20] sm:$0xf]
      %v3056 = vld [vmem:[%s3046 + $0x24] sm:$0xf]
      %v3057 = vld [vmem:[%s3046 + $0x28] sm:$0xf]
      %v3058 = vld [vmem:[%s3046 + $0x2c] sm:$0xf]
      %v3071 = vunpack.c.l.b16 %v3047
      %v3072 = vunpack.c.l.b16 %v3048
      %v3073 = vunpack.c.l.b16 %v3049
      %v3074 = vunpack.c.l.b16 %v3050
      %v3075 = vunpack.c.l.b16 %v3051
      %v3076 = vunpack.c.l.b16 %v3052
      %v3077 = vunpack.c.l.b16 %v3053
      %v3078 = vunpack.c.l.b16 %v3054
      %v3079 = vunpack.c.l.b16 %v3055
      %v3080 = vunpack.c.l.b16 %v3056
      %v3081 = vunpack.c.l.b16 %v3057
      %v3082 = vunpack.c.l.b16 %v3058
      %v3083 = vpack.c.b16 %v3072, %v3071
      %v3084 = vpack.c.b16 %v3074, %v3073
      %v3085 = vpack.c.b16 %v3076, %v3075
      %v3086 = vpack.c.b16 %v3078, %v3077
      %v3087 = vpack.c.b16 %v3080, %v3079
      %v3088 = vpack.c.b16 %v3082, %v3081
      %vm3095 = vcmask 785408
      %v3096 = vsel %vm3095, %v2935, 0
      %v3098 = vsel %vm3095, %v2937, 0
      %v3100 = vsel %vm3095, %v2939, 0
      %v3102 = vsel %vm3095, %v2941, 0
      %v3104 = vsel %vm3095, %v2943, 0
      %v3106 = vsel %vm3095, %v2945, 0
      %v3108 = vsel %vm3095, %v2947, 0
      %v3110 = vsel %vm3095, %v2949, 0
      %v3112 = vsel %vm3095, %v2951, 0
      %v3114 = vsel %vm3095, %v2953, 0
      %v3116 = vsel %vm3095, %v2955, 0
      %v3118 = vsel %vm3095, %v2957, 0
      %v3120 = vsel %vm3095, %v2959, 0
      %v3122 = vsel %vm3095, %v2961, 0
      %v3124 = vsel %vm3095, %v2963, 0
      %v3126 = vsel %vm3095, %v2965, 0
      %v3128 = vsel %vm3095, %v2967, 0
      %v3130 = vsel %vm3095, %v2969, 0
      %v3132 = vsel %vm3095, %v2971, 0
      %v3134 = vsel %vm3095, %v2973, 0
      %v3136 = vsel %vm3095, %v2975, 0
      %v3138 = vsel %vm3095, %v2977, 0
      %v3140 = vsel %vm3095, %v2979, 0
      %v3142 = vsel %vm3095, %v2981, 0
      %v3144 = vsel %vm3095, %v2983, 0
      %v3146 = vsel %vm3095, %v2985, 0
      %v3148 = vsel %vm3095, %v2987, 0
      %v3150 = vsel %vm3095, %v2989, 0
      %v3152 = vsel %vm3095, %v2991, 0
      %v3154 = vsel %vm3095, %v2993, 0
      %v3156 = vsel %vm3095, %v2995, 0
      %v3158 = vsel %vm3095, %v2997, 0
      %v3160 = vsel %vm3095, %v2999, 0
      %v3162 = vsel %vm3095, %v3001, 0
      %v3164 = vsel %vm3095, %v3003, 0
      %v3166 = vsel %vm3095, %v3005, 0
      %v3168 = vsel %vm3095, %v3007, 0
      %v3170 = vsel %vm3095, %v3009, 0
      %v3172 = vsel %vm3095, %v3011, 0
      %v3174 = vsel %vm3095, %v3013, 0
      %v3176 = vsel %vm3095, %v3015, 0
      %v3178 = vsel %vm3095, %v3017, 0
      %v3180 = vsel %vm3095, %v3019, 0
      %v3182 = vsel %vm3095, %v3021, 0
      %v3184 = vsel %vm3095, %v3023, 0
      %v3186 = vsel %vm3095, %v3025, 0
      %v3188 = vsel %vm3095, %v3027, 0
      %v3190 = vsel %vm3095, %v3029, 0
      %v3192 = vsel %vm3095, %v3031, 0
      %v3194 = vsel %vm3095, %v3033, 0
      %v3196 = vsel %vm3095, %v3035, 0
      %v3198 = vsel %vm3095, %v3037, 0
      %v3200 = vsel %vm3095, %v3039, 0
      %v3202 = vsel %vm3095, %v3041, 0
      %v3204 = vsel %vm3095, %v3043, 0
      %v3206 = vsel %vm3095, %v3045, 0
      %3208 = vmatpush.bf16.msra.mxu0 0
      %3209 = vmatpush.bf16.msra.mxu0 0
      %3210 = vmatpush.bf16.msra.mxu0 %v3088
      %3211 = vmatpush.bf16.msra.mxu0 %v3087
      %3212 = vmatpush.bf16.msra.mxu0 %v3086
      %3213 = vmatpush.bf16.msra.mxu0 %v3085
      %3214 = vmatpush.bf16.msra.mxu0 %v3084
      %3215 = vmatpush.bf16.msra.mxu0 %v3083
      %3216 = vmatmul.bf16.gmra.mxu0 %v3096
      %v3217 = vpop.f32.mrf.mxu0
      %v3218 = vadd.f32 0.0, %v3217
      %v3219 = vpop.f32.mrf.mxu0
      %v3220 = vadd.f32 0.0, %v3219
      %3221 = vmatmul.bf16.gmra.mxu0 %v3098
      %v3222 = vpop.f32.mrf.mxu0
      %v3223 = vadd.f32 0.0, %v3222
      %v3224 = vpop.f32.mrf.mxu0
      %v3225 = vadd.f32 0.0, %v3224
      %3226 = vmatmul.bf16.gmra.mxu0 %v3100
      %v3227 = vpop.f32.mrf.mxu0
      %v3228 = vadd.f32 0.0, %v3227
      %v3229 = vpop.f32.mrf.mxu0
      %v3230 = vadd.f32 0.0, %v3229
      %3231 = vmatmul.bf16.gmra.mxu0 %v3102
      %v3232 = vpop.f32.mrf.mxu0
      %v3233 = vadd.f32 0.0, %v3232
      %v3234 = vpop.f32.mrf.mxu0
      %v3235 = vadd.f32 0.0, %v3234
      %3236 = vmatmul.bf16.gmra.mxu0 %v3104
      %v3237 = vpop.f32.mrf.mxu0
      %v3238 = vadd.f32 0.0, %v3237
      %v3239 = vpop.f32.mrf.mxu0
      %v3240 = vadd.f32 0.0, %v3239
      %3241 = vmatmul.bf16.gmra.mxu0 %v3106
      %v3242 = vpop.f32.mrf.mxu0
      %v3243 = vadd.f32 0.0, %v3242
      %v3244 = vpop.f32.mrf.mxu0
      %v3245 = vadd.f32 0.0, %v3244
      %3246 = vmatmul.bf16.gmra.mxu0 %v3108
      %v3247 = vpop.f32.mrf.mxu0
      %v3248 = vadd.f32 0.0, %v3247
      %v3249 = vpop.f32.mrf.mxu0
      %v3250 = vadd.f32 0.0, %v3249
      %3251 = vmatmul.bf16.gmra.mxu0 %v3110
      %v3252 = vpop.f32.mrf.mxu0
      %v3253 = vadd.f32 0.0, %v3252
      %v3254 = vpop.f32.mrf.mxu0
      %v3255 = vadd.f32 0.0, %v3254
      %3256 = vmatmul.bf16.gmra.mxu0 %v3112
      %v3257 = vpop.f32.mrf.mxu0
      %v3258 = vadd.f32 0.0, %v3257
      %v3259 = vpop.f32.mrf.mxu0
      %v3260 = vadd.f32 0.0, %v3259
      %3261 = vmatmul.bf16.gmra.mxu0 %v3114
      %v3262 = vpop.f32.mrf.mxu0
      %v3263 = vadd.f32 0.0, %v3262
      %v3264 = vpop.f32.mrf.mxu0
      %v3265 = vadd.f32 0.0, %v3264
      %3266 = vmatmul.bf16.gmra.mxu0 %v3116
      %v3267 = vpop.f32.mrf.mxu0
      %v3268 = vadd.f32 0.0, %v3267
      %v3269 = vpop.f32.mrf.mxu0
      %v3270 = vadd.f32 0.0, %v3269
      %3271 = vmatmul.bf16.gmra.mxu0 %v3118
      %v3272 = vpop.f32.mrf.mxu0
      %v3273 = vadd.f32 0.0, %v3272
      %v3274 = vpop.f32.mrf.mxu0
      %v3275 = vadd.f32 0.0, %v3274
      %3276 = vmatmul.bf16.gmra.mxu0 %v3120
      %v3277 = vpop.f32.mrf.mxu0
      %v3278 = vadd.f32 0.0, %v3277
      %v3279 = vpop.f32.mrf.mxu0
      %v3280 = vadd.f32 0.0, %v3279
      %3281 = vmatmul.bf16.gmra.mxu0 %v3122
      %v3282 = vpop.f32.mrf.mxu0
      %v3283 = vadd.f32 0.0, %v3282
      %v3284 = vpop.f32.mrf.mxu0
      %v3285 = vadd.f32 0.0, %v3284
      %3286 = vmatmul.bf16.gmra.mxu0 %v3124
      %v3287 = vpop.f32.mrf.mxu0
      %v3288 = vadd.f32 0.0, %v3287
      %v3289 = vpop.f32.mrf.mxu0
      %v3290 = vadd.f32 0.0, %v3289
      %3291 = vmatmul.bf16.gmra.mxu0 %v3126
      %v3292 = vpop.f32.mrf.mxu0
      %v3293 = vadd.f32 0.0, %v3292
      %v3294 = vpop.f32.mrf.mxu0
      %v3295 = vadd.f32 0.0, %v3294
      %3296 = vmatmul.bf16.gmra.mxu0 %v3128
      %v3297 = vpop.f32.mrf.mxu0
      %v3298 = vadd.f32 0.0, %v3297
      %v3299 = vpop.f32.mrf.mxu0
      %v3300 = vadd.f32 0.0, %v3299
      %3301 = vmatmul.bf16.gmra.mxu0 %v3130
      %v3302 = vpop.f32.mrf.mxu0
      %v3303 = vadd.f32 0.0, %v3302
      %v3304 = vpop.f32.mrf.mxu0
      %v3305 = vadd.f32 0.0, %v3304
      %3306 = vmatmul.bf16.gmra.mxu0 %v3132
      %v3307 = vpop.f32.mrf.mxu0
      %v3308 = vadd.f32 0.0, %v3307
      %v3309 = vpop.f32.mrf.mxu0
      %v3310 = vadd.f32 0.0, %v3309
      %3311 = vmatmul.bf16.gmra.mxu0 %v3134
      %v3312 = vpop.f32.mrf.mxu0
      %v3313 = vadd.f32 0.0, %v3312
      %v3314 = vpop.f32.mrf.mxu0
      %v3315 = vadd.f32 0.0, %v3314
      %3316 = vmatmul.bf16.gmra.mxu0 %v3136
      %v3317 = vpop.f32.mrf.mxu0
      %v3318 = vadd.f32 0.0, %v3317
      %v3319 = vpop.f32.mrf.mxu0
      %v3320 = vadd.f32 0.0, %v3319
      %3321 = vmatmul.bf16.gmra.mxu0 %v3138
      %v3322 = vpop.f32.mrf.mxu0
      %v3323 = vadd.f32 0.0, %v3322
      %v3324 = vpop.f32.mrf.mxu0
      %v3325 = vadd.f32 0.0, %v3324
      %3326 = vmatmul.bf16.gmra.mxu0 %v3140
      %v3327 = vpop.f32.mrf.mxu0
      %v3328 = vadd.f32 0.0, %v3327
      %v3329 = vpop.f32.mrf.mxu0
      %v3330 = vadd.f32 0.0, %v3329
      %3331 = vmatmul.bf16.gmra.mxu0 %v3142
      %v3332 = vpop.f32.mrf.mxu0
      %v3333 = vadd.f32 0.0, %v3332
      %v3334 = vpop.f32.mrf.mxu0
      %v3335 = vadd.f32 0.0, %v3334
      %3336 = vmatmul.bf16.gmra.mxu0 %v3144
      %v3337 = vpop.f32.mrf.mxu0
      %v3338 = vadd.f32 0.0, %v3337
      %v3339 = vpop.f32.mrf.mxu0
      %v3340 = vadd.f32 0.0, %v3339
      %3341 = vmatmul.bf16.gmra.mxu0 %v3146
      %v3342 = vpop.f32.mrf.mxu0
      %v3343 = vadd.f32 0.0, %v3342
      %v3344 = vpop.f32.mrf.mxu0
      %v3345 = vadd.f32 0.0, %v3344
      %3346 = vmatmul.bf16.gmra.mxu0 %v3148
      %v3347 = vpop.f32.mrf.mxu0
      %v3348 = vadd.f32 0.0, %v3347
      %v3349 = vpop.f32.mrf.mxu0
      %v3350 = vadd.f32 0.0, %v3349
      %3351 = vmatmul.bf16.gmra.mxu0 %v3150
      %v3352 = vpop.f32.mrf.mxu0
      %v3353 = vadd.f32 0.0, %v3352
      %v3354 = vpop.f32.mrf.mxu0
      %v3355 = vadd.f32 0.0, %v3354
      %3356 = vmatmul.bf16.gmra.mxu0 %v3152
      %v3357 = vpop.f32.mrf.mxu0
      %v3358 = vadd.f32 0.0, %v3357
      %v3359 = vpop.f32.mrf.mxu0
      %v3360 = vadd.f32 0.0, %v3359
      %3361 = vmatmul.bf16.gmra.mxu0 %v3154
      %v3362 = vpop.f32.mrf.mxu0
      %v3363 = vadd.f32 0.0, %v3362
      %v3364 = vpop.f32.mrf.mxu0
      %v3365 = vadd.f32 0.0, %v3364
      %3366 = vmatmul.bf16.gmra.mxu0 %v3156
      %v3367 = vpop.f32.mrf.mxu0
      %v3368 = vadd.f32 0.0, %v3367
      %v3369 = vpop.f32.mrf.mxu0
      %v3370 = vadd.f32 0.0, %v3369
      %3371 = vmatmul.bf16.gmra.mxu0 %v3158
      %v3372 = vpop.f32.mrf.mxu0
      %v3373 = vadd.f32 0.0, %v3372
      %v3374 = vpop.f32.mrf.mxu0
      %v3375 = vadd.f32 0.0, %v3374
      %3376 = vmatmul.bf16.gmra.mxu0 %v3160
      %v3377 = vpop.f32.mrf.mxu0
      %v3378 = vadd.f32 0.0, %v3377
      %v3379 = vpop.f32.mrf.mxu0
      %v3380 = vadd.f32 0.0, %v3379
      %3381 = vmatmul.bf16.gmra.mxu0 %v3162
      %v3382 = vpop.f32.mrf.mxu0
      %v3383 = vadd.f32 0.0, %v3382
      %v3384 = vpop.f32.mrf.mxu0
      %v3385 = vadd.f32 0.0, %v3384
      %3386 = vmatmul.bf16.gmra.mxu0 %v3164
      %v3387 = vpop.f32.mrf.mxu0
      %v3388 = vadd.f32 0.0, %v3387
      %v3389 = vpop.f32.mrf.mxu0
      %v3390 = vadd.f32 0.0, %v3389
      %3391 = vmatmul.bf16.gmra.mxu0 %v3166
      %v3392 = vpop.f32.mrf.mxu0
      %v3393 = vadd.f32 0.0, %v3392
      %v3394 = vpop.f32.mrf.mxu0
      %v3395 = vadd.f32 0.0, %v3394
      %3396 = vmatmul.bf16.gmra.mxu0 %v3168
      %v3397 = vpop.f32.mrf.mxu0
      %v3398 = vadd.f32 0.0, %v3397
      %v3399 = vpop.f32.mrf.mxu0
      %v3400 = vadd.f32 0.0, %v3399
      %3401 = vmatmul.bf16.gmra.mxu0 %v3170
      %v3402 = vpop.f32.mrf.mxu0
      %v3403 = vadd.f32 0.0, %v3402
      %v3404 = vpop.f32.mrf.mxu0
      %v3405 = vadd.f32 0.0, %v3404
      %3406 = vmatmul.bf16.gmra.mxu0 %v3172
      %v3407 = vpop.f32.mrf.mxu0
      %v3408 = vadd.f32 0.0, %v3407
      %v3409 = vpop.f32.mrf.mxu0
      %v3410 = vadd.f32 0.0, %v3409
      %3411 = vmatmul.bf16.gmra.mxu0 %v3174
      %v3412 = vpop.f32.mrf.mxu0
      %v3413 = vadd.f32 0.0, %v3412
      %v3414 = vpop.f32.mrf.mxu0
      %v3415 = vadd.f32 0.0, %v3414
      %3416 = vmatmul.bf16.gmra.mxu0 %v3176
      %v3417 = vpop.f32.mrf.mxu0
      %v3418 = vadd.f32 0.0, %v3417
      %v3419 = vpop.f32.mrf.mxu0
      %v3420 = vadd.f32 0.0, %v3419
      %3421 = vmatmul.bf16.gmra.mxu0 %v3178
      %v3422 = vpop.f32.mrf.mxu0
      %v3423 = vadd.f32 0.0, %v3422
      %v3424 = vpop.f32.mrf.mxu0
      %v3425 = vadd.f32 0.0, %v3424
      %3426 = vmatmul.bf16.gmra.mxu0 %v3180
      %v3427 = vpop.f32.mrf.mxu0
      %v3428 = vadd.f32 0.0, %v3427
      %v3429 = vpop.f32.mrf.mxu0
      %v3430 = vadd.f32 0.0, %v3429
      %3431 = vmatmul.bf16.gmra.mxu0 %v3182
      %v3432 = vpop.f32.mrf.mxu0
      %v3433 = vadd.f32 0.0, %v3432
      %v3434 = vpop.f32.mrf.mxu0
      %v3435 = vadd.f32 0.0, %v3434
      %3436 = vmatmul.bf16.gmra.mxu0 %v3184
      %v3437 = vpop.f32.mrf.mxu0
      %v3438 = vadd.f32 0.0, %v3437
      %v3439 = vpop.f32.mrf.mxu0
      %v3440 = vadd.f32 0.0, %v3439
      %3441 = vmatmul.bf16.gmra.mxu0 %v3186
      %v3442 = vpop.f32.mrf.mxu0
      %v3443 = vadd.f32 0.0, %v3442
      %v3444 = vpop.f32.mrf.mxu0
      %v3445 = vadd.f32 0.0, %v3444
      %3446 = vmatmul.bf16.gmra.mxu0 %v3188
      %v3447 = vpop.f32.mrf.mxu0
      %v3448 = vadd.f32 0.0, %v3447
      %v3449 = vpop.f32.mrf.mxu0
      %v3450 = vadd.f32 0.0, %v3449
      %3451 = vmatmul.bf16.gmra.mxu0 %v3190
      %v3452 = vpop.f32.mrf.mxu0
      %v3453 = vadd.f32 0.0, %v3452
      %v3454 = vpop.f32.mrf.mxu0
      %v3455 = vadd.f32 0.0, %v3454
      %3456 = vmatmul.bf16.gmra.mxu0 %v3192
      %v3457 = vpop.f32.mrf.mxu0
      %v3458 = vadd.f32 0.0, %v3457
      %v3459 = vpop.f32.mrf.mxu0
      %v3460 = vadd.f32 0.0, %v3459
      %3461 = vmatmul.bf16.gmra.mxu0 %v3194
      %v3462 = vpop.f32.mrf.mxu0
      %v3463 = vadd.f32 0.0, %v3462
      %v3464 = vpop.f32.mrf.mxu0
      %v3465 = vadd.f32 0.0, %v3464
      %3466 = vmatmul.bf16.gmra.mxu0 %v3196
      %v3467 = vpop.f32.mrf.mxu0
      %v3468 = vadd.f32 0.0, %v3467
      %v3469 = vpop.f32.mrf.mxu0
      %v3470 = vadd.f32 0.0, %v3469
      %3471 = vmatmul.bf16.gmra.mxu0 %v3198
      %v3472 = vpop.f32.mrf.mxu0
      %v3473 = vadd.f32 0.0, %v3472
      %v3474 = vpop.f32.mrf.mxu0
      %v3475 = vadd.f32 0.0, %v3474
      %3476 = vmatmul.bf16.gmra.mxu0 %v3200
      %v3477 = vpop.f32.mrf.mxu0
      %v3478 = vadd.f32 0.0, %v3477
      %v3479 = vpop.f32.mrf.mxu0
      %v3480 = vadd.f32 0.0, %v3479
      %3481 = vmatmul.bf16.gmra.mxu0 %v3202
      %v3482 = vpop.f32.mrf.mxu0
      %v3483 = vadd.f32 0.0, %v3482
      %v3484 = vpop.f32.mrf.mxu0
      %v3485 = vadd.f32 0.0, %v3484
      %3486 = vmatmul.bf16.gmra.mxu0 %v3204
      %v3487 = vpop.f32.mrf.mxu0
      %v3488 = vadd.f32 0.0, %v3487
      %v3489 = vpop.f32.mrf.mxu0
      %v3490 = vadd.f32 0.0, %v3489
      %3491 = vmatmul.bf16.gmra.mxu0 %v3206
      %v3492 = vpop.f32.mrf.mxu0
      %v3493 = vadd.f32 0.0, %v3492
      %v3494 = vpop.f32.mrf.mxu0
      %v3495 = vadd.f32 0.0, %v3494
      %3496 = vdwg.mxu0
      %v3509 = vunpack.c.l.b16 %v1620
      %v3510 = vunpack.c.l.b16 %v1621
      %v3511 = vunpack.c.l.b16 %v1622
      %v3512 = vunpack.c.l.b16 %v1623
      %v3513 = vunpack.c.l.b16 %v1624
      %v3514 = vunpack.c.l.b16 %v1625
      %v3515 = vunpack.c.l.b16 %v1626
      %v3516 = vunpack.c.l.b16 %v1627
      %v3517 = vunpack.c.l.b16 %v1628
      %v3518 = vunpack.c.l.b16 %v1629
      %v3519 = vunpack.c.l.b16 %v1630
      %v3520 = vunpack.c.l.b16 %v1631
      %v3521 = vpack.c.b16 %v3510, %v3509
      %v3522 = vpack.c.b16 %v3512, %v3511
      %v3523 = vpack.c.b16 %v3514, %v3513
      %v3524 = vpack.c.b16 %v3516, %v3515
      %v3525 = vpack.c.b16 %v3518, %v3517
      %v3526 = vpack.c.b16 %v3520, %v3519
      %v3533 = vsel %vm3095, %v1509, 0
      %v3535 = vsel %vm3095, %v1511, 0
      %v3537 = vsel %vm3095, %v1513, 0
      %v3539 = vsel %vm3095, %v1515, 0
      %v3541 = vsel %vm3095, %v1517, 0
      %v3543 = vsel %vm3095, %v1519, 0
      %v3545 = vsel %vm3095, %v1521, 0
      %v3547 = vsel %vm3095, %v1523, 0
      %v3549 = vsel %vm3095, %v1525, 0
      %v3551 = vsel %vm3095, %v1527, 0
      %v3553 = vsel %vm3095, %v1529, 0
      %v3555 = vsel %vm3095, %v1531, 0
      %v3557 = vsel %vm3095, %v1533, 0
      %v3559 = vsel %vm3095, %v1535, 0
      %v3561 = vsel %vm3095, %v1537, 0
      %v3563 = vsel %vm3095, %v1539, 0
      %v3565 = vsel %vm3095, %v1541, 0
      %v3567 = vsel %vm3095, %v1543, 0
      %v3569 = vsel %vm3095, %v1545, 0
      %v3571 = vsel %vm3095, %v1547, 0
      %v3573 = vsel %vm3095, %v1549, 0
      %v3575 = vsel %vm3095, %v1551, 0
      %v3577 = vsel %vm3095, %v1553, 0
      %v3579 = vsel %vm3095, %v1555, 0
      %v3581 = vsel %vm3095, %v1557, 0
      %v3583 = vsel %vm3095, %v1559, 0
      %v3585 = vsel %vm3095, %v1561, 0
      %v3587 = vsel %vm3095, %v1563, 0
      %v3589 = vsel %vm3095, %v1565, 0
      %v3591 = vsel %vm3095, %v1567, 0
      %v3593 = vsel %vm3095, %v1569, 0
      %v3595 = vsel %vm3095, %v1571, 0
      %v3597 = vsel %vm3095, %v1573, 0
      %v3599 = vsel %vm3095, %v1575, 0
      %v3601 = vsel %vm3095, %v1577, 0
      %v3603 = vsel %vm3095, %v1579, 0
      %v3605 = vsel %vm3095, %v1581, 0
      %v3607 = vsel %vm3095, %v1583, 0
      %v3609 = vsel %vm3095, %v1585, 0
      %v3611 = vsel %vm3095, %v1587, 0
      %v3613 = vsel %vm3095, %v1589, 0
      %v3615 = vsel %vm3095, %v1591, 0
      %v3617 = vsel %vm3095, %v1593, 0
      %v3619 = vsel %vm3095, %v1595, 0
      %v3621 = vsel %vm3095, %v1597, 0
      %v3623 = vsel %vm3095, %v1599, 0
      %v3625 = vsel %vm3095, %v1601, 0
      %v3627 = vsel %vm3095, %v1603, 0
      %v3629 = vsel %vm3095, %v1605, 0
      %v3631 = vsel %vm3095, %v1607, 0
      %v3633 = vsel %vm3095, %v1609, 0
      %v3635 = vsel %vm3095, %v1611, 0
      %v3637 = vsel %vm3095, %v1613, 0
      %v3639 = vsel %vm3095, %v1615, 0
      %v3641 = vsel %vm3095, %v1617, 0
      %v3643 = vsel %vm3095, %v1619, 0
      %3645 = vmatpush.bf16.msra.mxu0 0
      %3646 = vmatpush.bf16.msra.mxu0 0
      %3647 = vmatpush.bf16.msra.mxu0 %v3526
      %3648 = vmatpush.bf16.msra.mxu0 %v3525
      %3649 = vmatpush.bf16.msra.mxu0 %v3524
      %3650 = vmatpush.bf16.msra.mxu0 %v3523
      %3651 = vmatpush.bf16.msra.mxu0 %v3522
      %3652 = vmatpush.bf16.msra.mxu0 %v3521
      %3653 = vmatmul.bf16.gmra.mxu0 %v3533
      %v3654 = vpop.f32.mrf.mxu0
      %v3655 = vadd.f32 %v3218, %v3654
      %v3656 = vpop.f32.mrf.mxu0
      %v3657 = vadd.f32 %v3220, %v3656
      %3658 = vmatmul.bf16.gmra.mxu0 %v3535
      %v3659 = vpop.f32.mrf.mxu0
      %v3660 = vadd.f32 %v3223, %v3659
      %v3661 = vpop.f32.mrf.mxu0
      %v3662 = vadd.f32 %v3225, %v3661
      %3663 = vmatmul.bf16.gmra.mxu0 %v3537
      %v3664 = vpop.f32.mrf.mxu0
      %v3665 = vadd.f32 %v3228, %v3664
      %v3666 = vpop.f32.mrf.mxu0
      %v3667 = vadd.f32 %v3230, %v3666
      %3668 = vmatmul.bf16.gmra.mxu0 %v3539
      %v3669 = vpop.f32.mrf.mxu0
      %v3670 = vadd.f32 %v3233, %v3669
      %v3671 = vpop.f32.mrf.mxu0
      %v3672 = vadd.f32 %v3235, %v3671
      %3673 = vmatmul.bf16.gmra.mxu0 %v3541
      %v3674 = vpop.f32.mrf.mxu0
      %v3675 = vadd.f32 %v3238, %v3674
      %v3676 = vpop.f32.mrf.mxu0
      %v3677 = vadd.f32 %v3240, %v3676
      %3678 = vmatmul.bf16.gmra.mxu0 %v3543
      %v3679 = vpop.f32.mrf.mxu0
      %v3680 = vadd.f32 %v3243, %v3679
      %v3681 = vpop.f32.mrf.mxu0
      %v3682 = vadd.f32 %v3245, %v3681
      %3683 = vmatmul.bf16.gmra.mxu0 %v3545
      %v3684 = vpop.f32.mrf.mxu0
      %v3685 = vadd.f32 %v3248, %v3684
      %v3686 = vpop.f32.mrf.mxu0
      %v3687 = vadd.f32 %v3250, %v3686
      %3688 = vmatmul.bf16.gmra.mxu0 %v3547
      %v3689 = vpop.f32.mrf.mxu0
      %v3690 = vadd.f32 %v3253, %v3689
      %v3691 = vpop.f32.mrf.mxu0
      %v3692 = vadd.f32 %v3255, %v3691
      %3693 = vmatmul.bf16.gmra.mxu0 %v3549
      %v3694 = vpop.f32.mrf.mxu0
      %v3695 = vadd.f32 %v3258, %v3694
      %v3696 = vpop.f32.mrf.mxu0
      %v3697 = vadd.f32 %v3260, %v3696
      %3698 = vmatmul.bf16.gmra.mxu0 %v3551
      %v3699 = vpop.f32.mrf.mxu0
      %v3700 = vadd.f32 %v3263, %v3699
      %v3701 = vpop.f32.mrf.mxu0
      %v3702 = vadd.f32 %v3265, %v3701
      %3703 = vmatmul.bf16.gmra.mxu0 %v3553
      %v3704 = vpop.f32.mrf.mxu0
      %v3705 = vadd.f32 %v3268, %v3704
      %v3706 = vpop.f32.mrf.mxu0
      %v3707 = vadd.f32 %v3270, %v3706
      %3708 = vmatmul.bf16.gmra.mxu0 %v3555
      %v3709 = vpop.f32.mrf.mxu0
      %v3710 = vadd.f32 %v3273, %v3709
      %v3711 = vpop.f32.mrf.mxu0
      %v3712 = vadd.f32 %v3275, %v3711
      %3713 = vmatmul.bf16.gmra.mxu0 %v3557
      %v3714 = vpop.f32.mrf.mxu0
      %v3715 = vadd.f32 %v3278, %v3714
      %v3716 = vpop.f32.mrf.mxu0
      %v3717 = vadd.f32 %v3280, %v3716
      %3718 = vmatmul.bf16.gmra.mxu0 %v3559
      %v3719 = vpop.f32.mrf.mxu0
      %v3720 = vadd.f32 %v3283, %v3719
      %v3721 = vpop.f32.mrf.mxu0
      %v3722 = vadd.f32 %v3285, %v3721
      %3723 = vmatmul.bf16.gmra.mxu0 %v3561
      %v3724 = vpop.f32.mrf.mxu0
      %v3725 = vadd.f32 %v3288, %v3724
      %v3726 = vpop.f32.mrf.mxu0
      %v3727 = vadd.f32 %v3290, %v3726
      %3728 = vmatmul.bf16.gmra.mxu0 %v3563
      %v3729 = vpop.f32.mrf.mxu0
      %v3730 = vadd.f32 %v3293, %v3729
      %v3731 = vpop.f32.mrf.mxu0
      %v3732 = vadd.f32 %v3295, %v3731
      %3733 = vmatmul.bf16.gmra.mxu0 %v3565
      %v3734 = vpop.f32.mrf.mxu0
      %v3735 = vadd.f32 %v3298, %v3734
      %v3736 = vpop.f32.mrf.mxu0
      %v3737 = vadd.f32 %v3300, %v3736
      %3738 = vmatmul.bf16.gmra.mxu0 %v3567
      %v3739 = vpop.f32.mrf.mxu0
      %v3740 = vadd.f32 %v3303, %v3739
      %v3741 = vpop.f32.mrf.mxu0
      %v3742 = vadd.f32 %v3305, %v3741
      %3743 = vmatmul.bf16.gmra.mxu0 %v3569
      %v3744 = vpop.f32.mrf.mxu0
      %v3745 = vadd.f32 %v3308, %v3744
      %v3746 = vpop.f32.mrf.mxu0
      %v3747 = vadd.f32 %v3310, %v3746
      %3748 = vmatmul.bf16.gmra.mxu0 %v3571
      %v3749 = vpop.f32.mrf.mxu0
      %v3750 = vadd.f32 %v3313, %v3749
      %v3751 = vpop.f32.mrf.mxu0
      %v3752 = vadd.f32 %v3315, %v3751
      %3753 = vmatmul.bf16.gmra.mxu0 %v3573
      %v3754 = vpop.f32.mrf.mxu0
      %v3755 = vadd.f32 %v3318, %v3754
      %v3756 = vpop.f32.mrf.mxu0
      %v3757 = vadd.f32 %v3320, %v3756
      %3758 = vmatmul.bf16.gmra.mxu0 %v3575
      %v3759 = vpop.f32.mrf.mxu0
      %v3760 = vadd.f32 %v3323, %v3759
      %v3761 = vpop.f32.mrf.mxu0
      %v3762 = vadd.f32 %v3325, %v3761
      %3763 = vmatmul.bf16.gmra.mxu0 %v3577
      %v3764 = vpop.f32.mrf.mxu0
      %v3765 = vadd.f32 %v3328, %v3764
      %v3766 = vpop.f32.mrf.mxu0
      %v3767 = vadd.f32 %v3330, %v3766
      %3768 = vmatmul.bf16.gmra.mxu0 %v3579
      %v3769 = vpop.f32.mrf.mxu0
      %v3770 = vadd.f32 %v3333, %v3769
      %v3771 = vpop.f32.mrf.mxu0
      %v3772 = vadd.f32 %v3335, %v3771
      %3773 = vmatmul.bf16.gmra.mxu0 %v3581
      %v3774 = vpop.f32.mrf.mxu0
      %v3775 = vadd.f32 %v3338, %v3774
      %v3776 = vpop.f32.mrf.mxu0
      %v3777 = vadd.f32 %v3340, %v3776
      %3778 = vmatmul.bf16.gmra.mxu0 %v3583
      %v3779 = vpop.f32.mrf.mxu0
      %v3780 = vadd.f32 %v3343, %v3779
      %v3781 = vpop.f32.mrf.mxu0
      %v3782 = vadd.f32 %v3345, %v3781
      %3783 = vmatmul.bf16.gmra.mxu0 %v3585
      %v3784 = vpop.f32.mrf.mxu0
      %v3785 = vadd.f32 %v3348, %v3784
      %v3786 = vpop.f32.mrf.mxu0
      %v3787 = vadd.f32 %v3350, %v3786
      %3788 = vmatmul.bf16.gmra.mxu0 %v3587
      %v3789 = vpop.f32.mrf.mxu0
      %v3790 = vadd.f32 %v3353, %v3789
      %v3791 = vpop.f32.mrf.mxu0
      %v3792 = vadd.f32 %v3355, %v3791
      %3793 = vmatmul.bf16.gmra.mxu0 %v3589
      %v3794 = vpop.f32.mrf.mxu0
      %v3795 = vadd.f32 %v3358, %v3794
      %v3796 = vpop.f32.mrf.mxu0
      %v3797 = vadd.f32 %v3360, %v3796
      %3798 = vmatmul.bf16.gmra.mxu0 %v3591
      %v3799 = vpop.f32.mrf.mxu0
      %v3800 = vadd.f32 %v3363, %v3799
      %v3801 = vpop.f32.mrf.mxu0
      %v3802 = vadd.f32 %v3365, %v3801
      %3803 = vmatmul.bf16.gmra.mxu0 %v3593
      %v3804 = vpop.f32.mrf.mxu0
      %v3805 = vadd.f32 %v3368, %v3804
      %v3806 = vpop.f32.mrf.mxu0
      %v3807 = vadd.f32 %v3370, %v3806
      %3808 = vmatmul.bf16.gmra.mxu0 %v3595
      %v3809 = vpop.f32.mrf.mxu0
      %v3810 = vadd.f32 %v3373, %v3809
      %v3811 = vpop.f32.mrf.mxu0
      %v3812 = vadd.f32 %v3375, %v3811
      %3813 = vmatmul.bf16.gmra.mxu0 %v3597
      %v3814 = vpop.f32.mrf.mxu0
      %v3815 = vadd.f32 %v3378, %v3814
      %v3816 = vpop.f32.mrf.mxu0
      %v3817 = vadd.f32 %v3380, %v3816
      %3818 = vmatmul.bf16.gmra.mxu0 %v3599
      %v3819 = vpop.f32.mrf.mxu0
      %v3820 = vadd.f32 %v3383, %v3819
      %v3821 = vpop.f32.mrf.mxu0
      %v3822 = vadd.f32 %v3385, %v3821
      %3823 = vmatmul.bf16.gmra.mxu0 %v3601
      %v3824 = vpop.f32.mrf.mxu0
      %v3825 = vadd.f32 %v3388, %v3824
      %v3826 = vpop.f32.mrf.mxu0
      %v3827 = vadd.f32 %v3390, %v3826
      %3828 = vmatmul.bf16.gmra.mxu0 %v3603
      %v3829 = vpop.f32.mrf.mxu0
      %v3830 = vadd.f32 %v3393, %v3829
      %v3831 = vpop.f32.mrf.mxu0
      %v3832 = vadd.f32 %v3395, %v3831
      %3833 = vmatmul.bf16.gmra.mxu0 %v3605
      %v3834 = vpop.f32.mrf.mxu0
      %v3835 = vadd.f32 %v3398, %v3834
      %v3836 = vpop.f32.mrf.mxu0
      %v3837 = vadd.f32 %v3400, %v3836
      %3838 = vmatmul.bf16.gmra.mxu0 %v3607
      %v3839 = vpop.f32.mrf.mxu0
      %v3840 = vadd.f32 %v3403, %v3839
      %v3841 = vpop.f32.mrf.mxu0
      %v3842 = vadd.f32 %v3405, %v3841
      %3843 = vmatmul.bf16.gmra.mxu0 %v3609
      %v3844 = vpop.f32.mrf.mxu0
      %v3845 = vadd.f32 %v3408, %v3844
      %v3846 = vpop.f32.mrf.mxu0
      %v3847 = vadd.f32 %v3410, %v3846
      %3848 = vmatmul.bf16.gmra.mxu0 %v3611
      %v3849 = vpop.f32.mrf.mxu0
      %v3850 = vadd.f32 %v3413, %v3849
      %v3851 = vpop.f32.mrf.mxu0
      %v3852 = vadd.f32 %v3415, %v3851
      %3853 = vmatmul.bf16.gmra.mxu0 %v3613
      %v3854 = vpop.f32.mrf.mxu0
      %v3855 = vadd.f32 %v3418, %v3854
      %v3856 = vpop.f32.mrf.mxu0
      %v3857 = vadd.f32 %v3420, %v3856
      %3858 = vmatmul.bf16.gmra.mxu0 %v3615
      %v3859 = vpop.f32.mrf.mxu0
      %v3860 = vadd.f32 %v3423, %v3859
      %v3861 = vpop.f32.mrf.mxu0
      %v3862 = vadd.f32 %v3425, %v3861
      %3863 = vmatmul.bf16.gmra.mxu0 %v3617
      %v3864 = vpop.f32.mrf.mxu0
      %v3865 = vadd.f32 %v3428, %v3864
      %v3866 = vpop.f32.mrf.mxu0
      %v3867 = vadd.f32 %v3430, %v3866
      %3868 = vmatmul.bf16.gmra.mxu0 %v3619
      %v3869 = vpop.f32.mrf.mxu0
      %v3870 = vadd.f32 %v3433, %v3869
      %v3871 = vpop.f32.mrf.mxu0
      %v3872 = vadd.f32 %v3435, %v3871
      %3873 = vmatmul.bf16.gmra.mxu0 %v3621
      %v3874 = vpop.f32.mrf.mxu0
      %v3875 = vadd.f32 %v3438, %v3874
      %v3876 = vpop.f32.mrf.mxu0
      %v3877 = vadd.f32 %v3440, %v3876
      %3878 = vmatmul.bf16.gmra.mxu0 %v3623
      %v3879 = vpop.f32.mrf.mxu0
      %v3880 = vadd.f32 %v3443, %v3879
      %v3881 = vpop.f32.mrf.mxu0
      %v3882 = vadd.f32 %v3445, %v3881
      %3883 = vmatmul.bf16.gmra.mxu0 %v3625
      %v3884 = vpop.f32.mrf.mxu0
      %v3885 = vadd.f32 %v3448, %v3884
      %v3886 = vpop.f32.mrf.mxu0
      %v3887 = vadd.f32 %v3450, %v3886
      %3888 = vmatmul.bf16.gmra.mxu0 %v3627
      %v3889 = vpop.f32.mrf.mxu0
      %v3890 = vadd.f32 %v3453, %v3889
      %v3891 = vpop.f32.mrf.mxu0
      %v3892 = vadd.f32 %v3455, %v3891
      %3893 = vmatmul.bf16.gmra.mxu0 %v3629
      %v3894 = vpop.f32.mrf.mxu0
      %v3895 = vadd.f32 %v3458, %v3894
      %v3896 = vpop.f32.mrf.mxu0
      %v3897 = vadd.f32 %v3460, %v3896
      %3898 = vmatmul.bf16.gmra.mxu0 %v3631
      %v3899 = vpop.f32.mrf.mxu0
      %v3900 = vadd.f32 %v3463, %v3899
      %v3901 = vpop.f32.mrf.mxu0
      %v3902 = vadd.f32 %v3465, %v3901
      %3903 = vmatmul.bf16.gmra.mxu0 %v3633
      %v3904 = vpop.f32.mrf.mxu0
      %v3905 = vadd.f32 %v3468, %v3904
      %v3906 = vpop.f32.mrf.mxu0
      %v3907 = vadd.f32 %v3470, %v3906
      %3908 = vmatmul.bf16.gmra.mxu0 %v3635
      %v3909 = vpop.f32.mrf.mxu0
      %v3910 = vadd.f32 %v3473, %v3909
      %v3911 = vpop.f32.mrf.mxu0
      %v3912 = vadd.f32 %v3475, %v3911
      %3913 = vmatmul.bf16.gmra.mxu0 %v3637
      %v3914 = vpop.f32.mrf.mxu0
      %v3915 = vadd.f32 %v3478, %v3914
      %v3916 = vpop.f32.mrf.mxu0
      %v3917 = vadd.f32 %v3480, %v3916
      %3918 = vmatmul.bf16.gmra.mxu0 %v3639
      %v3919 = vpop.f32.mrf.mxu0
      %v3920 = vadd.f32 %v3483, %v3919
      %v3921 = vpop.f32.mrf.mxu0
      %v3922 = vadd.f32 %v3485, %v3921
      %3923 = vmatmul.bf16.gmra.mxu0 %v3641
      %v3924 = vpop.f32.mrf.mxu0
      %v3925 = vadd.f32 %v3488, %v3924
      %v3926 = vpop.f32.mrf.mxu0
      %v3927 = vadd.f32 %v3490, %v3926
      %3928 = vmatmul.bf16.gmra.mxu0 %v3643
      %v3929 = vpop.f32.mrf.mxu0
      %v3930 = vadd.f32 %v3493, %v3929
      %v3931 = vpop.f32.mrf.mxu0
      %v3932 = vadd.f32 %v3495, %v3931
      %3933 = vdwg.mxu0
      %s3934 = sadd.s32 %s202, 48
      %s3935 = sshra.s32 %s3934, 3
      %s3936 = sand.u32 %s3934, 7
      %s3937 = smul.addr %s3935, 4
      %s3938 = scalar_lea.vmem %s0, %s3937
      %v3939 = vld [vmem:[%s3938] sm:$0xf]
      %v3940 = vld [vmem:[%s3938 + $0x4] sm:$0xf]
      %v3941 = vld [vmem:[%s3938 + $0x8] sm:$0xf]
      %v3942 = vld [vmem:[%s3938 + $0xc] sm:$0xf]
      %v3943 = vld [vmem:[%s3938 + $0x10] sm:$0xf]
      %v3944 = vld [vmem:[%s3938 + $0x14] sm:$0xf]
      %v3945 = vld [vmem:[%s3938 + $0x18] sm:$0xf]
      %v3946 = vld [vmem:[%s3938 + $0x1c] sm:$0xf]
      %v3947 = vld [vmem:[%s3938 + $0x20] sm:$0xf]
      %v3948 = vld [vmem:[%s3938 + $0x24] sm:$0xf]
      %v3949 = vld [vmem:[%s3938 + $0x28] sm:$0xf]
      %v3950 = vld [vmem:[%s3938 + $0x2c] sm:$0xf]
      %v3951 = vld [vmem:[%s3938 + $0x30] sm:$0xf]
      %v3952 = vld [vmem:[%s3938 + $0x34] sm:$0xf]
      %v3953 = vld [vmem:[%s3938 + $0x38] sm:$0xf]
      %v3954 = vld [vmem:[%s3938 + $0x3c] sm:$0xf]
      %v3955 = vld [vmem:[%s3938 + $0x40] sm:$0xf]
      %v3956 = vld [vmem:[%s3938 + $0x44] sm:$0xf]
      %v3957 = vld [vmem:[%s3938 + $0x48] sm:$0xf]
      %v3958 = vld [vmem:[%s3938 + $0x4c] sm:$0xf]
      %v3959 = vld [vmem:[%s3938 + $0x50] sm:$0xf]
      %v3960 = vld [vmem:[%s3938 + $0x54] sm:$0xf]
      %v3961 = vld [vmem:[%s3938 + $0x58] sm:$0xf]
      %v3962 = vld [vmem:[%s3938 + $0x5c] sm:$0xf]
      %v3963 = vld [vmem:[%s3938 + $0x60] sm:$0xf]
      %v3964 = vld [vmem:[%s3938 + $0x64] sm:$0xf]
      %v3965 = vld [vmem:[%s3938 + $0x68] sm:$0xf]
      %v3966 = vld [vmem:[%s3938 + $0x6c] sm:$0xf]
      %v3967 = vld [vmem:[%s3938 + $0x70] sm:$0xf]
      %v3968 = vld [vmem:[%s3938 + $0x74] sm:$0xf]
      %v3969 = vld [vmem:[%s3938 + $0x78] sm:$0xf]
      %v3970 = vld [vmem:[%s3938 + $0x7c] sm:$0xf]
      %v3971 = vld [vmem:[%s3938 + $0x80] sm:$0xf]
      %v3972 = vld [vmem:[%s3938 + $0x84] sm:$0xf]
      %v3973 = vld [vmem:[%s3938 + $0x88] sm:$0xf]
      %v3974 = vld [vmem:[%s3938 + $0x8c] sm:$0xf]
      %v3975 = vld [vmem:[%s3938 + $0x90] sm:$0xf]
      %v3976 = vld [vmem:[%s3938 + $0x94] sm:$0xf]
      %v3977 = vld [vmem:[%s3938 + $0x98] sm:$0xf]
      %v3978 = vld [vmem:[%s3938 + $0x9c] sm:$0xf]
      %v3979 = vld [vmem:[%s3938 + $0xa0] sm:$0xf]
      %v3980 = vld [vmem:[%s3938 + $0xa4] sm:$0xf]
      %v3981 = vld [vmem:[%s3938 + $0xa8] sm:$0xf]
      %v3982 = vld [vmem:[%s3938 + $0xac] sm:$0xf]
      %v3983 = vld [vmem:[%s3938 + $0xb0] sm:$0xf]
      %v3984 = vld [vmem:[%s3938 + $0xb4] sm:$0xf]
      %v3985 = vld [vmem:[%s3938 + $0xb8] sm:$0xf]
      %v3986 = vld [vmem:[%s3938 + $0xbc] sm:$0xf]
      %v3987 = vld [vmem:[%s3938 + $0xc0] sm:$0xf]
      %v3988 = vld [vmem:[%s3938 + $0xc4] sm:$0xf]
      %v3989 = vld [vmem:[%s3938 + $0xc8] sm:$0xf]
      %v3990 = vld [vmem:[%s3938 + $0xcc] sm:$0xf]
      %v3991 = vld [vmem:[%s3938 + $0xd0] sm:$0xf]
      %v3992 = vld [vmem:[%s3938 + $0xd4] sm:$0xf]
      %v3993 = vld [vmem:[%s3938 + $0xd8] sm:$0xf]
      %v3994 = vld [vmem:[%s3938 + $0xdc] sm:$0xf]
      %v3995 = vld [vmem:[%s3938 + $0xe0] sm:$0xf]
      %v3996 = vld [vmem:[%s3938 + $0xe4] sm:$0xf]
      %v3997 = vld [vmem:[%s3938 + $0xe8] sm:$0xf]
      %v3998 = vld [vmem:[%s3938 + $0xec] sm:$0xf]
      %v3999 = vld [vmem:[%s3938 + $0xf0] sm:$0xf]
      %v4000 = vld [vmem:[%s3938 + $0xf4] sm:$0xf]
      %v4001 = vld [vmem:[%s3938 + $0xf8] sm:$0xf]
      %v4002 = vld [vmem:[%s3938 + $0xfc] sm:$0xf]
      %v4003 = vld [vmem:[%s3938 + $0x100] sm:$0xf]
      %v4004 = vld [vmem:[%s3938 + $0x104] sm:$0xf]
      %v4005 = vld [vmem:[%s3938 + $0x108] sm:$0xf]
      %v4006 = vld [vmem:[%s3938 + $0x10c] sm:$0xf]
      %v4007 = vld [vmem:[%s3938 + $0x110] sm:$0xf]
      %v4008 = vld [vmem:[%s3938 + $0x114] sm:$0xf]
      %v4009 = vld [vmem:[%s3938 + $0x118] sm:$0xf]
      %v4010 = vld [vmem:[%s3938 + $0x11c] sm:$0xf]
      %v4011 = vld [vmem:[%s3938 + $0x120] sm:$0xf]
      %v4012 = vld [vmem:[%s3938 + $0x124] sm:$0xf]
      %v4013 = vld [vmem:[%s3938 + $0x128] sm:$0xf]
      %v4014 = vld [vmem:[%s3938 + $0x12c] sm:$0xf]
      %v4015 = vld [vmem:[%s3938 + $0x130] sm:$0xf]
      %v4016 = vld [vmem:[%s3938 + $0x134] sm:$0xf]
      %v4017 = vld [vmem:[%s3938 + $0x138] sm:$0xf]
      %v4018 = vld [vmem:[%s3938 + $0x13c] sm:$0xf]
      %v4019 = vld [vmem:[%s3938 + $0x140] sm:$0xf]
      %v4020 = vld [vmem:[%s3938 + $0x144] sm:$0xf]
      %v4021 = vld [vmem:[%s3938 + $0x148] sm:$0xf]
      %v4022 = vld [vmem:[%s3938 + $0x14c] sm:$0xf]
      %v4023 = vld [vmem:[%s3938 + $0x150] sm:$0xf]
      %v4024 = vld [vmem:[%s3938 + $0x154] sm:$0xf]
      %v4025 = vld [vmem:[%s3938 + $0x158] sm:$0xf]
      %v4026 = vld [vmem:[%s3938 + $0x15c] sm:$0xf]
      %v4027 = vld [vmem:[%s3938 + $0x160] sm:$0xf]
      %v4028 = vld [vmem:[%s3938 + $0x164] sm:$0xf]
      %v4029 = vld [vmem:[%s3938 + $0x168] sm:$0xf]
      %v4030 = vld [vmem:[%s3938 + $0x16c] sm:$0xf]
      %v4031 = vld [vmem:[%s3938 + $0x170] sm:$0xf]
      %v4032 = vld [vmem:[%s3938 + $0x174] sm:$0xf]
      %v4033 = vld [vmem:[%s3938 + $0x178] sm:$0xf]
      %v4034 = vld [vmem:[%s3938 + $0x17c] sm:$0xf]
      %v4035 = vld [vmem:[%s3938 + $0x180] sm:$0xf]
      %v4036 = vld [vmem:[%s3938 + $0x184] sm:$0xf]
      %v4037 = vld [vmem:[%s3938 + $0x188] sm:$0xf]
      %v4038 = vld [vmem:[%s3938 + $0x18c] sm:$0xf]
      %v4039 = vld [vmem:[%s3938 + $0x190] sm:$0xf]
      %v4040 = vld [vmem:[%s3938 + $0x194] sm:$0xf]
      %v4041 = vld [vmem:[%s3938 + $0x198] sm:$0xf]
      %v4042 = vld [vmem:[%s3938 + $0x19c] sm:$0xf]
      %v4043 = vld [vmem:[%s3938 + $0x1a0] sm:$0xf]
      %v4044 = vld [vmem:[%s3938 + $0x1a4] sm:$0xf]
      %v4045 = vld [vmem:[%s3938 + $0x1a8] sm:$0xf]
      %v4046 = vld [vmem:[%s3938 + $0x1ac] sm:$0xf]
      %v4047 = vld [vmem:[%s3938 + $0x1b0] sm:$0xf]
      %v4048 = vld [vmem:[%s3938 + $0x1b4] sm:$0xf]
      %v4049 = vld [vmem:[%s3938 + $0x1b8] sm:$0xf]
      %v4050 = vld [vmem:[%s3938 + $0x1bc] sm:$0xf]
      %v4051 = vld [vmem:[%s3938 + $0x1c0] sm:$0xf]
      %v4164 = vunpack.c.l.b16 %v3939
      %v4165 = vunpack.c.l.b16 %v3940
      %v4166 = vunpack.c.l.b16 %v3941
      %v4167 = vunpack.c.l.b16 %v3942
      %v4168 = vunpack.c.l.b16 %v3943
      %v4169 = vunpack.c.l.b16 %v3944
      %v4170 = vunpack.c.l.b16 %v3945
      %v4171 = vunpack.c.l.b16 %v3946
      %v4172 = vunpack.c.l.b16 %v3947
      %v4173 = vunpack.c.l.b16 %v3948
      %v4174 = vunpack.c.l.b16 %v3949
      %v4175 = vunpack.c.l.b16 %v3950
      %v4176 = vunpack.c.l.b16 %v3951
      %v4177 = vunpack.c.l.b16 %v3952
      %v4178 = vunpack.c.l.b16 %v3953
      %v4179 = vunpack.c.l.b16 %v3954
      %v4180 = vunpack.c.l.b16 %v3955
      %v4181 = vunpack.c.l.b16 %v3956
      %v4182 = vunpack.c.l.b16 %v3957
      %v4183 = vunpack.c.l.b16 %v3958
      %v4184 = vunpack.c.l.b16 %v3959
      %v4185 = vunpack.c.l.b16 %v3960
      %v4186 = vunpack.c.l.b16 %v3961
      %v4187 = vunpack.c.l.b16 %v3962
      %v4188 = vunpack.c.l.b16 %v3963
      %v4189 = vunpack.c.l.b16 %v3964
      %v4190 = vunpack.c.l.b16 %v3965
      %v4191 = vunpack.c.l.b16 %v3966
      %v4192 = vunpack.c.l.b16 %v3967
      %v4193 = vunpack.c.l.b16 %v3968
      %v4194 = vunpack.c.l.b16 %v3969
      %v4195 = vunpack.c.l.b16 %v3970
      %v4196 = vunpack.c.l.b16 %v3971
      %v4197 = vunpack.c.l.b16 %v3972
      %v4198 = vunpack.c.l.b16 %v3973
      %v4199 = vunpack.c.l.b16 %v3974
      %v4200 = vunpack.c.l.b16 %v3975
      %v4201 = vunpack.c.l.b16 %v3976
      %v4202 = vunpack.c.l.b16 %v3977
      %v4203 = vunpack.c.l.b16 %v3978
      %v4204 = vunpack.c.l.b16 %v3979
      %v4205 = vunpack.c.l.b16 %v3980
      %v4206 = vunpack.c.l.b16 %v3981
      %v4207 = vunpack.c.l.b16 %v3982
      %v4208 = vunpack.c.l.b16 %v3983
      %v4209 = vunpack.c.l.b16 %v3984
      %v4210 = vunpack.c.l.b16 %v3985
      %v4211 = vunpack.c.l.b16 %v3986
      %v4212 = vunpack.c.l.b16 %v3987
      %v4213 = vunpack.c.l.b16 %v3988
      %v4214 = vunpack.c.l.b16 %v3989
      %v4215 = vunpack.c.l.b16 %v3990
      %v4216 = vunpack.c.l.b16 %v3991
      %v4217 = vunpack.c.l.b16 %v3992
      %v4218 = vunpack.c.l.b16 %v3993
      %v4219 = vunpack.c.l.b16 %v3994
      %v4220 = vunpack.c.l.b16 %v3995
      %v4221 = vunpack.c.l.b16 %v3996
      %v4222 = vunpack.c.l.b16 %v3997
      %v4223 = vunpack.c.l.b16 %v3998
      %v4224 = vunpack.c.l.b16 %v3999
      %v4225 = vunpack.c.l.b16 %v4000
      %v4226 = vunpack.c.l.b16 %v4001
      %v4227 = vunpack.c.l.b16 %v4002
      %v4228 = vunpack.c.l.b16 %v4003
      %v4229 = vunpack.c.l.b16 %v4004
      %v4230 = vunpack.c.l.b16 %v4005
      %v4231 = vunpack.c.l.b16 %v4006
      %v4232 = vunpack.c.l.b16 %v4007
      %v4233 = vunpack.c.l.b16 %v4008
      %v4234 = vunpack.c.l.b16 %v4009
      %v4235 = vunpack.c.l.b16 %v4010
      %v4236 = vunpack.c.l.b16 %v4011
      %v4237 = vunpack.c.l.b16 %v4012
      %v4238 = vunpack.c.l.b16 %v4013
      %v4239 = vunpack.c.l.b16 %v4014
      %v4240 = vunpack.c.l.b16 %v4015
      %v4241 = vunpack.c.l.b16 %v4016
      %v4242 = vunpack.c.l.b16 %v4017
      %v4243 = vunpack.c.l.b16 %v4018
      %v4244 = vunpack.c.l.b16 %v4019
      %v4245 = vunpack.c.l.b16 %v4020
      %v4246 = vunpack.c.l.b16 %v4021
      %v4247 = vunpack.c.l.b16 %v4022
      %v4248 = vunpack.c.l.b16 %v4023
      %v4249 = vunpack.c.l.b16 %v4024
      %v4250 = vunpack.c.l.b16 %v4025
      %v4251 = vunpack.c.l.b16 %v4026
      %v4252 = vunpack.c.l.b16 %v4027
      %v4253 = vunpack.c.l.b16 %v4028
      %v4254 = vunpack.c.l.b16 %v4029
      %v4255 = vunpack.c.l.b16 %v4030
      %v4256 = vunpack.c.l.b16 %v4031
      %v4257 = vunpack.c.l.b16 %v4032
      %v4258 = vunpack.c.l.b16 %v4033
      %v4259 = vunpack.c.l.b16 %v4034
      %v4260 = vunpack.c.l.b16 %v4035
      %v4261 = vunpack.c.l.b16 %v4036
      %v4262 = vunpack.c.l.b16 %v4037
      %v4263 = vunpack.c.l.b16 %v4038
      %v4264 = vunpack.c.l.b16 %v4039
      %v4265 = vunpack.c.l.b16 %v4040
      %v4266 = vunpack.c.l.b16 %v4041
      %v4267 = vunpack.c.l.b16 %v4042
      %v4268 = vunpack.c.l.b16 %v4043
      %v4269 = vunpack.c.l.b16 %v4044
      %v4270 = vunpack.c.l.b16 %v4045
      %v4271 = vunpack.c.l.b16 %v4046
      %v4272 = vunpack.c.l.b16 %v4047
      %v4273 = vunpack.c.l.b16 %v4048
      %v4274 = vunpack.c.l.b16 %v4049
      %v4275 = vunpack.c.l.b16 %v4050
      %v4276 = vpack.c.b16 %v4165, %v4164
      %v4277 = vpack.c.b16 %v4167, %v4166
      %v4278 = vpack.c.b16 %v4169, %v4168
      %v4279 = vpack.c.b16 %v4171, %v4170
      %v4280 = vpack.c.b16 %v4173, %v4172
      %v4281 = vpack.c.b16 %v4175, %v4174
      %v4282 = vpack.c.b16 %v4177, %v4176
      %v4283 = vpack.c.b16 %v4179, %v4178
      %v4284 = vpack.c.b16 %v4181, %v4180
      %v4285 = vpack.c.b16 %v4183, %v4182
      %v4286 = vpack.c.b16 %v4185, %v4184
      %v4287 = vpack.c.b16 %v4187, %v4186
      %v4288 = vpack.c.b16 %v4189, %v4188
      %v4289 = vpack.c.b16 %v4191, %v4190
      %v4290 = vpack.c.b16 %v4193, %v4192
      %v4291 = vpack.c.b16 %v4195, %v4194
      %v4292 = vpack.c.b16 %v4197, %v4196
      %v4293 = vpack.c.b16 %v4199, %v4198
      %v4294 = vpack.c.b16 %v4201, %v4200
      %v4295 = vpack.c.b16 %v4203, %v4202
      %v4296 = vpack.c.b16 %v4205, %v4204
      %v4297 = vpack.c.b16 %v4207, %v4206
      %v4298 = vpack.c.b16 %v4209, %v4208
      %v4299 = vpack.c.b16 %v4211, %v4210
      %v4300 = vpack.c.b16 %v4213, %v4212
      %v4301 = vpack.c.b16 %v4215, %v4214
      %v4302 = vpack.c.b16 %v4217, %v4216
      %v4303 = vpack.c.b16 %v4219, %v4218
      %v4304 = vpack.c.b16 %v4221, %v4220
      %v4305 = vpack.c.b16 %v4223, %v4222
      %v4306 = vpack.c.b16 %v4225, %v4224
      %v4307 = vpack.c.b16 %v4227, %v4226
      %v4308 = vpack.c.b16 %v4229, %v4228
      %v4309 = vpack.c.b16 %v4231, %v4230
      %v4310 = vpack.c.b16 %v4233, %v4232
      %v4311 = vpack.c.b16 %v4235, %v4234
      %v4312 = vpack.c.b16 %v4237, %v4236
      %v4313 = vpack.c.b16 %v4239, %v4238
      %v4314 = vpack.c.b16 %v4241, %v4240
      %v4315 = vpack.c.b16 %v4243, %v4242
      %v4316 = vpack.c.b16 %v4245, %v4244
      %v4317 = vpack.c.b16 %v4247, %v4246
      %v4318 = vpack.c.b16 %v4249, %v4248
      %v4319 = vpack.c.b16 %v4251, %v4250
      %v4320 = vpack.c.b16 %v4253, %v4252
      %v4321 = vpack.c.b16 %v4255, %v4254
      %v4322 = vpack.c.b16 %v4257, %v4256
      %v4323 = vpack.c.b16 %v4259, %v4258
      %v4324 = vpack.c.b16 %v4261, %v4260
      %v4325 = vpack.c.b16 %v4263, %v4262
      %v4326 = vpack.c.b16 %v4265, %v4264
      %v4327 = vpack.c.b16 %v4267, %v4266
      %v4328 = vpack.c.b16 %v4269, %v4268
      %v4329 = vpack.c.b16 %v4271, %v4270
      %v4330 = vpack.c.b16 %v4273, %v4272
      %v4331 = vpack.c.b16 %v4275, %v4274
      %v4333 = vunpack.c.l.b16 %v4051
      %v4334 = vpack.c.b16 %v4333, %v4333
      %v4336 = vshrl.u32 %v4276, 16
      %v4338 = vshll.u32 %v4276, 16
      %v4340 = vrot.slane %v4338, 1
      %v4341 = vor.u32 %v4336, %v4340
      %v4343 = vshll.u32 %v4277, 16
      %v4345 = vrot.slane %v4343, 1
      %v4346 = vsel %vm603, %v4341, %v4345
      %v4347 = vshrl.u32 %v4277, 16
      %v4349 = vor.u32 %v4347, %v4345
      %v4351 = vshll.u32 %v4278, 16
      %v4353 = vrot.slane %v4351, 1
      %v4354 = vsel %vm603, %v4349, %v4353
      %v4355 = vshrl.u32 %v4278, 16
      %v4357 = vor.u32 %v4355, %v4353
      %v4359 = vshll.u32 %v4279, 16
      %v4361 = vrot.slane %v4359, 1
      %v4362 = vsel %vm603, %v4357, %v4361
      %v4363 = vshrl.u32 %v4279, 16
      %v4365 = vor.u32 %v4363, %v4361
      %v4367 = vshll.u32 %v4280, 16
      %v4369 = vrot.slane %v4367, 1
      %v4370 = vsel %vm603, %v4365, %v4369
      %v4371 = vshrl.u32 %v4280, 16
      %v4373 = vor.u32 %v4371, %v4369
      %v4375 = vshll.u32 %v4281, 16
      %v4377 = vrot.slane %v4375, 1
      %v4378 = vsel %vm603, %v4373, %v4377
      %v4379 = vshrl.u32 %v4281, 16
      %v4381 = vor.u32 %v4379, %v4377
      %v4383 = vshll.u32 %v4282, 16
      %v4385 = vrot.slane %v4383, 1
      %v4386 = vsel %vm603, %v4381, %v4385
      %v4387 = vshrl.u32 %v4282, 16
      %v4389 = vor.u32 %v4387, %v4385
      %v4391 = vshll.u32 %v4283, 16
      %v4393 = vrot.slane %v4391, 1
      %v4394 = vsel %vm603, %v4389, %v4393
      %v4395 = vshrl.u32 %v4283, 16
      %v4397 = vor.u32 %v4395, %v4393
      %v4399 = vshll.u32 %v4284, 16
      %v4401 = vrot.slane %v4399, 1
      %v4402 = vsel %vm603, %v4397, %v4401
      %v4403 = vshrl.u32 %v4284, 16
      %v4405 = vor.u32 %v4403, %v4401
      %v4407 = vshll.u32 %v4285, 16
      %v4409 = vrot.slane %v4407, 1
      %v4410 = vsel %vm603, %v4405, %v4409
      %v4411 = vshrl.u32 %v4285, 16
      %v4413 = vor.u32 %v4411, %v4409
      %v4415 = vshll.u32 %v4286, 16
      %v4417 = vrot.slane %v4415, 1
      %v4418 = vsel %vm603, %v4413, %v4417
      %v4419 = vshrl.u32 %v4286, 16
      %v4421 = vor.u32 %v4419, %v4417
      %v4423 = vshll.u32 %v4287, 16
      %v4425 = vrot.slane %v4423, 1
      %v4426 = vsel %vm603, %v4421, %v4425
      %v4427 = vshrl.u32 %v4287, 16
      %v4429 = vor.u32 %v4427, %v4425
      %v4431 = vshll.u32 %v4288, 16
      %v4433 = vrot.slane %v4431, 1
      %v4434 = vsel %vm603, %v4429, %v4433
      %v4435 = vshrl.u32 %v4288, 16
      %v4437 = vor.u32 %v4435, %v4433
      %v4439 = vshll.u32 %v4289, 16
      %v4441 = vrot.slane %v4439, 1
      %v4442 = vsel %vm603, %v4437, %v4441
      %v4443 = vshrl.u32 %v4289, 16
      %v4445 = vor.u32 %v4443, %v4441
      %v4447 = vshll.u32 %v4290, 16
      %v4449 = vrot.slane %v4447, 1
      %v4450 = vsel %vm603, %v4445, %v4449
      %v4451 = vshrl.u32 %v4290, 16
      %v4453 = vor.u32 %v4451, %v4449
      %v4455 = vshll.u32 %v4291, 16
      %v4457 = vrot.slane %v4455, 1
      %v4458 = vsel %vm603, %v4453, %v4457
      %v4459 = vshrl.u32 %v4291, 16
      %v4461 = vor.u32 %v4459, %v4457
      %v4463 = vshll.u32 %v4292, 16
      %v4465 = vrot.slane %v4463, 1
      %v4466 = vsel %vm603, %v4461, %v4465
      %v4467 = vshrl.u32 %v4292, 16
      %v4469 = vor.u32 %v4467, %v4465
      %v4471 = vshll.u32 %v4293, 16
      %v4473 = vrot.slane %v4471, 1
      %v4474 = vsel %vm603, %v4469, %v4473
      %v4475 = vshrl.u32 %v4293, 16
      %v4477 = vor.u32 %v4475, %v4473
      %v4479 = vshll.u32 %v4294, 16
      %v4481 = vrot.slane %v4479, 1
      %v4482 = vsel %vm603, %v4477, %v4481
      %v4483 = vshrl.u32 %v4294, 16
      %v4485 = vor.u32 %v4483, %v4481
      %v4487 = vshll.u32 %v4295, 16
      %v4489 = vrot.slane %v4487, 1
      %v4490 = vsel %vm603, %v4485, %v4489
      %v4491 = vshrl.u32 %v4295, 16
      %v4493 = vor.u32 %v4491, %v4489
      %v4495 = vshll.u32 %v4296, 16
      %v4497 = vrot.slane %v4495, 1
      %v4498 = vsel %vm603, %v4493, %v4497
      %v4499 = vshrl.u32 %v4296, 16
      %v4501 = vor.u32 %v4499, %v4497
      %v4503 = vshll.u32 %v4297, 16
      %v4505 = vrot.slane %v4503, 1
      %v4506 = vsel %vm603, %v4501, %v4505
      %v4507 = vshrl.u32 %v4297, 16
      %v4509 = vor.u32 %v4507, %v4505
      %v4511 = vshll.u32 %v4298, 16
      %v4513 = vrot.slane %v4511, 1
      %v4514 = vsel %vm603, %v4509, %v4513
      %v4515 = vshrl.u32 %v4298, 16
      %v4517 = vor.u32 %v4515, %v4513
      %v4519 = vshll.u32 %v4299, 16
      %v4521 = vrot.slane %v4519, 1
      %v4522 = vsel %vm603, %v4517, %v4521
      %v4523 = vshrl.u32 %v4299, 16
      %v4525 = vor.u32 %v4523, %v4521
      %v4527 = vshll.u32 %v4300, 16
      %v4529 = vrot.slane %v4527, 1
      %v4530 = vsel %vm603, %v4525, %v4529
      %v4531 = vshrl.u32 %v4300, 16
      %v4533 = vor.u32 %v4531, %v4529
      %v4535 = vshll.u32 %v4301, 16
      %v4537 = vrot.slane %v4535, 1
      %v4538 = vsel %vm603, %v4533, %v4537
      %v4539 = vshrl.u32 %v4301, 16
      %v4541 = vor.u32 %v4539, %v4537
      %v4543 = vshll.u32 %v4302, 16
      %v4545 = vrot.slane %v4543, 1
      %v4546 = vsel %vm603, %v4541, %v4545
      %v4547 = vshrl.u32 %v4302, 16
      %v4549 = vor.u32 %v4547, %v4545
      %v4551 = vshll.u32 %v4303, 16
      %v4553 = vrot.slane %v4551, 1
      %v4554 = vsel %vm603, %v4549, %v4553
      %v4555 = vshrl.u32 %v4303, 16
      %v4557 = vor.u32 %v4555, %v4553
      %v4559 = vshll.u32 %v4304, 16
      %v4561 = vrot.slane %v4559, 1
      %v4562 = vsel %vm603, %v4557, %v4561
      %v4563 = vshrl.u32 %v4304, 16
      %v4565 = vor.u32 %v4563, %v4561
      %v4567 = vshll.u32 %v4305, 16
      %v4569 = vrot.slane %v4567, 1
      %v4570 = vsel %vm603, %v4565, %v4569
      %v4571 = vshrl.u32 %v4305, 16
      %v4573 = vor.u32 %v4571, %v4569
      %v4575 = vshll.u32 %v4306, 16
      %v4577 = vrot.slane %v4575, 1
      %v4578 = vsel %vm603, %v4573, %v4577
      %v4579 = vshrl.u32 %v4306, 16
      %v4581 = vor.u32 %v4579, %v4577
      %v4583 = vshll.u32 %v4307, 16
      %v4585 = vrot.slane %v4583, 1
      %v4586 = vsel %vm603, %v4581, %v4585
      %v4587 = vshrl.u32 %v4307, 16
      %v4589 = vor.u32 %v4587, %v4585
      %v4591 = vshll.u32 %v4308, 16
      %v4593 = vrot.slane %v4591, 1
      %v4594 = vsel %vm603, %v4589, %v4593
      %v4595 = vshrl.u32 %v4308, 16
      %v4597 = vor.u32 %v4595, %v4593
      %v4599 = vshll.u32 %v4309, 16
      %v4601 = vrot.slane %v4599, 1
      %v4602 = vsel %vm603, %v4597, %v4601
      %v4603 = vshrl.u32 %v4309, 16
      %v4605 = vor.u32 %v4603, %v4601
      %v4607 = vshll.u32 %v4310, 16
      %v4609 = vrot.slane %v4607, 1
      %v4610 = vsel %vm603, %v4605, %v4609
      %v4611 = vshrl.u32 %v4310, 16
      %v4613 = vor.u32 %v4611, %v4609
      %v4615 = vshll.u32 %v4311, 16
      %v4617 = vrot.slane %v4615, 1
      %v4618 = vsel %vm603, %v4613, %v4617
      %v4619 = vshrl.u32 %v4311, 16
      %v4621 = vor.u32 %v4619, %v4617
      %v4623 = vshll.u32 %v4312, 16
      %v4625 = vrot.slane %v4623, 1
      %v4626 = vsel %vm603, %v4621, %v4625
      %v4627 = vshrl.u32 %v4312, 16
      %v4629 = vor.u32 %v4627, %v4625
      %v4631 = vshll.u32 %v4313, 16
      %v4633 = vrot.slane %v4631, 1
      %v4634 = vsel %vm603, %v4629, %v4633
      %v4635 = vshrl.u32 %v4313, 16
      %v4637 = vor.u32 %v4635, %v4633
      %v4639 = vshll.u32 %v4314, 16
      %v4641 = vrot.slane %v4639, 1
      %v4642 = vsel %vm603, %v4637, %v4641
      %v4643 = vshrl.u32 %v4314, 16
      %v4645 = vor.u32 %v4643, %v4641
      %v4647 = vshll.u32 %v4315, 16
      %v4649 = vrot.slane %v4647, 1
      %v4650 = vsel %vm603, %v4645, %v4649
      %v4651 = vshrl.u32 %v4315, 16
      %v4653 = vor.u32 %v4651, %v4649
      %v4655 = vshll.u32 %v4316, 16
      %v4657 = vrot.slane %v4655, 1
      %v4658 = vsel %vm603, %v4653, %v4657
      %v4659 = vshrl.u32 %v4316, 16
      %v4661 = vor.u32 %v4659, %v4657
      %v4663 = vshll.u32 %v4317, 16
      %v4665 = vrot.slane %v4663, 1
      %v4666 = vsel %vm603, %v4661, %v4665
      %v4667 = vshrl.u32 %v4317, 16
      %v4669 = vor.u32 %v4667, %v4665
      %v4671 = vshll.u32 %v4318, 16
      %v4673 = vrot.slane %v4671, 1
      %v4674 = vsel %vm603, %v4669, %v4673
      %v4675 = vshrl.u32 %v4318, 16
      %v4677 = vor.u32 %v4675, %v4673
      %v4679 = vshll.u32 %v4319, 16
      %v4681 = vrot.slane %v4679, 1
      %v4682 = vsel %vm603, %v4677, %v4681
      %v4683 = vshrl.u32 %v4319, 16
      %v4685 = vor.u32 %v4683, %v4681
      %v4687 = vshll.u32 %v4320, 16
      %v4689 = vrot.slane %v4687, 1
      %v4690 = vsel %vm603, %v4685, %v4689
      %v4691 = vshrl.u32 %v4320, 16
      %v4693 = vor.u32 %v4691, %v4689
      %v4695 = vshll.u32 %v4321, 16
      %v4697 = vrot.slane %v4695, 1
      %v4698 = vsel %vm603, %v4693, %v4697
      %v4699 = vshrl.u32 %v4321, 16
      %v4701 = vor.u32 %v4699, %v4697
      %v4703 = vshll.u32 %v4322, 16
      %v4705 = vrot.slane %v4703, 1
      %v4706 = vsel %vm603, %v4701, %v4705
      %v4707 = vshrl.u32 %v4322, 16
      %v4709 = vor.u32 %v4707, %v4705
      %v4711 = vshll.u32 %v4323, 16
      %v4713 = vrot.slane %v4711, 1
      %v4714 = vsel %vm603, %v4709, %v4713
      %v4715 = vshrl.u32 %v4323, 16
      %v4717 = vor.u32 %v4715, %v4713
      %v4719 = vshll.u32 %v4324, 16
      %v4721 = vrot.slane %v4719, 1
      %v4722 = vsel %vm603, %v4717, %v4721
      %v4723 = vshrl.u32 %v4324, 16
      %v4725 = vor.u32 %v4723, %v4721
      %v4727 = vshll.u32 %v4325, 16
      %v4729 = vrot.slane %v4727, 1
      %v4730 = vsel %vm603, %v4725, %v4729
      %v4731 = vshrl.u32 %v4325, 16
      %v4733 = vor.u32 %v4731, %v4729
      %v4735 = vshll.u32 %v4326, 16
      %v4737 = vrot.slane %v4735, 1
      %v4738 = vsel %vm603, %v4733, %v4737
      %v4739 = vshrl.u32 %v4326, 16
      %v4741 = vor.u32 %v4739, %v4737
      %v4743 = vshll.u32 %v4327, 16
      %v4745 = vrot.slane %v4743, 1
      %v4746 = vsel %vm603, %v4741, %v4745
      %v4747 = vshrl.u32 %v4327, 16
      %v4749 = vor.u32 %v4747, %v4745
      %v4751 = vshll.u32 %v4328, 16
      %v4753 = vrot.slane %v4751, 1
      %v4754 = vsel %vm603, %v4749, %v4753
      %v4755 = vshrl.u32 %v4328, 16
      %v4757 = vor.u32 %v4755, %v4753
      %v4759 = vshll.u32 %v4329, 16
      %v4761 = vrot.slane %v4759, 1
      %v4762 = vsel %vm603, %v4757, %v4761
      %v4763 = vshrl.u32 %v4329, 16
      %v4765 = vor.u32 %v4763, %v4761
      %v4767 = vshll.u32 %v4330, 16
      %v4769 = vrot.slane %v4767, 1
      %v4770 = vsel %vm603, %v4765, %v4769
      %v4771 = vshrl.u32 %v4330, 16
      %v4773 = vor.u32 %v4771, %v4769
      %v4775 = vshll.u32 %v4331, 16
      %v4777 = vrot.slane %v4775, 1
      %v4778 = vsel %vm603, %v4773, %v4777
      %v4779 = vshrl.u32 %v4331, 16
      %v4781 = vor.u32 %v4779, %v4777
      %v4783 = vshll.u32 %v4334, 16
      %v4785 = vrot.slane %v4783, 1
      %v4786 = vsel %vm603, %v4781, %v4785
      %4787 = vrot.lane.b32.xlu0 %v4346, 32
      %v4788 = vpop.permute.xlu0 %4787
      %4789 = vrot.lane.b32.xlu0 %v4354, 32
      %v4790 = vpop.permute.xlu0 %4789
      %4791 = vrot.lane.b32.xlu0 %v4362, 32
      %v4792 = vpop.permute.xlu0 %4791
      %4793 = vrot.lane.b32.xlu0 %v4370, 32
      %v4794 = vpop.permute.xlu0 %4793
      %4795 = vrot.lane.b32.xlu0 %v4378, 32
      %v4796 = vpop.permute.xlu0 %4795
      %4797 = vrot.lane.b32.xlu0 %v4386, 32
      %v4798 = vpop.permute.xlu0 %4797
      %4799 = vrot.lane.b32.xlu0 %v4394, 32
      %v4800 = vpop.permute.xlu0 %4799
      %4801 = vrot.lane.b32.xlu0 %v4402, 32
      %v4802 = vpop.permute.xlu0 %4801
      %4803 = vrot.lane.b32.xlu0 %v4410, 32
      %v4804 = vpop.permute.xlu0 %4803
      %4805 = vrot.lane.b32.xlu0 %v4418, 32
      %v4806 = vpop.permute.xlu0 %4805
      %4807 = vrot.lane.b32.xlu0 %v4426, 32
      %v4808 = vpop.permute.xlu0 %4807
      %4809 = vrot.lane.b32.xlu0 %v4434, 32
      %v4810 = vpop.permute.xlu0 %4809
      %4811 = vrot.lane.b32.xlu0 %v4442, 32
      %v4812 = vpop.permute.xlu0 %4811
      %4813 = vrot.lane.b32.xlu0 %v4450, 32
      %v4814 = vpop.permute.xlu0 %4813
      %4815 = vrot.lane.b32.xlu0 %v4458, 32
      %v4816 = vpop.permute.xlu0 %4815
      %4817 = vrot.lane.b32.xlu0 %v4466, 32
      %v4818 = vpop.permute.xlu0 %4817
      %4819 = vrot.lane.b32.xlu0 %v4474, 32
      %v4820 = vpop.permute.xlu0 %4819
      %4821 = vrot.lane.b32.xlu0 %v4482, 32
      %v4822 = vpop.permute.xlu0 %4821
      %4823 = vrot.lane.b32.xlu0 %v4490, 32
      %v4824 = vpop.permute.xlu0 %4823
      %4825 = vrot.lane.b32.xlu0 %v4498, 32
      %v4826 = vpop.permute.xlu0 %4825
      %4827 = vrot.lane.b32.xlu0 %v4506, 32
      %v4828 = vpop.permute.xlu0 %4827
      %4829 = vrot.lane.b32.xlu0 %v4514, 32
      %v4830 = vpop.permute.xlu0 %4829
      %4831 = vrot.lane.b32.xlu0 %v4522, 32
      %v4832 = vpop.permute.xlu0 %4831
      %4833 = vrot.lane.b32.xlu0 %v4530, 32
      %v4834 = vpop.permute.xlu0 %4833
      %4835 = vrot.lane.b32.xlu0 %v4538, 32
      %v4836 = vpop.permute.xlu0 %4835
      %4837 = vrot.lane.b32.xlu0 %v4546, 32
      %v4838 = vpop.permute.xlu0 %4837
      %4839 = vrot.lane.b32.xlu0 %v4554, 32
      %v4840 = vpop.permute.xlu0 %4839
      %4841 = vrot.lane.b32.xlu0 %v4562, 32
      %v4842 = vpop.permute.xlu0 %4841
      %4843 = vrot.lane.b32.xlu0 %v4570, 32
      %v4844 = vpop.permute.xlu0 %4843
      %4845 = vrot.lane.b32.xlu0 %v4578, 32
      %v4846 = vpop.permute.xlu0 %4845
      %4847 = vrot.lane.b32.xlu0 %v4586, 32
      %v4848 = vpop.permute.xlu0 %4847
      %4849 = vrot.lane.b32.xlu0 %v4594, 32
      %v4850 = vpop.permute.xlu0 %4849
      %4851 = vrot.lane.b32.xlu0 %v4602, 32
      %v4852 = vpop.permute.xlu0 %4851
      %4853 = vrot.lane.b32.xlu0 %v4610, 32
      %v4854 = vpop.permute.xlu0 %4853
      %4855 = vrot.lane.b32.xlu0 %v4618, 32
      %v4856 = vpop.permute.xlu0 %4855
      %4857 = vrot.lane.b32.xlu0 %v4626, 32
      %v4858 = vpop.permute.xlu0 %4857
      %4859 = vrot.lane.b32.xlu0 %v4634, 32
      %v4860 = vpop.permute.xlu0 %4859
      %4861 = vrot.lane.b32.xlu0 %v4642, 32
      %v4862 = vpop.permute.xlu0 %4861
      %4863 = vrot.lane.b32.xlu0 %v4650, 32
      %v4864 = vpop.permute.xlu0 %4863
      %4865 = vrot.lane.b32.xlu0 %v4658, 32
      %v4866 = vpop.permute.xlu0 %4865
      %4867 = vrot.lane.b32.xlu0 %v4666, 32
      %v4868 = vpop.permute.xlu0 %4867
      %4869 = vrot.lane.b32.xlu0 %v4674, 32
      %v4870 = vpop.permute.xlu0 %4869
      %4871 = vrot.lane.b32.xlu0 %v4682, 32
      %v4872 = vpop.permute.xlu0 %4871
      %4873 = vrot.lane.b32.xlu0 %v4690, 32
      %v4874 = vpop.permute.xlu0 %4873
      %4875 = vrot.lane.b32.xlu0 %v4698, 32
      %v4876 = vpop.permute.xlu0 %4875
      %4877 = vrot.lane.b32.xlu0 %v4706, 32
      %v4878 = vpop.permute.xlu0 %4877
      %4879 = vrot.lane.b32.xlu0 %v4714, 32
      %v4880 = vpop.permute.xlu0 %4879
      %4881 = vrot.lane.b32.xlu0 %v4722, 32
      %v4882 = vpop.permute.xlu0 %4881
      %4883 = vrot.lane.b32.xlu0 %v4730, 32
      %v4884 = vpop.permute.xlu0 %4883
      %4885 = vrot.lane.b32.xlu0 %v4738, 32
      %v4886 = vpop.permute.xlu0 %4885
      %4887 = vrot.lane.b32.xlu0 %v4746, 32
      %v4888 = vpop.permute.xlu0 %4887
      %4889 = vrot.lane.b32.xlu0 %v4754, 32
      %v4890 = vpop.permute.xlu0 %4889
      %4891 = vrot.lane.b32.xlu0 %v4762, 32
      %v4892 = vpop.permute.xlu0 %4891
      %4893 = vrot.lane.b32.xlu0 %v4770, 32
      %v4894 = vpop.permute.xlu0 %4893
      %4895 = vrot.lane.b32.xlu0 %v4778, 32
      %v4896 = vpop.permute.xlu0 %4895
      %4897 = vrot.lane.b32.xlu0 %v4786, 32
      %v4898 = vpop.permute.xlu0 %4897
      %v4899 = vrot.slane %v4276, 1
      %v4900 = vrot.slane %v4277, 1
      %v4901 = vsel %vm1168, %v4899, %v4900
      %v4902 = vrot.slane %v4278, 1
      %v4903 = vsel %vm1168, %v4900, %v4902
      %v4904 = vrot.slane %v4279, 1
      %v4905 = vsel %vm1168, %v4902, %v4904
      %v4906 = vrot.slane %v4280, 1
      %v4907 = vsel %vm1168, %v4904, %v4906
      %v4908 = vrot.slane %v4281, 1
      %v4909 = vsel %vm1168, %v4906, %v4908
      %v4910 = vrot.slane %v4282, 1
      %v4911 = vsel %vm1168, %v4908, %v4910
      %v4912 = vrot.slane %v4283, 1
      %v4913 = vsel %vm1168, %v4910, %v4912
      %v4914 = vrot.slane %v4284, 1
      %v4915 = vsel %vm1168, %v4912, %v4914
      %v4916 = vrot.slane %v4285, 1
      %v4917 = vsel %vm1168, %v4914, %v4916
      %v4918 = vrot.slane %v4286, 1
      %v4919 = vsel %vm1168, %v4916, %v4918
      %v4920 = vrot.slane %v4287, 1
      %v4921 = vsel %vm1168, %v4918, %v4920
      %v4922 = vrot.slane %v4288, 1
      %v4923 = vsel %vm1168, %v4920, %v4922
      %v4924 = vrot.slane %v4289, 1
      %v4925 = vsel %vm1168, %v4922, %v4924
      %v4926 = vrot.slane %v4290, 1
      %v4927 = vsel %vm1168, %v4924, %v4926
      %v4928 = vrot.slane %v4291, 1
      %v4929 = vsel %vm1168, %v4926, %v4928
      %v4930 = vrot.slane %v4292, 1
      %v4931 = vsel %vm1168, %v4928, %v4930
      %v4932 = vrot.slane %v4293, 1
      %v4933 = vsel %vm1168, %v4930, %v4932
      %v4934 = vrot.slane %v4294, 1
      %v4935 = vsel %vm1168, %v4932, %v4934
      %v4936 = vrot.slane %v4295, 1
      %v4937 = vsel %vm1168, %v4934, %v4936
      %v4938 = vrot.slane %v4296, 1
      %v4939 = vsel %vm1168, %v4936, %v4938
      %v4940 = vrot.slane %v4297, 1
      %v4941 = vsel %vm1168, %v4938, %v4940
      %v4942 = vrot.slane %v4298, 1
      %v4943 = vsel %vm1168, %v4940, %v4942
      %v4944 = vrot.slane %v4299, 1
      %v4945 = vsel %vm1168, %v4942, %v4944
      %v4946 = vrot.slane %v4300, 1
      %v4947 = vsel %vm1168, %v4944, %v4946
      %v4948 = vrot.slane %v4301, 1
      %v4949 = vsel %vm1168, %v4946, %v4948
      %v4950 = vrot.slane %v4302, 1
      %v4951 = vsel %vm1168, %v4948, %v4950
      %v4952 = vrot.slane %v4303, 1
      %v4953 = vsel %vm1168, %v4950, %v4952
      %v4954 = vrot.slane %v4304, 1
      %v4955 = vsel %vm1168, %v4952, %v4954
      %v4956 = vrot.slane %v4305, 1
      %v4957 = vsel %vm1168, %v4954, %v4956
      %v4958 = vrot.slane %v4306, 1
      %v4959 = vsel %vm1168, %v4956, %v4958
      %v4960 = vrot.slane %v4307, 1
      %v4961 = vsel %vm1168, %v4958, %v4960
      %v4962 = vrot.slane %v4308, 1
      %v4963 = vsel %vm1168, %v4960, %v4962
      %v4964 = vrot.slane %v4309, 1
      %v4965 = vsel %vm1168, %v4962, %v4964
      %v4966 = vrot.slane %v4310, 1
      %v4967 = vsel %vm1168, %v4964, %v4966
      %v4968 = vrot.slane %v4311, 1
      %v4969 = vsel %vm1168, %v4966, %v4968
      %v4970 = vrot.slane %v4312, 1
      %v4971 = vsel %vm1168, %v4968, %v4970
      %v4972 = vrot.slane %v4313, 1
      %v4973 = vsel %vm1168, %v4970, %v4972
      %v4974 = vrot.slane %v4314, 1
      %v4975 = vsel %vm1168, %v4972, %v4974
      %v4976 = vrot.slane %v4315, 1
      %v4977 = vsel %vm1168, %v4974, %v4976
      %v4978 = vrot.slane %v4316, 1
      %v4979 = vsel %vm1168, %v4976, %v4978
      %v4980 = vrot.slane %v4317, 1
      %v4981 = vsel %vm1168, %v4978, %v4980
      %v4982 = vrot.slane %v4318, 1
      %v4983 = vsel %vm1168, %v4980, %v4982
      %v4984 = vrot.slane %v4319, 1
      %v4985 = vsel %vm1168, %v4982, %v4984
      %v4986 = vrot.slane %v4320, 1
      %v4987 = vsel %vm1168, %v4984, %v4986
      %v4988 = vrot.slane %v4321, 1
      %v4989 = vsel %vm1168, %v4986, %v4988
      %v4990 = vrot.slane %v4322, 1
      %v4991 = vsel %vm1168, %v4988, %v4990
      %v4992 = vrot.slane %v4323, 1
      %v4993 = vsel %vm1168, %v4990, %v4992
      %v4994 = vrot.slane %v4324, 1
      %v4995 = vsel %vm1168, %v4992, %v4994
      %v4996 = vrot.slane %v4325, 1
      %v4997 = vsel %vm1168, %v4994, %v4996
      %v4998 = vrot.slane %v4326, 1
      %v4999 = vsel %vm1168, %v4996, %v4998
      %v5000 = vrot.slane %v4327, 1
      %v5001 = vsel %vm1168, %v4998, %v5000
      %v5002 = vrot.slane %v4328, 1
      %v5003 = vsel %vm1168, %v5000, %v5002
      %v5004 = vrot.slane %v4329, 1
      %v5005 = vsel %vm1168, %v5002, %v5004
      %v5006 = vrot.slane %v4330, 1
      %v5007 = vsel %vm1168, %v5004, %v5006
      %v5008 = vrot.slane %v4331, 1
      %v5009 = vsel %vm1168, %v5006, %v5008
      %v5010 = vrot.slane %v4334, 1
      %v5011 = vsel %vm1168, %v5008, %v5010
      %5012 = vrot.lane.b32.xlu0 %v4901, 64
      %v5013 = vpop.permute.xlu0 %5012
      %5014 = vrot.lane.b32.xlu0 %v4903, 64
      %v5015 = vpop.permute.xlu0 %5014
      %5016 = vrot.lane.b32.xlu0 %v4905, 64
      %v5017 = vpop.permute.xlu0 %5016
      %5018 = vrot.lane.b32.xlu0 %v4907, 64
      %v5019 = vpop.permute.xlu0 %5018
      %5020 = vrot.lane.b32.xlu0 %v4909, 64
      %v5021 = vpop.permute.xlu0 %5020
      %5022 = vrot.lane.b32.xlu0 %v4911, 64
      %v5023 = vpop.permute.xlu0 %5022
      %5024 = vrot.lane.b32.xlu0 %v4913, 64
      %v5025 = vpop.permute.xlu0 %5024
      %5026 = vrot.lane.b32.xlu0 %v4915, 64
      %v5027 = vpop.permute.xlu0 %5026
      %5028 = vrot.lane.b32.xlu0 %v4917, 64
      %v5029 = vpop.permute.xlu0 %5028
      %5030 = vrot.lane.b32.xlu0 %v4919, 64
      %v5031 = vpop.permute.xlu0 %5030
      %5032 = vrot.lane.b32.xlu0 %v4921, 64
      %v5033 = vpop.permute.xlu0 %5032
      %5034 = vrot.lane.b32.xlu0 %v4923, 64
      %v5035 = vpop.permute.xlu0 %5034
      %5036 = vrot.lane.b32.xlu0 %v4925, 64
      %v5037 = vpop.permute.xlu0 %5036
      %5038 = vrot.lane.b32.xlu0 %v4927, 64
      %v5039 = vpop.permute.xlu0 %5038
      %5040 = vrot.lane.b32.xlu0 %v4929, 64
      %v5041 = vpop.permute.xlu0 %5040
      %5042 = vrot.lane.b32.xlu0 %v4931, 64
      %v5043 = vpop.permute.xlu0 %5042
      %5044 = vrot.lane.b32.xlu0 %v4933, 64
      %v5045 = vpop.permute.xlu0 %5044
      %5046 = vrot.lane.b32.xlu0 %v4935, 64
      %v5047 = vpop.permute.xlu0 %5046
      %5048 = vrot.lane.b32.xlu0 %v4937, 64
      %v5049 = vpop.permute.xlu0 %5048
      %5050 = vrot.lane.b32.xlu0 %v4939, 64
      %v5051 = vpop.permute.xlu0 %5050
      %5052 = vrot.lane.b32.xlu0 %v4941, 64
      %v5053 = vpop.permute.xlu0 %5052
      %5054 = vrot.lane.b32.xlu0 %v4943, 64
      %v5055 = vpop.permute.xlu0 %5054
      %5056 = vrot.lane.b32.xlu0 %v4945, 64
      %v5057 = vpop.permute.xlu0 %5056
      %5058 = vrot.lane.b32.xlu0 %v4947, 64
      %v5059 = vpop.permute.xlu0 %5058
      %5060 = vrot.lane.b32.xlu0 %v4949, 64
      %v5061 = vpop.permute.xlu0 %5060
      %5062 = vrot.lane.b32.xlu0 %v4951, 64
      %v5063 = vpop.permute.xlu0 %5062
      %5064 = vrot.lane.b32.xlu0 %v4953, 64
      %v5065 = vpop.permute.xlu0 %5064
      %5066 = vrot.lane.b32.xlu0 %v4955, 64
      %v5067 = vpop.permute.xlu0 %5066
      %5068 = vrot.lane.b32.xlu0 %v4957, 64
      %v5069 = vpop.permute.xlu0 %5068
      %5070 = vrot.lane.b32.xlu0 %v4959, 64
      %v5071 = vpop.permute.xlu0 %5070
      %5072 = vrot.lane.b32.xlu0 %v4961, 64
      %v5073 = vpop.permute.xlu0 %5072
      %5074 = vrot.lane.b32.xlu0 %v4963, 64
      %v5075 = vpop.permute.xlu0 %5074
      %5076 = vrot.lane.b32.xlu0 %v4965, 64
      %v5077 = vpop.permute.xlu0 %5076
      %5078 = vrot.lane.b32.xlu0 %v4967, 64
      %v5079 = vpop.permute.xlu0 %5078
      %5080 = vrot.lane.b32.xlu0 %v4969, 64
      %v5081 = vpop.permute.xlu0 %5080
      %5082 = vrot.lane.b32.xlu0 %v4971, 64
      %v5083 = vpop.permute.xlu0 %5082
      %5084 = vrot.lane.b32.xlu0 %v4973, 64
      %v5085 = vpop.permute.xlu0 %5084
      %5086 = vrot.lane.b32.xlu0 %v4975, 64
      %v5087 = vpop.permute.xlu0 %5086
      %5088 = vrot.lane.b32.xlu0 %v4977, 64
      %v5089 = vpop.permute.xlu0 %5088
      %5090 = vrot.lane.b32.xlu0 %v4979, 64
      %v5091 = vpop.permute.xlu0 %5090
      %5092 = vrot.lane.b32.xlu0 %v4981, 64
      %v5093 = vpop.permute.xlu0 %5092
      %5094 = vrot.lane.b32.xlu0 %v4983, 64
      %v5095 = vpop.permute.xlu0 %5094
      %5096 = vrot.lane.b32.xlu0 %v4985, 64
      %v5097 = vpop.permute.xlu0 %5096
      %5098 = vrot.lane.b32.xlu0 %v4987, 64
      %v5099 = vpop.permute.xlu0 %5098
      %5100 = vrot.lane.b32.xlu0 %v4989, 64
      %v5101 = vpop.permute.xlu0 %5100
      %5102 = vrot.lane.b32.xlu0 %v4991, 64
      %v5103 = vpop.permute.xlu0 %5102
      %5104 = vrot.lane.b32.xlu0 %v4993, 64
      %v5105 = vpop.permute.xlu0 %5104
      %5106 = vrot.lane.b32.xlu0 %v4995, 64
      %v5107 = vpop.permute.xlu0 %5106
      %5108 = vrot.lane.b32.xlu0 %v4997, 64
      %v5109 = vpop.permute.xlu0 %5108
      %5110 = vrot.lane.b32.xlu0 %v4999, 64
      %v5111 = vpop.permute.xlu0 %5110
      %5112 = vrot.lane.b32.xlu0 %v5001, 64
      %v5113 = vpop.permute.xlu0 %5112
      %5114 = vrot.lane.b32.xlu0 %v5003, 64
      %v5115 = vpop.permute.xlu0 %5114
      %5116 = vrot.lane.b32.xlu0 %v5005, 64
      %v5117 = vpop.permute.xlu0 %5116
      %5118 = vrot.lane.b32.xlu0 %v5007, 64
      %v5119 = vpop.permute.xlu0 %5118
      %5120 = vrot.lane.b32.xlu0 %v5009, 64
      %v5121 = vpop.permute.xlu0 %5120
      %5122 = vrot.lane.b32.xlu0 %v5011, 64
      %v5123 = vpop.permute.xlu0 %5122
      %v5125 = vsel %vm1394, %v4276, %v4788
      %v5127 = vsel %vm1394, %v4277, %v4790
      %v5129 = vsel %vm1394, %v4278, %v4792
      %v5131 = vsel %vm1394, %v4279, %v4794
      %v5133 = vsel %vm1394, %v4280, %v4796
      %v5135 = vsel %vm1394, %v4281, %v4798
      %v5137 = vsel %vm1394, %v4282, %v4800
      %v5139 = vsel %vm1394, %v4283, %v4802
      %v5141 = vsel %vm1394, %v4284, %v4804
      %v5143 = vsel %vm1394, %v4285, %v4806
      %v5145 = vsel %vm1394, %v4286, %v4808
      %v5147 = vsel %vm1394, %v4287, %v4810
      %v5149 = vsel %vm1394, %v4288, %v4812
      %v5151 = vsel %vm1394, %v4289, %v4814
      %v5153 = vsel %vm1394, %v4290, %v4816
      %v5155 = vsel %vm1394, %v4291, %v4818
      %v5157 = vsel %vm1394, %v4292, %v4820
      %v5159 = vsel %vm1394, %v4293, %v4822
      %v5161 = vsel %vm1394, %v4294, %v4824
      %v5163 = vsel %vm1394, %v4295, %v4826
      %v5165 = vsel %vm1394, %v4296, %v4828
      %v5167 = vsel %vm1394, %v4297, %v4830
      %v5169 = vsel %vm1394, %v4298, %v4832
      %v5171 = vsel %vm1394, %v4299, %v4834
      %v5173 = vsel %vm1394, %v4300, %v4836
      %v5175 = vsel %vm1394, %v4301, %v4838
      %v5177 = vsel %vm1394, %v4302, %v4840
      %v5179 = vsel %vm1394, %v4303, %v4842
      %v5181 = vsel %vm1394, %v4304, %v4844
      %v5183 = vsel %vm1394, %v4305, %v4846
      %v5185 = vsel %vm1394, %v4306, %v4848
      %v5187 = vsel %vm1394, %v4307, %v4850
      %v5189 = vsel %vm1394, %v4308, %v4852
      %v5191 = vsel %vm1394, %v4309, %v4854
      %v5193 = vsel %vm1394, %v4310, %v4856
      %v5195 = vsel %vm1394, %v4311, %v4858
      %v5197 = vsel %vm1394, %v4312, %v4860
      %v5199 = vsel %vm1394, %v4313, %v4862
      %v5201 = vsel %vm1394, %v4314, %v4864
      %v5203 = vsel %vm1394, %v4315, %v4866
      %v5205 = vsel %vm1394, %v4316, %v4868
      %v5207 = vsel %vm1394, %v4317, %v4870
      %v5209 = vsel %vm1394, %v4318, %v4872
      %v5211 = vsel %vm1394, %v4319, %v4874
      %v5213 = vsel %vm1394, %v4320, %v4876
      %v5215 = vsel %vm1394, %v4321, %v4878
      %v5217 = vsel %vm1394, %v4322, %v4880
      %v5219 = vsel %vm1394, %v4323, %v4882
      %v5221 = vsel %vm1394, %v4324, %v4884
      %v5223 = vsel %vm1394, %v4325, %v4886
      %v5225 = vsel %vm1394, %v4326, %v4888
      %v5227 = vsel %vm1394, %v4327, %v4890
      %v5229 = vsel %vm1394, %v4328, %v4892
      %v5231 = vsel %vm1394, %v4329, %v4894
      %v5233 = vsel %vm1394, %v4330, %v4896
      %v5235 = vsel %vm1394, %v4331, %v4898
      %v5237 = vsel %vm1507, %v5125, %v5013
      %v5239 = vsel %vm1507, %v5127, %v5015
      %v5241 = vsel %vm1507, %v5129, %v5017
      %v5243 = vsel %vm1507, %v5131, %v5019
      %v5245 = vsel %vm1507, %v5133, %v5021
      %v5247 = vsel %vm1507, %v5135, %v5023
      %v5249 = vsel %vm1507, %v5137, %v5025
      %v5251 = vsel %vm1507, %v5139, %v5027
      %v5253 = vsel %vm1507, %v5141, %v5029
      %v5255 = vsel %vm1507, %v5143, %v5031
      %v5257 = vsel %vm1507, %v5145, %v5033
      %v5259 = vsel %vm1507, %v5147, %v5035
      %v5261 = vsel %vm1507, %v5149, %v5037
      %v5263 = vsel %vm1507, %v5151, %v5039
      %v5265 = vsel %vm1507, %v5153, %v5041
      %v5267 = vsel %vm1507, %v5155, %v5043
      %v5269 = vsel %vm1507, %v5157, %v5045
      %v5271 = vsel %vm1507, %v5159, %v5047
      %v5273 = vsel %vm1507, %v5161, %v5049
      %v5275 = vsel %vm1507, %v5163, %v5051
      %v5277 = vsel %vm1507, %v5165, %v5053
      %v5279 = vsel %vm1507, %v5167, %v5055
      %v5281 = vsel %vm1507, %v5169, %v5057
      %v5283 = vsel %vm1507, %v5171, %v5059
      %v5285 = vsel %vm1507, %v5173, %v5061
      %v5287 = vsel %vm1507, %v5175, %v5063
      %v5289 = vsel %vm1507, %v5177, %v5065
      %v5291 = vsel %vm1507, %v5179, %v5067
      %v5293 = vsel %vm1507, %v5181, %v5069
      %v5295 = vsel %vm1507, %v5183, %v5071
      %v5297 = vsel %vm1507, %v5185, %v5073
      %v5299 = vsel %vm1507, %v5187, %v5075
      %v5301 = vsel %vm1507, %v5189, %v5077
      %v5303 = vsel %vm1507, %v5191, %v5079
      %v5305 = vsel %vm1507, %v5193, %v5081
      %v5307 = vsel %vm1507, %v5195, %v5083
      %v5309 = vsel %vm1507, %v5197, %v5085
      %v5311 = vsel %vm1507, %v5199, %v5087
      %v5313 = vsel %vm1507, %v5201, %v5089
      %v5315 = vsel %vm1507, %v5203, %v5091
      %v5317 = vsel %vm1507, %v5205, %v5093
      %v5319 = vsel %vm1507, %v5207, %v5095
      %v5321 = vsel %vm1507, %v5209, %v5097
      %v5323 = vsel %vm1507, %v5211, %v5099
      %v5325 = vsel %vm1507, %v5213, %v5101
      %v5327 = vsel %vm1507, %v5215, %v5103
      %v5329 = vsel %vm1507, %v5217, %v5105
      %v5331 = vsel %vm1507, %v5219, %v5107
      %v5333 = vsel %vm1507, %v5221, %v5109
      %v5335 = vsel %vm1507, %v5223, %v5111
      %v5337 = vsel %vm1507, %v5225, %v5113
      %v5339 = vsel %vm1507, %v5227, %v5115
      %v5341 = vsel %vm1507, %v5229, %v5117
      %v5343 = vsel %vm1507, %v5231, %v5119
      %v5345 = vsel %vm1507, %v5233, %v5121
      %v5347 = vsel %vm1507, %v5235, %v5123
      %s5348 = scalar_lea.vmem %s1, 96
      %v5349 = vld [vmem:[%s5348] sm:$0xf]
      %v5350 = vld [vmem:[%s5348 + $0x4] sm:$0xf]
      %v5351 = vld [vmem:[%s5348 + $0x8] sm:$0xf]
      %v5352 = vld [vmem:[%s5348 + $0xc] sm:$0xf]
      %v5353 = vld [vmem:[%s5348 + $0x10] sm:$0xf]
      %v5354 = vld [vmem:[%s5348 + $0x14] sm:$0xf]
      %v5355 = vld [vmem:[%s5348 + $0x18] sm:$0xf]
      %v5356 = vld [vmem:[%s5348 + $0x1c] sm:$0xf]
      %v5357 = vld [vmem:[%s5348 + $0x20] sm:$0xf]
      %v5358 = vld [vmem:[%s5348 + $0x24] sm:$0xf]
      %v5359 = vld [vmem:[%s5348 + $0x28] sm:$0xf]
      %v5360 = vld [vmem:[%s5348 + $0x2c] sm:$0xf]
      %v5373 = vunpack.c.l.b16 %v5349
      %v5374 = vunpack.c.l.b16 %v5350
      %v5375 = vunpack.c.l.b16 %v5351
      %v5376 = vunpack.c.l.b16 %v5352
      %v5377 = vunpack.c.l.b16 %v5353
      %v5378 = vunpack.c.l.b16 %v5354
      %v5379 = vunpack.c.l.b16 %v5355
      %v5380 = vunpack.c.l.b16 %v5356
      %v5381 = vunpack.c.l.b16 %v5357
      %v5382 = vunpack.c.l.b16 %v5358
      %v5383 = vunpack.c.l.b16 %v5359
      %v5384 = vunpack.c.l.b16 %v5360
      %v5385 = vpack.c.b16 %v5374, %v5373
      %v5386 = vpack.c.b16 %v5376, %v5375
      %v5387 = vpack.c.b16 %v5378, %v5377
      %v5388 = vpack.c.b16 %v5380, %v5379
      %v5389 = vpack.c.b16 %v5382, %v5381
      %v5390 = vpack.c.b16 %v5384, %v5383
      %v5397 = vsel %vm3095, %v5237, 0
      %v5399 = vsel %vm3095, %v5239, 0
      %v5401 = vsel %vm3095, %v5241, 0
      %v5403 = vsel %vm3095, %v5243, 0
      %v5405 = vsel %vm3095, %v5245, 0
      %v5407 = vsel %vm3095, %v5247, 0
      %v5409 = vsel %vm3095, %v5249, 0
      %v5411 = vsel %vm3095, %v5251, 0
      %v5413 = vsel %vm3095, %v5253, 0
      %v5415 = vsel %vm3095, %v5255, 0
      %v5417 = vsel %vm3095, %v5257, 0
      %v5419 = vsel %vm3095, %v5259, 0
      %v5421 = vsel %vm3095, %v5261, 0
      %v5423 = vsel %vm3095, %v5263, 0
      %v5425 = vsel %vm3095, %v5265, 0
      %v5427 = vsel %vm3095, %v5267, 0
      %v5429 = vsel %vm3095, %v5269, 0
      %v5431 = vsel %vm3095, %v5271, 0
      %v5433 = vsel %vm3095, %v5273, 0
      %v5435 = vsel %vm3095, %v5275, 0
      %v5437 = vsel %vm3095, %v5277, 0
      %v5439 = vsel %vm3095, %v5279, 0
      %v5441 = vsel %vm3095, %v5281, 0
      %v5443 = vsel %vm3095, %v5283, 0
      %v5445 = vsel %vm3095, %v5285, 0
      %v5447 = vsel %vm3095, %v5287, 0
      %v5449 = vsel %vm3095, %v5289, 0
      %v5451 = vsel %vm3095, %v5291, 0
      %v5453 = vsel %vm3095, %v5293, 0
      %v5455 = vsel %vm3095, %v5295, 0
      %v5457 = vsel %vm3095, %v5297, 0
      %v5459 = vsel %vm3095, %v5299, 0
      %v5461 = vsel %vm3095, %v5301, 0
      %v5463 = vsel %vm3095, %v5303, 0
      %v5465 = vsel %vm3095, %v5305, 0
      %v5467 = vsel %vm3095, %v5307, 0
      %v5469 = vsel %vm3095, %v5309, 0
      %v5471 = vsel %vm3095, %v5311, 0
      %v5473 = vsel %vm3095, %v5313, 0
      %v5475 = vsel %vm3095, %v5315, 0
      %v5477 = vsel %vm3095, %v5317, 0
      %v5479 = vsel %vm3095, %v5319, 0
      %v5481 = vsel %vm3095, %v5321, 0
      %v5483 = vsel %vm3095, %v5323, 0
      %v5485 = vsel %vm3095, %v5325, 0
      %v5487 = vsel %vm3095, %v5327, 0
      %v5489 = vsel %vm3095, %v5329, 0
      %v5491 = vsel %vm3095, %v5331, 0
      %v5493 = vsel %vm3095, %v5333, 0
      %v5495 = vsel %vm3095, %v5335, 0
      %v5497 = vsel %vm3095, %v5337, 0
      %v5499 = vsel %vm3095, %v5339, 0
      %v5501 = vsel %vm3095, %v5341, 0
      %v5503 = vsel %vm3095, %v5343, 0
      %v5505 = vsel %vm3095, %v5345, 0
      %v5507 = vsel %vm3095, %v5347, 0
      %5509 = vmatpush.bf16.msra.mxu0 0
      %5510 = vmatpush.bf16.msra.mxu0 0
      %5511 = vmatpush.bf16.msra.mxu0 %v5390
      %5512 = vmatpush.bf16.msra.mxu0 %v5389
      %5513 = vmatpush.bf16.msra.mxu0 %v5388
      %5514 = vmatpush.bf16.msra.mxu0 %v5387
      %5515 = vmatpush.bf16.msra.mxu0 %v5386
      %5516 = vmatpush.bf16.msra.mxu0 %v5385
      %5517 = vmatmul.bf16.gmra.mxu0 %v5397
      %v5518 = vpop.f32.mrf.mxu0
      %v5519 = vadd.f32 0.0, %v5518
      %v5520 = vpop.f32.mrf.mxu0
      %v5521 = vadd.f32 0.0, %v5520
      %5522 = vmatmul.bf16.gmra.mxu0 %v5399
      %v5523 = vpop.f32.mrf.mxu0
      %v5524 = vadd.f32 0.0, %v5523
      %v5525 = vpop.f32.mrf.mxu0
      %v5526 = vadd.f32 0.0, %v5525
      %5527 = vmatmul.bf16.gmra.mxu0 %v5401
      %v5528 = vpop.f32.mrf.mxu0
      %v5529 = vadd.f32 0.0, %v5528
      %v5530 = vpop.f32.mrf.mxu0
      %v5531 = vadd.f32 0.0, %v5530
      %5532 = vmatmul.bf16.gmra.mxu0 %v5403
      %v5533 = vpop.f32.mrf.mxu0
      %v5534 = vadd.f32 0.0, %v5533
      %v5535 = vpop.f32.mrf.mxu0
      %v5536 = vadd.f32 0.0, %v5535
      %5537 = vmatmul.bf16.gmra.mxu0 %v5405
      %v5538 = vpop.f32.mrf.mxu0
      %v5539 = vadd.f32 0.0, %v5538
      %v5540 = vpop.f32.mrf.mxu0
      %v5541 = vadd.f32 0.0, %v5540
      %5542 = vmatmul.bf16.gmra.mxu0 %v5407
      %v5543 = vpop.f32.mrf.mxu0
      %v5544 = vadd.f32 0.0, %v5543
      %v5545 = vpop.f32.mrf.mxu0
      %v5546 = vadd.f32 0.0, %v5545
      %5547 = vmatmul.bf16.gmra.mxu0 %v5409
      %v5548 = vpop.f32.mrf.mxu0
      %v5549 = vadd.f32 0.0, %v5548
      %v5550 = vpop.f32.mrf.mxu0
      %v5551 = vadd.f32 0.0, %v5550
      %5552 = vmatmul.bf16.gmra.mxu0 %v5411
      %v5553 = vpop.f32.mrf.mxu0
      %v5554 = vadd.f32 0.0, %v5553
      %v5555 = vpop.f32.mrf.mxu0
      %v5556 = vadd.f32 0.0, %v5555
      %5557 = vmatmul.bf16.gmra.mxu0 %v5413
      %v5558 = vpop.f32.mrf.mxu0
      %v5559 = vadd.f32 0.0, %v5558
      %v5560 = vpop.f32.mrf.mxu0
      %v5561 = vadd.f32 0.0, %v5560
      %5562 = vmatmul.bf16.gmra.mxu0 %v5415
      %v5563 = vpop.f32.mrf.mxu0
      %v5564 = vadd.f32 0.0, %v5563
      %v5565 = vpop.f32.mrf.mxu0
      %v5566 = vadd.f32 0.0, %v5565
      %5567 = vmatmul.bf16.gmra.mxu0 %v5417
      %v5568 = vpop.f32.mrf.mxu0
      %v5569 = vadd.f32 0.0, %v5568
      %v5570 = vpop.f32.mrf.mxu0
      %v5571 = vadd.f32 0.0, %v5570
      %5572 = vmatmul.bf16.gmra.mxu0 %v5419
      %v5573 = vpop.f32.mrf.mxu0
      %v5574 = vadd.f32 0.0, %v5573
      %v5575 = vpop.f32.mrf.mxu0
      %v5576 = vadd.f32 0.0, %v5575
      %5577 = vmatmul.bf16.gmra.mxu0 %v5421
      %v5578 = vpop.f32.mrf.mxu0
      %v5579 = vadd.f32 0.0, %v5578
      %v5580 = vpop.f32.mrf.mxu0
      %v5581 = vadd.f32 0.0, %v5580
      %5582 = vmatmul.bf16.gmra.mxu0 %v5423
      %v5583 = vpop.f32.mrf.mxu0
      %v5584 = vadd.f32 0.0, %v5583
      %v5585 = vpop.f32.mrf.mxu0
      %v5586 = vadd.f32 0.0, %v5585
      %5587 = vmatmul.bf16.gmra.mxu0 %v5425
      %v5588 = vpop.f32.mrf.mxu0
      %v5589 = vadd.f32 0.0, %v5588
      %v5590 = vpop.f32.mrf.mxu0
      %v5591 = vadd.f32 0.0, %v5590
      %5592 = vmatmul.bf16.gmra.mxu0 %v5427
      %v5593 = vpop.f32.mrf.mxu0
      %v5594 = vadd.f32 0.0, %v5593
      %v5595 = vpop.f32.mrf.mxu0
      %v5596 = vadd.f32 0.0, %v5595
      %5597 = vmatmul.bf16.gmra.mxu0 %v5429
      %v5598 = vpop.f32.mrf.mxu0
      %v5599 = vadd.f32 0.0, %v5598
      %v5600 = vpop.f32.mrf.mxu0
      %v5601 = vadd.f32 0.0, %v5600
      %5602 = vmatmul.bf16.gmra.mxu0 %v5431
      %v5603 = vpop.f32.mrf.mxu0
      %v5604 = vadd.f32 0.0, %v5603
      %v5605 = vpop.f32.mrf.mxu0
      %v5606 = vadd.f32 0.0, %v5605
      %5607 = vmatmul.bf16.gmra.mxu0 %v5433
      %v5608 = vpop.f32.mrf.mxu0
      %v5609 = vadd.f32 0.0, %v5608
      %v5610 = vpop.f32.mrf.mxu0
      %v5611 = vadd.f32 0.0, %v5610
      %5612 = vmatmul.bf16.gmra.mxu0 %v5435
      %v5613 = vpop.f32.mrf.mxu0
      %v5614 = vadd.f32 0.0, %v5613
      %v5615 = vpop.f32.mrf.mxu0
      %v5616 = vadd.f32 0.0, %v5615
      %5617 = vmatmul.bf16.gmra.mxu0 %v5437
      %v5618 = vpop.f32.mrf.mxu0
      %v5619 = vadd.f32 0.0, %v5618
      %v5620 = vpop.f32.mrf.mxu0
      %v5621 = vadd.f32 0.0, %v5620
      %5622 = vmatmul.bf16.gmra.mxu0 %v5439
      %v5623 = vpop.f32.mrf.mxu0
      %v5624 = vadd.f32 0.0, %v5623
      %v5625 = vpop.f32.mrf.mxu0
      %v5626 = vadd.f32 0.0, %v5625
      %5627 = vmatmul.bf16.gmra.mxu0 %v5441
      %v5628 = vpop.f32.mrf.mxu0
      %v5629 = vadd.f32 0.0, %v5628
      %v5630 = vpop.f32.mrf.mxu0
      %v5631 = vadd.f32 0.0, %v5630
      %5632 = vmatmul.bf16.gmra.mxu0 %v5443
      %v5633 = vpop.f32.mrf.mxu0
      %v5634 = vadd.f32 0.0, %v5633
      %v5635 = vpop.f32.mrf.mxu0
      %v5636 = vadd.f32 0.0, %v5635
      %5637 = vmatmul.bf16.gmra.mxu0 %v5445
      %v5638 = vpop.f32.mrf.mxu0
      %v5639 = vadd.f32 0.0, %v5638
      %v5640 = vpop.f32.mrf.mxu0
      %v5641 = vadd.f32 0.0, %v5640
      %5642 = vmatmul.bf16.gmra.mxu0 %v5447
      %v5643 = vpop.f32.mrf.mxu0
      %v5644 = vadd.f32 0.0, %v5643
      %v5645 = vpop.f32.mrf.mxu0
      %v5646 = vadd.f32 0.0, %v5645
      %5647 = vmatmul.bf16.gmra.mxu0 %v5449
      %v5648 = vpop.f32.mrf.mxu0
      %v5649 = vadd.f32 0.0, %v5648
      %v5650 = vpop.f32.mrf.mxu0
      %v5651 = vadd.f32 0.0, %v5650
      %5652 = vmatmul.bf16.gmra.mxu0 %v5451
      %v5653 = vpop.f32.mrf.mxu0
      %v5654 = vadd.f32 0.0, %v5653
      %v5655 = vpop.f32.mrf.mxu0
      %v5656 = vadd.f32 0.0, %v5655
      %5657 = vmatmul.bf16.gmra.mxu0 %v5453
      %v5658 = vpop.f32.mrf.mxu0
      %v5659 = vadd.f32 0.0, %v5658
      %v5660 = vpop.f32.mrf.mxu0
      %v5661 = vadd.f32 0.0, %v5660
      %5662 = vmatmul.bf16.gmra.mxu0 %v5455
      %v5663 = vpop.f32.mrf.mxu0
      %v5664 = vadd.f32 0.0, %v5663
      %v5665 = vpop.f32.mrf.mxu0
      %v5666 = vadd.f32 0.0, %v5665
      %5667 = vmatmul.bf16.gmra.mxu0 %v5457
      %v5668 = vpop.f32.mrf.mxu0
      %v5669 = vadd.f32 0.0, %v5668
      %v5670 = vpop.f32.mrf.mxu0
      %v5671 = vadd.f32 0.0, %v5670
      %5672 = vmatmul.bf16.gmra.mxu0 %v5459
      %v5673 = vpop.f32.mrf.mxu0
      %v5674 = vadd.f32 0.0, %v5673
      %v5675 = vpop.f32.mrf.mxu0
      %v5676 = vadd.f32 0.0, %v5675
      %5677 = vmatmul.bf16.gmra.mxu0 %v5461
      %v5678 = vpop.f32.mrf.mxu0
      %v5679 = vadd.f32 0.0, %v5678
      %v5680 = vpop.f32.mrf.mxu0
      %v5681 = vadd.f32 0.0, %v5680
      %5682 = vmatmul.bf16.gmra.mxu0 %v5463
      %v5683 = vpop.f32.mrf.mxu0
      %v5684 = vadd.f32 0.0, %v5683
      %v5685 = vpop.f32.mrf.mxu0
      %v5686 = vadd.f32 0.0, %v5685
      %5687 = vmatmul.bf16.gmra.mxu0 %v5465
      %v5688 = vpop.f32.mrf.mxu0
      %v5689 = vadd.f32 0.0, %v5688
      %v5690 = vpop.f32.mrf.mxu0
      %v5691 = vadd.f32 0.0, %v5690
      %5692 = vmatmul.bf16.gmra.mxu0 %v5467
      %v5693 = vpop.f32.mrf.mxu0
      %v5694 = vadd.f32 0.0, %v5693
      %v5695 = vpop.f32.mrf.mxu0
      %v5696 = vadd.f32 0.0, %v5695
      %5697 = vmatmul.bf16.gmra.mxu0 %v5469
      %v5698 = vpop.f32.mrf.mxu0
      %v5699 = vadd.f32 0.0, %v5698
      %v5700 = vpop.f32.mrf.mxu0
      %v5701 = vadd.f32 0.0, %v5700
      %5702 = vmatmul.bf16.gmra.mxu0 %v5471
      %v5703 = vpop.f32.mrf.mxu0
      %v5704 = vadd.f32 0.0, %v5703
      %v5705 = vpop.f32.mrf.mxu0
      %v5706 = vadd.f32 0.0, %v5705
      %5707 = vmatmul.bf16.gmra.mxu0 %v5473
      %v5708 = vpop.f32.mrf.mxu0
      %v5709 = vadd.f32 0.0, %v5708
      %v5710 = vpop.f32.mrf.mxu0
      %v5711 = vadd.f32 0.0, %v5710
      %5712 = vmatmul.bf16.gmra.mxu0 %v5475
      %v5713 = vpop.f32.mrf.mxu0
      %v5714 = vadd.f32 0.0, %v5713
      %v5715 = vpop.f32.mrf.mxu0
      %v5716 = vadd.f32 0.0, %v5715
      %5717 = vmatmul.bf16.gmra.mxu0 %v5477
      %v5718 = vpop.f32.mrf.mxu0
      %v5719 = vadd.f32 0.0, %v5718
      %v5720 = vpop.f32.mrf.mxu0
      %v5721 = vadd.f32 0.0, %v5720
      %5722 = vmatmul.bf16.gmra.mxu0 %v5479
      %v5723 = vpop.f32.mrf.mxu0
      %v5724 = vadd.f32 0.0, %v5723
      %v5725 = vpop.f32.mrf.mxu0
      %v5726 = vadd.f32 0.0, %v5725
      %5727 = vmatmul.bf16.gmra.mxu0 %v5481
      %v5728 = vpop.f32.mrf.mxu0
      %v5729 = vadd.f32 0.0, %v5728
      %v5730 = vpop.f32.mrf.mxu0
      %v5731 = vadd.f32 0.0, %v5730
      %5732 = vmatmul.bf16.gmra.mxu0 %v5483
      %v5733 = vpop.f32.mrf.mxu0
      %v5734 = vadd.f32 0.0, %v5733
      %v5735 = vpop.f32.mrf.mxu0
      %v5736 = vadd.f32 0.0, %v5735
      %5737 = vmatmul.bf16.gmra.mxu0 %v5485
      %v5738 = vpop.f32.mrf.mxu0
      %v5739 = vadd.f32 0.0, %v5738
      %v5740 = vpop.f32.mrf.mxu0
      %v5741 = vadd.f32 0.0, %v5740
      %5742 = vmatmul.bf16.gmra.mxu0 %v5487
      %v5743 = vpop.f32.mrf.mxu0
      %v5744 = vadd.f32 0.0, %v5743
      %v5745 = vpop.f32.mrf.mxu0
      %v5746 = vadd.f32 0.0, %v5745
      %5747 = vmatmul.bf16.gmra.mxu0 %v5489
      %v5748 = vpop.f32.mrf.mxu0
      %v5749 = vadd.f32 0.0, %v5748
      %v5750 = vpop.f32.mrf.mxu0
      %v5751 = vadd.f32 0.0, %v5750
      %5752 = vmatmul.bf16.gmra.mxu0 %v5491
      %v5753 = vpop.f32.mrf.mxu0
      %v5754 = vadd.f32 0.0, %v5753
      %v5755 = vpop.f32.mrf.mxu0
      %v5756 = vadd.f32 0.0, %v5755
      %5757 = vmatmul.bf16.gmra.mxu0 %v5493
      %v5758 = vpop.f32.mrf.mxu0
      %v5759 = vadd.f32 0.0, %v5758
      %v5760 = vpop.f32.mrf.mxu0
      %v5761 = vadd.f32 0.0, %v5760
      %5762 = vmatmul.bf16.gmra.mxu0 %v5495
      %v5763 = vpop.f32.mrf.mxu0
      %v5764 = vadd.f32 0.0, %v5763
      %v5765 = vpop.f32.mrf.mxu0
      %v5766 = vadd.f32 0.0, %v5765
      %5767 = vmatmul.bf16.gmra.mxu0 %v5497
      %v5768 = vpop.f32.mrf.mxu0
      %v5769 = vadd.f32 0.0, %v5768
      %v5770 = vpop.f32.mrf.mxu0
      %v5771 = vadd.f32 0.0, %v5770
      %5772 = vmatmul.bf16.gmra.mxu0 %v5499
      %v5773 = vpop.f32.mrf.mxu0
      %v5774 = vadd.f32 0.0, %v5773
      %v5775 = vpop.f32.mrf.mxu0
      %v5776 = vadd.f32 0.0, %v5775
      %5777 = vmatmul.bf16.gmra.mxu0 %v5501
      %v5778 = vpop.f32.mrf.mxu0
      %v5779 = vadd.f32 0.0, %v5778
      %v5780 = vpop.f32.mrf.mxu0
      %v5781 = vadd.f32 0.0, %v5780
      %5782 = vmatmul.bf16.gmra.mxu0 %v5503
      %v5783 = vpop.f32.mrf.mxu0
      %v5784 = vadd.f32 0.0, %v5783
      %v5785 = vpop.f32.mrf.mxu0
      %v5786 = vadd.f32 0.0, %v5785
      %5787 = vmatmul.bf16.gmra.mxu0 %v5505
      %v5788 = vpop.f32.mrf.mxu0
      %v5789 = vadd.f32 0.0, %v5788
      %v5790 = vpop.f32.mrf.mxu0
      %v5791 = vadd.f32 0.0, %v5790
      %5792 = vmatmul.bf16.gmra.mxu0 %v5507
      %v5793 = vpop.f32.mrf.mxu0
      %v5794 = vadd.f32 0.0, %v5793
      %v5795 = vpop.f32.mrf.mxu0
      %v5796 = vadd.f32 0.0, %v5795
      %5797 = vdwg.mxu0
      %v5798 = vadd.f32 %v3655, %v5519
      %v5799 = vadd.f32 %v3657, %v5521
      %v5800 = vadd.f32 %v3660, %v5524
      %v5801 = vadd.f32 %v3662, %v5526
      %v5802 = vadd.f32 %v3665, %v5529
      %v5803 = vadd.f32 %v3667, %v5531
      %v5804 = vadd.f32 %v3670, %v5534
      %v5805 = vadd.f32 %v3672, %v5536
      %v5806 = vadd.f32 %v3675, %v5539
      %v5807 = vadd.f32 %v3677, %v5541
      %v5808 = vadd.f32 %v3680, %v5544
      %v5809 = vadd.f32 %v3682, %v5546
      %v5810 = vadd.f32 %v3685, %v5549
      %v5811 = vadd.f32 %v3687, %v5551
      %v5812 = vadd.f32 %v3690, %v5554
      %v5813 = vadd.f32 %v3692, %v5556
      %v5814 = vadd.f32 %v3695, %v5559
      %v5815 = vadd.f32 %v3697, %v5561
      %v5816 = vadd.f32 %v3700, %v5564
      %v5817 = vadd.f32 %v3702, %v5566
      %v5818 = vadd.f32 %v3705, %v5569
      %v5819 = vadd.f32 %v3707, %v5571
      %v5820 = vadd.f32 %v3710, %v5574
      %v5821 = vadd.f32 %v3712, %v5576
      %v5822 = vadd.f32 %v3715, %v5579
      %v5823 = vadd.f32 %v3717, %v5581
      %v5824 = vadd.f32 %v3720, %v5584
      %v5825 = vadd.f32 %v3722, %v5586
      %v5826 = vadd.f32 %v3725, %v5589
      %v5827 = vadd.f32 %v3727, %v5591
      %v5828 = vadd.f32 %v3730, %v5594
      %v5829 = vadd.f32 %v3732, %v5596
      %v5830 = vadd.f32 %v3735, %v5599
      %v5831 = vadd.f32 %v3737, %v5601
      %v5832 = vadd.f32 %v3740, %v5604
      %v5833 = vadd.f32 %v3742, %v5606
      %v5834 = vadd.f32 %v3745, %v5609
      %v5835 = vadd.f32 %v3747, %v5611
      %v5836 = vadd.f32 %v3750, %v5614
      %v5837 = vadd.f32 %v3752, %v5616
      %v5838 = vadd.f32 %v3755, %v5619
      %v5839 = vadd.f32 %v3757, %v5621
      %v5840 = vadd.f32 %v3760, %v5624
      %v5841 = vadd.f32 %v3762, %v5626
      %v5842 = vadd.f32 %v3765, %v5629
      %v5843 = vadd.f32 %v3767, %v5631
      %v5844 = vadd.f32 %v3770, %v5634
      %v5845 = vadd.f32 %v3772, %v5636
      %v5846 = vadd.f32 %v3775, %v5639
      %v5847 = vadd.f32 %v3777, %v5641
      %v5848 = vadd.f32 %v3780, %v5644
      %v5849 = vadd.f32 %v3782, %v5646
      %v5850 = vadd.f32 %v3785, %v5649
      %v5851 = vadd.f32 %v3787, %v5651
      %v5852 = vadd.f32 %v3790, %v5654
      %v5853 = vadd.f32 %v3792, %v5656
      %v5854 = vadd.f32 %v3795, %v5659
      %v5855 = vadd.f32 %v3797, %v5661
      %v5856 = vadd.f32 %v3800, %v5664
      %v5857 = vadd.f32 %v3802, %v5666
      %v5858 = vadd.f32 %v3805, %v5669
      %v5859 = vadd.f32 %v3807, %v5671
      %v5860 = vadd.f32 %v3810, %v5674
      %v5861 = vadd.f32 %v3812, %v5676
      %v5862 = vadd.f32 %v3815, %v5679
      %v5863 = vadd.f32 %v3817, %v5681
      %v5864 = vadd.f32 %v3820, %v5684
      %v5865 = vadd.f32 %v3822, %v5686
      %v5866 = vadd.f32 %v3825, %v5689
      %v5867 = vadd.f32 %v3827, %v5691
      %v5868 = vadd.f32 %v3830, %v5694
      %v5869 = vadd.f32 %v3832, %v5696
      %v5870 = vadd.f32 %v3835, %v5699
      %v5871 = vadd.f32 %v3837, %v5701
      %v5872 = vadd.f32 %v3840, %v5704
      %v5873 = vadd.f32 %v3842, %v5706
      %v5874 = vadd.f32 %v3845, %v5709
      %v5875 = vadd.f32 %v3847, %v5711
      %v5876 = vadd.f32 %v3850, %v5714
      %v5877 = vadd.f32 %v3852, %v5716
      %v5878 = vadd.f32 %v3855, %v5719
      %v5879 = vadd.f32 %v3857, %v5721
      %v5880 = vadd.f32 %v3860, %v5724
      %v5881 = vadd.f32 %v3862, %v5726
      %v5882 = vadd.f32 %v3865, %v5729
      %v5883 = vadd.f32 %v3867, %v5731
      %v5884 = vadd.f32 %v3870, %v5734
      %v5885 = vadd.f32 %v3872, %v5736
      %v5886 = vadd.f32 %v3875, %v5739
      %v5887 = vadd.f32 %v3877, %v5741
      %v5888 = vadd.f32 %v3880, %v5744
      %v5889 = vadd.f32 %v3882, %v5746
      %v5890 = vadd.f32 %v3885, %v5749
      %v5891 = vadd.f32 %v3887, %v5751
      %v5892 = vadd.f32 %v3890, %v5754
      %v5893 = vadd.f32 %v3892, %v5756
      %v5894 = vadd.f32 %v3895, %v5759
      %v5895 = vadd.f32 %v3897, %v5761
      %v5896 = vadd.f32 %v3900, %v5764
      %v5897 = vadd.f32 %v3902, %v5766
      %v5898 = vadd.f32 %v3905, %v5769
      %v5899 = vadd.f32 %v3907, %v5771
      %v5900 = vadd.f32 %v3910, %v5774
      %v5901 = vadd.f32 %v3912, %v5776
      %v5902 = vadd.f32 %v3915, %v5779
      %v5903 = vadd.f32 %v3917, %v5781
      %v5904 = vadd.f32 %v3920, %v5784
      %v5905 = vadd.f32 %v3922, %v5786
      %v5906 = vadd.f32 %v3925, %v5789
      %v5907 = vadd.f32 %v3927, %v5791
      %v5908 = vadd.f32 %v3930, %v5794
      %v5909 = vadd.f32 %v3932, %v5796
      %v5910 = vld [vmem:[%s2] sm:$0x1]
      %v5912 = vperm.slane %v5910, 0
      %v5914 = vadd.f32 %v5798, %v5912
      %v5915 = vadd.f32 %v5799, %v5912
      %v5916 = vadd.f32 %v5800, %v5912
      %v5917 = vadd.f32 %v5801, %v5912
      %v5918 = vadd.f32 %v5802, %v5912
      %v5919 = vadd.f32 %v5803, %v5912
      %v5920 = vadd.f32 %v5804, %v5912
      %v5921 = vadd.f32 %v5805, %v5912
      %v5922 = vadd.f32 %v5806, %v5912
      %v5923 = vadd.f32 %v5807, %v5912
      %v5924 = vadd.f32 %v5808, %v5912
      %v5925 = vadd.f32 %v5809, %v5912
      %v5926 = vadd.f32 %v5810, %v5912
      %v5927 = vadd.f32 %v5811, %v5912
      %v5928 = vadd.f32 %v5812, %v5912
      %v5929 = vadd.f32 %v5813, %v5912
      %v5930 = vadd.f32 %v5814, %v5912
      %v5931 = vadd.f32 %v5815, %v5912
      %v5932 = vadd.f32 %v5816, %v5912
      %v5933 = vadd.f32 %v5817, %v5912
      %v5934 = vadd.f32 %v5818, %v5912
      %v5935 = vadd.f32 %v5819, %v5912
      %v5936 = vadd.f32 %v5820, %v5912
      %v5937 = vadd.f32 %v5821, %v5912
      %v5938 = vadd.f32 %v5822, %v5912
      %v5939 = vadd.f32 %v5823, %v5912
      %v5940 = vadd.f32 %v5824, %v5912
      %v5941 = vadd.f32 %v5825, %v5912
      %v5942 = vadd.f32 %v5826, %v5912
      %v5943 = vadd.f32 %v5827, %v5912
      %v5944 = vadd.f32 %v5828, %v5912
      %v5945 = vadd.f32 %v5829, %v5912
      %v5946 = vadd.f32 %v5830, %v5912
      %v5947 = vadd.f32 %v5831, %v5912
      %v5948 = vadd.f32 %v5832, %v5912
      %v5949 = vadd.f32 %v5833, %v5912
      %v5950 = vadd.f32 %v5834, %v5912
      %v5951 = vadd.f32 %v5835, %v5912
      %v5952 = vadd.f32 %v5836, %v5912
      %v5953 = vadd.f32 %v5837, %v5912
      %v5954 = vadd.f32 %v5838, %v5912
      %v5955 = vadd.f32 %v5839, %v5912
      %v5956 = vadd.f32 %v5840, %v5912
      %v5957 = vadd.f32 %v5841, %v5912
      %v5958 = vadd.f32 %v5842, %v5912
      %v5959 = vadd.f32 %v5843, %v5912
      %v5960 = vadd.f32 %v5844, %v5912
      %v5961 = vadd.f32 %v5845, %v5912
      %v5962 = vadd.f32 %v5846, %v5912
      %v5963 = vadd.f32 %v5847, %v5912
      %v5964 = vadd.f32 %v5848, %v5912
      %v5965 = vadd.f32 %v5849, %v5912
      %v5966 = vadd.f32 %v5850, %v5912
      %v5967 = vadd.f32 %v5851, %v5912
      %v5968 = vadd.f32 %v5852, %v5912
      %v5969 = vadd.f32 %v5853, %v5912
      %v5970 = vadd.f32 %v5854, %v5912
      %v5971 = vadd.f32 %v5855, %v5912
      %v5972 = vadd.f32 %v5856, %v5912
      %v5973 = vadd.f32 %v5857, %v5912
      %v5974 = vadd.f32 %v5858, %v5912
      %v5975 = vadd.f32 %v5859, %v5912
      %v5976 = vadd.f32 %v5860, %v5912
      %v5977 = vadd.f32 %v5861, %v5912
      %v5978 = vadd.f32 %v5862, %v5912
      %v5979 = vadd.f32 %v5863, %v5912
      %v5980 = vadd.f32 %v5864, %v5912
      %v5981 = vadd.f32 %v5865, %v5912
      %v5982 = vadd.f32 %v5866, %v5912
      %v5983 = vadd.f32 %v5867, %v5912
      %v5984 = vadd.f32 %v5868, %v5912
      %v5985 = vadd.f32 %v5869, %v5912
      %v5986 = vadd.f32 %v5870, %v5912
      %v5987 = vadd.f32 %v5871, %v5912
      %v5988 = vadd.f32 %v5872, %v5912
      %v5989 = vadd.f32 %v5873, %v5912
      %v5990 = vadd.f32 %v5874, %v5912
      %v5991 = vadd.f32 %v5875, %v5912
      %v5992 = vadd.f32 %v5876, %v5912
      %v5993 = vadd.f32 %v5877, %v5912
      %v5994 = vadd.f32 %v5878, %v5912
      %v5995 = vadd.f32 %v5879, %v5912
      %v5996 = vadd.f32 %v5880, %v5912
      %v5997 = vadd.f32 %v5881, %v5912
      %v5998 = vadd.f32 %v5882, %v5912
      %v5999 = vadd.f32 %v5883, %v5912
      %v6000 = vadd.f32 %v5884, %v5912
      %v6001 = vadd.f32 %v5885, %v5912
      %v6002 = vadd.f32 %v5886, %v5912
      %v6003 = vadd.f32 %v5887, %v5912
      %v6004 = vadd.f32 %v5888, %v5912
      %v6005 = vadd.f32 %v5889, %v5912
      %v6006 = vadd.f32 %v5890, %v5912
      %v6007 = vadd.f32 %v5891, %v5912
      %v6008 = vadd.f32 %v5892, %v5912
      %v6009 = vadd.f32 %v5893, %v5912
      %v6010 = vadd.f32 %v5894, %v5912
      %v6011 = vadd.f32 %v5895, %v5912
      %v6012 = vadd.f32 %v5896, %v5912
      %v6013 = vadd.f32 %v5897, %v5912
      %v6014 = vadd.f32 %v5898, %v5912
      %v6015 = vadd.f32 %v5899, %v5912
      %v6016 = vadd.f32 %v5900, %v5912
      %v6017 = vadd.f32 %v5901, %v5912
      %v6018 = vadd.f32 %v5902, %v5912
      %v6019 = vadd.f32 %v5903, %v5912
      %v6020 = vadd.f32 %v5904, %v5912
      %v6021 = vadd.f32 %v5905, %v5912
      %v6022 = vadd.f32 %v5906, %v5912
      %v6023 = vadd.f32 %v5907, %v5912
      %v6024 = vadd.f32 %v5908, %v5912
      %v6025 = vadd.f32 %v5909, %v5912
      %v6026 = vld [vmem:[%s193] sm:$0xf]
      %v6027 = vld [vmem:[%s193 + $0x4] sm:$0xf]
      %v6028 = vld [vmem:[%s193 + $0x8] sm:$0xf]
      %v6029 = vld [vmem:[%s193 + $0xc] sm:$0xf]
      %v6030 = vld [vmem:[%s193 + $0x10] sm:$0xf]
      %v6031 = vld [vmem:[%s193 + $0x14] sm:$0xf]
      %v6032 = vld [vmem:[%s193 + $0x18] sm:$0xf]
      %v6033 = vld [vmem:[%s193 + $0x1c] sm:$0xf]
      %v6034 = vld [vmem:[%s193 + $0x20] sm:$0xf]
      %v6035 = vld [vmem:[%s193 + $0x24] sm:$0xf]
      %v6036 = vld [vmem:[%s193 + $0x28] sm:$0xf]
      %v6037 = vld [vmem:[%s193 + $0x2c] sm:$0xf]
      %v6038 = vld [vmem:[%s193 + $0x30] sm:$0xf]
      %v6039 = vld [vmem:[%s193 + $0x34] sm:$0xf]
      %v6040 = vld [vmem:[%s193 + $0x38] sm:$0xf]
      %v6041 = vld [vmem:[%s193 + $0x3c] sm:$0xf]
      %v6042 = vld [vmem:[%s193 + $0x40] sm:$0xf]
      %v6043 = vld [vmem:[%s193 + $0x44] sm:$0xf]
      %v6044 = vld [vmem:[%s193 + $0x48] sm:$0xf]
      %v6045 = vld [vmem:[%s193 + $0x4c] sm:$0xf]
      %v6046 = vld [vmem:[%s193 + $0x50] sm:$0xf]
      %v6047 = vld [vmem:[%s193 + $0x54] sm:$0xf]
      %v6048 = vld [vmem:[%s193 + $0x58] sm:$0xf]
      %v6049 = vld [vmem:[%s193 + $0x5c] sm:$0xf]
      %v6050 = vld [vmem:[%s193 + $0x60] sm:$0xf]
      %v6051 = vld [vmem:[%s193 + $0x64] sm:$0xf]
      %v6052 = vld [vmem:[%s193 + $0x68] sm:$0xf]
      %v6053 = vld [vmem:[%s193 + $0x6c] sm:$0xf]
      %v6054 = vld [vmem:[%s193 + $0x70] sm:$0xf]
      %v6055 = vld [vmem:[%s193 + $0x74] sm:$0xf]
      %v6056 = vld [vmem:[%s193 + $0x78] sm:$0xf]
      %v6057 = vld [vmem:[%s193 + $0x7c] sm:$0xf]
      %v6058 = vld [vmem:[%s193 + $0x80] sm:$0xf]
      %v6059 = vld [vmem:[%s193 + $0x84] sm:$0xf]
      %v6060 = vld [vmem:[%s193 + $0x88] sm:$0xf]
      %v6061 = vld [vmem:[%s193 + $0x8c] sm:$0xf]
      %v6062 = vld [vmem:[%s193 + $0x90] sm:$0xf]
      %v6063 = vld [vmem:[%s193 + $0x94] sm:$0xf]
      %v6064 = vld [vmem:[%s193 + $0x98] sm:$0xf]
      %v6065 = vld [vmem:[%s193 + $0x9c] sm:$0xf]
      %v6066 = vld [vmem:[%s193 + $0xa0] sm:$0xf]
      %v6067 = vld [vmem:[%s193 + $0xa4] sm:$0xf]
      %v6068 = vld [vmem:[%s193 + $0xa8] sm:$0xf]
      %v6069 = vld [vmem:[%s193 + $0xac] sm:$0xf]
      %v6070 = vld [vmem:[%s193 + $0xb0] sm:$0xf]
      %v6071 = vld [vmem:[%s193 + $0xb4] sm:$0xf]
      %v6072 = vld [vmem:[%s193 + $0xb8] sm:$0xf]
      %v6073 = vld [vmem:[%s193 + $0xbc] sm:$0xf]
      %v6074 = vld [vmem:[%s193 + $0xc0] sm:$0xf]
      %v6075 = vld [vmem:[%s193 + $0xc4] sm:$0xf]
      %v6076 = vld [vmem:[%s193 + $0xc8] sm:$0xf]
      %v6077 = vld [vmem:[%s193 + $0xcc] sm:$0xf]
      %v6078 = vld [vmem:[%s193 + $0xd0] sm:$0xf]
      %v6079 = vld [vmem:[%s193 + $0xd4] sm:$0xf]
      %v6080 = vld [vmem:[%s193 + $0xd8] sm:$0xf]
      %v6081 = vld [vmem:[%s193 + $0xdc] sm:$0xf]
      %v6082 = vld [vmem:[%s193 + $0xe0] sm:$0xf]
      %v6083 = vld [vmem:[%s193 + $0xe4] sm:$0xf]
      %v6084 = vld [vmem:[%s193 + $0xe8] sm:$0xf]
      %v6085 = vld [vmem:[%s193 + $0xec] sm:$0xf]
      %v6086 = vld [vmem:[%s193 + $0xf0] sm:$0xf]
      %v6087 = vld [vmem:[%s193 + $0xf4] sm:$0xf]
      %v6088 = vld [vmem:[%s193 + $0xf8] sm:$0xf]
      %v6089 = vld [vmem:[%s193 + $0xfc] sm:$0xf]
      %v6090 = vld [vmem:[%s193 + $0x100] sm:$0xf]
      %v6091 = vld [vmem:[%s193 + $0x104] sm:$0xf]
      %v6092 = vld [vmem:[%s193 + $0x108] sm:$0xf]
      %v6093 = vld [vmem:[%s193 + $0x10c] sm:$0xf]
      %v6094 = vld [vmem:[%s193 + $0x110] sm:$0xf]
      %v6095 = vld [vmem:[%s193 + $0x114] sm:$0xf]
      %v6096 = vld [vmem:[%s193 + $0x118] sm:$0xf]
      %v6097 = vld [vmem:[%s193 + $0x11c] sm:$0xf]
      %v6098 = vld [vmem:[%s193 + $0x120] sm:$0xf]
      %v6099 = vld [vmem:[%s193 + $0x124] sm:$0xf]
      %v6100 = vld [vmem:[%s193 + $0x128] sm:$0xf]
      %v6101 = vld [vmem:[%s193 + $0x12c] sm:$0xf]
      %v6102 = vld [vmem:[%s193 + $0x130] sm:$0xf]
      %v6103 = vld [vmem:[%s193 + $0x134] sm:$0xf]
      %v6104 = vld [vmem:[%s193 + $0x138] sm:$0xf]
      %v6105 = vld [vmem:[%s193 + $0x13c] sm:$0xf]
      %v6106 = vld [vmem:[%s193 + $0x140] sm:$0xf]
      %v6107 = vld [vmem:[%s193 + $0x144] sm:$0xf]
      %v6108 = vld [vmem:[%s193 + $0x148] sm:$0xf]
      %v6109 = vld [vmem:[%s193 + $0x14c] sm:$0xf]
      %v6110 = vld [vmem:[%s193 + $0x150] sm:$0xf]
      %v6111 = vld [vmem:[%s193 + $0x154] sm:$0xf]
      %v6112 = vld [vmem:[%s193 + $0x158] sm:$0xf]
      %v6113 = vld [vmem:[%s193 + $0x15c] sm:$0xf]
      %v6114 = vld [vmem:[%s193 + $0x160] sm:$0xf]
      %v6115 = vld [vmem:[%s193 + $0x164] sm:$0xf]
      %v6116 = vld [vmem:[%s193 + $0x168] sm:$0xf]
      %v6117 = vld [vmem:[%s193 + $0x16c] sm:$0xf]
      %v6118 = vld [vmem:[%s193 + $0x170] sm:$0xf]
      %v6119 = vld [vmem:[%s193 + $0x174] sm:$0xf]
      %v6120 = vld [vmem:[%s193 + $0x178] sm:$0xf]
      %v6121 = vld [vmem:[%s193 + $0x17c] sm:$0xf]
      %v6122 = vld [vmem:[%s193 + $0x180] sm:$0xf]
      %v6123 = vld [vmem:[%s193 + $0x184] sm:$0xf]
      %v6124 = vld [vmem:[%s193 + $0x188] sm:$0xf]
      %v6125 = vld [vmem:[%s193 + $0x18c] sm:$0xf]
      %v6126 = vld [vmem:[%s193 + $0x190] sm:$0xf]
      %v6127 = vld [vmem:[%s193 + $0x194] sm:$0xf]
      %v6128 = vld [vmem:[%s193 + $0x198] sm:$0xf]
      %v6129 = vld [vmem:[%s193 + $0x19c] sm:$0xf]
      %v6130 = vld [vmem:[%s193 + $0x1a0] sm:$0xf]
      %v6131 = vld [vmem:[%s193 + $0x1a4] sm:$0xf]
      %v6132 = vld [vmem:[%s193 + $0x1a8] sm:$0xf]
      %v6133 = vld [vmem:[%s193 + $0x1ac] sm:$0xf]
      %v6134 = vld [vmem:[%s193 + $0x1b0] sm:$0xf]
      %v6135 = vld [vmem:[%s193 + $0x1b4] sm:$0xf]
      %v6136 = vld [vmem:[%s193 + $0x1b8] sm:$0xf]
      %v6137 = vld [vmem:[%s193 + $0x1bc] sm:$0xf]
      %v6138 = vunpack.c.l.bf16 %v6026
      %v6139 = vunpack.c.l.bf16 %v6027
      %v6140 = vunpack.c.l.bf16 %v6028
      %v6141 = vunpack.c.l.bf16 %v6029
      %v6142 = vunpack.c.l.bf16 %v6030
      %v6143 = vunpack.c.l.bf16 %v6031
      %v6144 = vunpack.c.l.bf16 %v6032
      %v6145 = vunpack.c.l.bf16 %v6033
      %v6146 = vunpack.c.l.bf16 %v6034
      %v6147 = vunpack.c.l.bf16 %v6035
      %v6148 = vunpack.c.l.bf16 %v6036
      %v6149 = vunpack.c.l.bf16 %v6037
      %v6150 = vunpack.c.l.bf16 %v6038
      %v6151 = vunpack.c.l.bf16 %v6039
      %v6152 = vunpack.c.l.bf16 %v6040
      %v6153 = vunpack.c.l.bf16 %v6041
      %v6154 = vunpack.c.l.bf16 %v6042
      %v6155 = vunpack.c.l.bf16 %v6043
      %v6156 = vunpack.c.l.bf16 %v6044
      %v6157 = vunpack.c.l.bf16 %v6045
      %v6158 = vunpack.c.l.bf16 %v6046
      %v6159 = vunpack.c.l.bf16 %v6047
      %v6160 = vunpack.c.l.bf16 %v6048
      %v6161 = vunpack.c.l.bf16 %v6049
      %v6162 = vunpack.c.l.bf16 %v6050
      %v6163 = vunpack.c.l.bf16 %v6051
      %v6164 = vunpack.c.l.bf16 %v6052
      %v6165 = vunpack.c.l.bf16 %v6053
      %v6166 = vunpack.c.l.bf16 %v6054
      %v6167 = vunpack.c.l.bf16 %v6055
      %v6168 = vunpack.c.l.bf16 %v6056
      %v6169 = vunpack.c.l.bf16 %v6057
      %v6170 = vunpack.c.l.bf16 %v6058
      %v6171 = vunpack.c.l.bf16 %v6059
      %v6172 = vunpack.c.l.bf16 %v6060
      %v6173 = vunpack.c.l.bf16 %v6061
      %v6174 = vunpack.c.l.bf16 %v6062
      %v6175 = vunpack.c.l.bf16 %v6063
      %v6176 = vunpack.c.l.bf16 %v6064
      %v6177 = vunpack.c.l.bf16 %v6065
      %v6178 = vunpack.c.l.bf16 %v6066
      %v6179 = vunpack.c.l.bf16 %v6067
      %v6180 = vunpack.c.l.bf16 %v6068
      %v6181 = vunpack.c.l.bf16 %v6069
      %v6182 = vunpack.c.l.bf16 %v6070
      %v6183 = vunpack.c.l.bf16 %v6071
      %v6184 = vunpack.c.l.bf16 %v6072
      %v6185 = vunpack.c.l.bf16 %v6073
      %v6186 = vunpack.c.l.bf16 %v6074
      %v6187 = vunpack.c.l.bf16 %v6075
      %v6188 = vunpack.c.l.bf16 %v6076
      %v6189 = vunpack.c.l.bf16 %v6077
      %v6190 = vunpack.c.l.bf16 %v6078
      %v6191 = vunpack.c.l.bf16 %v6079
      %v6192 = vunpack.c.l.bf16 %v6080
      %v6193 = vunpack.c.l.bf16 %v6081
      %v6194 = vunpack.c.l.bf16 %v6082
      %v6195 = vunpack.c.l.bf16 %v6083
      %v6196 = vunpack.c.l.bf16 %v6084
      %v6197 = vunpack.c.l.bf16 %v6085
      %v6198 = vunpack.c.l.bf16 %v6086
      %v6199 = vunpack.c.l.bf16 %v6087
      %v6200 = vunpack.c.l.bf16 %v6088
      %v6201 = vunpack.c.l.bf16 %v6089
      %v6202 = vunpack.c.l.bf16 %v6090
      %v6203 = vunpack.c.l.bf16 %v6091
      %v6204 = vunpack.c.l.bf16 %v6092
      %v6205 = vunpack.c.l.bf16 %v6093
      %v6206 = vunpack.c.l.bf16 %v6094
      %v6207 = vunpack.c.l.bf16 %v6095
      %v6208 = vunpack.c.l.bf16 %v6096
      %v6209 = vunpack.c.l.bf16 %v6097
      %v6210 = vunpack.c.l.bf16 %v6098
      %v6211 = vunpack.c.l.bf16 %v6099
      %v6212 = vunpack.c.l.bf16 %v6100
      %v6213 = vunpack.c.l.bf16 %v6101
      %v6214 = vunpack.c.l.bf16 %v6102
      %v6215 = vunpack.c.l.bf16 %v6103
      %v6216 = vunpack.c.l.bf16 %v6104
      %v6217 = vunpack.c.l.bf16 %v6105
      %v6218 = vunpack.c.l.bf16 %v6106
      %v6219 = vunpack.c.l.bf16 %v6107
      %v6220 = vunpack.c.l.bf16 %v6108
      %v6221 = vunpack.c.l.bf16 %v6109
      %v6222 = vunpack.c.l.bf16 %v6110
      %v6223 = vunpack.c.l.bf16 %v6111
      %v6224 = vunpack.c.l.bf16 %v6112
      %v6225 = vunpack.c.l.bf16 %v6113
      %v6226 = vunpack.c.l.bf16 %v6114
      %v6227 = vunpack.c.l.bf16 %v6115
      %v6228 = vunpack.c.l.bf16 %v6116
      %v6229 = vunpack.c.l.bf16 %v6117
      %v6230 = vunpack.c.l.bf16 %v6118
      %v6231 = vunpack.c.l.bf16 %v6119
      %v6232 = vunpack.c.l.bf16 %v6120
      %v6233 = vunpack.c.l.bf16 %v6121
      %v6234 = vunpack.c.l.bf16 %v6122
      %v6235 = vunpack.c.l.bf16 %v6123
      %v6236 = vunpack.c.l.bf16 %v6124
      %v6237 = vunpack.c.l.bf16 %v6125
      %v6238 = vunpack.c.l.bf16 %v6126
      %v6239 = vunpack.c.l.bf16 %v6127
      %v6240 = vunpack.c.l.bf16 %v6128
      %v6241 = vunpack.c.l.bf16 %v6129
      %v6242 = vunpack.c.l.bf16 %v6130
      %v6243 = vunpack.c.l.bf16 %v6131
      %v6244 = vunpack.c.l.bf16 %v6132
      %v6245 = vunpack.c.l.bf16 %v6133
      %v6246 = vunpack.c.l.bf16 %v6134
      %v6247 = vunpack.c.l.bf16 %v6135
      %v6248 = vunpack.c.l.bf16 %v6136
      %v6249 = vunpack.c.l.bf16 %v6137
      %v6250 = vadd.f32 %v5914, %v6138
      %v6251 = vadd.f32 %v5915, %v6139
      %v6252 = vadd.f32 %v5916, %v6140
      %v6253 = vadd.f32 %v5917, %v6141
      %v6254 = vadd.f32 %v5918, %v6142
      %v6255 = vadd.f32 %v5919, %v6143
      %v6256 = vadd.f32 %v5920, %v6144
      %v6257 = vadd.f32 %v5921, %v6145
      %v6258 = vadd.f32 %v5922, %v6146
      %v6259 = vadd.f32 %v5923, %v6147
      %v6260 = vadd.f32 %v5924, %v6148
      %v6261 = vadd.f32 %v5925, %v6149
      %v6262 = vadd.f32 %v5926, %v6150
      %v6263 = vadd.f32 %v5927, %v6151
      %v6264 = vadd.f32 %v5928, %v6152
      %v6265 = vadd.f32 %v5929, %v6153
      %v6266 = vadd.f32 %v5930, %v6154
      %v6267 = vadd.f32 %v5931, %v6155
      %v6268 = vadd.f32 %v5932, %v6156
      %v6269 = vadd.f32 %v5933, %v6157
      %v6270 = vadd.f32 %v5934, %v6158
      %v6271 = vadd.f32 %v5935, %v6159
      %v6272 = vadd.f32 %v5936, %v6160
      %v6273 = vadd.f32 %v5937, %v6161
      %v6274 = vadd.f32 %v5938, %v6162
      %v6275 = vadd.f32 %v5939, %v6163
      %v6276 = vadd.f32 %v5940, %v6164
      %v6277 = vadd.f32 %v5941, %v6165
      %v6278 = vadd.f32 %v5942, %v6166
      %v6279 = vadd.f32 %v5943, %v6167
      %v6280 = vadd.f32 %v5944, %v6168
      %v6281 = vadd.f32 %v5945, %v6169
      %v6282 = vadd.f32 %v5946, %v6170
      %v6283 = vadd.f32 %v5947, %v6171
      %v6284 = vadd.f32 %v5948, %v6172
      %v6285 = vadd.f32 %v5949, %v6173
      %v6286 = vadd.f32 %v5950, %v6174
      %v6287 = vadd.f32 %v5951, %v6175
      %v6288 = vadd.f32 %v5952, %v6176
      %v6289 = vadd.f32 %v5953, %v6177
      %v6290 = vadd.f32 %v5954, %v6178
      %v6291 = vadd.f32 %v5955, %v6179
      %v6292 = vadd.f32 %v5956, %v6180
      %v6293 = vadd.f32 %v5957, %v6181
      %v6294 = vadd.f32 %v5958, %v6182
      %v6295 = vadd.f32 %v5959, %v6183
      %v6296 = vadd.f32 %v5960, %v6184
      %v6297 = vadd.f32 %v5961, %v6185
      %v6298 = vadd.f32 %v5962, %v6186
      %v6299 = vadd.f32 %v5963, %v6187
      %v6300 = vadd.f32 %v5964, %v6188
      %v6301 = vadd.f32 %v5965, %v6189
      %v6302 = vadd.f32 %v5966, %v6190
      %v6303 = vadd.f32 %v5967, %v6191
      %v6304 = vadd.f32 %v5968, %v6192
      %v6305 = vadd.f32 %v5969, %v6193
      %v6306 = vadd.f32 %v5970, %v6194
      %v6307 = vadd.f32 %v5971, %v6195
      %v6308 = vadd.f32 %v5972, %v6196
      %v6309 = vadd.f32 %v5973, %v6197
      %v6310 = vadd.f32 %v5974, %v6198
      %v6311 = vadd.f32 %v5975, %v6199
      %v6312 = vadd.f32 %v5976, %v6200
      %v6313 = vadd.f32 %v5977, %v6201
      %v6314 = vadd.f32 %v5978, %v6202
      %v6315 = vadd.f32 %v5979, %v6203
      %v6316 = vadd.f32 %v5980, %v6204
      %v6317 = vadd.f32 %v5981, %v6205
      %v6318 = vadd.f32 %v5982, %v6206
      %v6319 = vadd.f32 %v5983, %v6207
      %v6320 = vadd.f32 %v5984, %v6208
      %v6321 = vadd.f32 %v5985, %v6209
      %v6322 = vadd.f32 %v5986, %v6210
      %v6323 = vadd.f32 %v5987, %v6211
      %v6324 = vadd.f32 %v5988, %v6212
      %v6325 = vadd.f32 %v5989, %v6213
      %v6326 = vadd.f32 %v5990, %v6214
      %v6327 = vadd.f32 %v5991, %v6215
      %v6328 = vadd.f32 %v5992, %v6216
      %v6329 = vadd.f32 %v5993, %v6217
      %v6330 = vadd.f32 %v5994, %v6218
      %v6331 = vadd.f32 %v5995, %v6219
      %v6332 = vadd.f32 %v5996, %v6220
      %v6333 = vadd.f32 %v5997, %v6221
      %v6334 = vadd.f32 %v5998, %v6222
      %v6335 = vadd.f32 %v5999, %v6223
      %v6336 = vadd.f32 %v6000, %v6224
      %v6337 = vadd.f32 %v6001, %v6225
      %v6338 = vadd.f32 %v6002, %v6226
      %v6339 = vadd.f32 %v6003, %v6227
      %v6340 = vadd.f32 %v6004, %v6228
      %v6341 = vadd.f32 %v6005, %v6229
      %v6342 = vadd.f32 %v6006, %v6230
      %v6343 = vadd.f32 %v6007, %v6231
      %v6344 = vadd.f32 %v6008, %v6232
      %v6345 = vadd.f32 %v6009, %v6233
      %v6346 = vadd.f32 %v6010, %v6234
      %v6347 = vadd.f32 %v6011, %v6235
      %v6348 = vadd.f32 %v6012, %v6236
      %v6349 = vadd.f32 %v6013, %v6237
      %v6350 = vadd.f32 %v6014, %v6238
      %v6351 = vadd.f32 %v6015, %v6239
      %v6352 = vadd.f32 %v6016, %v6240
      %v6353 = vadd.f32 %v6017, %v6241
      %v6354 = vadd.f32 %v6018, %v6242
      %v6355 = vadd.f32 %v6019, %v6243
      %v6356 = vadd.f32 %v6020, %v6244
      %v6357 = vadd.f32 %v6021, %v6245
      %v6358 = vadd.f32 %v6022, %v6246
      %v6359 = vadd.f32 %v6023, %v6247
      %v6360 = vadd.f32 %v6024, %v6248
      %v6361 = vadd.f32 %v6025, %v6249
      %v6362 = vmax.f32 %v6250, 0.0
      %v6363 = vmax.f32 %v6251, 0.0
      %v6364 = vmax.f32 %v6252, 0.0
      %v6365 = vmax.f32 %v6253, 0.0
      %v6366 = vmax.f32 %v6254, 0.0
      %v6367 = vmax.f32 %v6255, 0.0
      %v6368 = vmax.f32 %v6256, 0.0
      %v6369 = vmax.f32 %v6257, 0.0
      %v6370 = vmax.f32 %v6258, 0.0
      %v6371 = vmax.f32 %v6259, 0.0
      %v6372 = vmax.f32 %v6260, 0.0
      %v6373 = vmax.f32 %v6261, 0.0
      %v6374 = vmax.f32 %v6262, 0.0
      %v6375 = vmax.f32 %v6263, 0.0
      %v6376 = vmax.f32 %v6264, 0.0
      %v6377 = vmax.f32 %v6265, 0.0
      %v6378 = vmax.f32 %v6266, 0.0
      %v6379 = vmax.f32 %v6267, 0.0
      %v6380 = vmax.f32 %v6268, 0.0
      %v6381 = vmax.f32 %v6269, 0.0
      %v6382 = vmax.f32 %v6270, 0.0
      %v6383 = vmax.f32 %v6271, 0.0
      %v6384 = vmax.f32 %v6272, 0.0
      %v6385 = vmax.f32 %v6273, 0.0
      %v6386 = vmax.f32 %v6274, 0.0
      %v6387 = vmax.f32 %v6275, 0.0
      %v6388 = vmax.f32 %v6276, 0.0
      %v6389 = vmax.f32 %v6277, 0.0
      %v6390 = vmax.f32 %v6278, 0.0
      %v6391 = vmax.f32 %v6279, 0.0
      %v6392 = vmax.f32 %v6280, 0.0
      %v6393 = vmax.f32 %v6281, 0.0
      %v6394 = vmax.f32 %v6282, 0.0
      %v6395 = vmax.f32 %v6283, 0.0
      %v6396 = vmax.f32 %v6284, 0.0
      %v6397 = vmax.f32 %v6285, 0.0
      %v6398 = vmax.f32 %v6286, 0.0
      %v6399 = vmax.f32 %v6287, 0.0
      %v6400 = vmax.f32 %v6288, 0.0
      %v6401 = vmax.f32 %v6289, 0.0
      %v6402 = vmax.f32 %v6290, 0.0
      %v6403 = vmax.f32 %v6291, 0.0
      %v6404 = vmax.f32 %v6292, 0.0
      %v6405 = vmax.f32 %v6293, 0.0
      %v6406 = vmax.f32 %v6294, 0.0
      %v6407 = vmax.f32 %v6295, 0.0
      %v6408 = vmax.f32 %v6296, 0.0
      %v6409 = vmax.f32 %v6297, 0.0
      %v6410 = vmax.f32 %v6298, 0.0
      %v6411 = vmax.f32 %v6299, 0.0
      %v6412 = vmax.f32 %v6300, 0.0
      %v6413 = vmax.f32 %v6301, 0.0
      %v6414 = vmax.f32 %v6302, 0.0
      %v6415 = vmax.f32 %v6303, 0.0
      %v6416 = vmax.f32 %v6304, 0.0
      %v6417 = vmax.f32 %v6305, 0.0
      %v6418 = vmax.f32 %v6306, 0.0
      %v6419 = vmax.f32 %v6307, 0.0
      %v6420 = vmax.f32 %v6308, 0.0
      %v6421 = vmax.f32 %v6309, 0.0
      %v6422 = vmax.f32 %v6310, 0.0
      %v6423 = vmax.f32 %v6311, 0.0
      %v6424 = vmax.f32 %v6312, 0.0
      %v6425 = vmax.f32 %v6313, 0.0
      %v6426 = vmax.f32 %v6314, 0.0
      %v6427 = vmax.f32 %v6315, 0.0
      %v6428 = vmax.f32 %v6316, 0.0
      %v6429 = vmax.f32 %v6317, 0.0
      %v6430 = vmax.f32 %v6318, 0.0
      %v6431 = vmax.f32 %v6319, 0.0
      %v6432 = vmax.f32 %v6320, 0.0
      %v6433 = vmax.f32 %v6321, 0.0
      %v6434 = vmax.f32 %v6322, 0.0
      %v6435 = vmax.f32 %v6323, 0.0
      %v6436 = vmax.f32 %v6324, 0.0
      %v6437 = vmax.f32 %v6325, 0.0
      %v6438 = vmax.f32 %v6326, 0.0
      %v6439 = vmax.f32 %v6327, 0.0
      %v6440 = vmax.f32 %v6328, 0.0
      %v6441 = vmax.f32 %v6329, 0.0
      %v6442 = vmax.f32 %v6330, 0.0
      %v6443 = vmax.f32 %v6331, 0.0
      %v6444 = vmax.f32 %v6332, 0.0
      %v6445 = vmax.f32 %v6333, 0.0
      %v6446 = vmax.f32 %v6334, 0.0
      %v6447 = vmax.f32 %v6335, 0.0
      %v6448 = vmax.f32 %v6336, 0.0
      %v6449 = vmax.f32 %v6337, 0.0
      %v6450 = vmax.f32 %v6338, 0.0
      %v6451 = vmax.f32 %v6339, 0.0
      %v6452 = vmax.f32 %v6340, 0.0
      %v6453 = vmax.f32 %v6341, 0.0
      %v6454 = vmax.f32 %v6342, 0.0
      %v6455 = vmax.f32 %v6343, 0.0
      %v6456 = vmax.f32 %v6344, 0.0
      %v6457 = vmax.f32 %v6345, 0.0
      %v6458 = vmax.f32 %v6346, 0.0
      %v6459 = vmax.f32 %v6347, 0.0
      %v6460 = vmax.f32 %v6348, 0.0
      %v6461 = vmax.f32 %v6349, 0.0
      %v6462 = vmax.f32 %v6350, 0.0
      %v6463 = vmax.f32 %v6351, 0.0
      %v6464 = vmax.f32 %v6352, 0.0
      %v6465 = vmax.f32 %v6353, 0.0
      %v6466 = vmax.f32 %v6354, 0.0
      %v6467 = vmax.f32 %v6355, 0.0
      %v6468 = vmax.f32 %v6356, 0.0
      %v6469 = vmax.f32 %v6357, 0.0
      %v6470 = vmax.f32 %v6358, 0.0
      %v6471 = vmax.f32 %v6359, 0.0
      %v6472 = vmax.f32 %v6360, 0.0
      %v6473 = vmax.f32 %v6361, 0.0
      %v6474 = vpack.c.bf16 %v6362, %v6362
      %v6475 = vpack.c.bf16 %v6363, %v6363
      %v6476 = vpack.c.bf16 %v6364, %v6364
      %v6477 = vpack.c.bf16 %v6365, %v6365
      %v6478 = vpack.c.bf16 %v6366, %v6366
      %v6479 = vpack.c.bf16 %v6367, %v6367
      %v6480 = vpack.c.bf16 %v6368, %v6368
      %v6481 = vpack.c.bf16 %v6369, %v6369
      %v6482 = vpack.c.bf16 %v6370, %v6370
      %v6483 = vpack.c.bf16 %v6371, %v6371
      %v6484 = vpack.c.bf16 %v6372, %v6372
      %v6485 = vpack.c.bf16 %v6373, %v6373
      %v6486 = vpack.c.bf16 %v6374, %v6374
      %v6487 = vpack.c.bf16 %v6375, %v6375
      %v6488 = vpack.c.bf16 %v6376, %v6376
      %v6489 = vpack.c.bf16 %v6377, %v6377
      %v6490 = vpack.c.bf16 %v6378, %v6378
      %v6491 = vpack.c.bf16 %v6379, %v6379
      %v6492 = vpack.c.bf16 %v6380, %v6380
      %v6493 = vpack.c.bf16 %v6381, %v6381
      %v6494 = vpack.c.bf16 %v6382, %v6382
      %v6495 = vpack.c.bf16 %v6383, %v6383
      %v6496 = vpack.c.bf16 %v6384, %v6384
      %v6497 = vpack.c.bf16 %v6385, %v6385
      %v6498 = vpack.c.bf16 %v6386, %v6386
      %v6499 = vpack.c.bf16 %v6387, %v6387
      %v6500 = vpack.c.bf16 %v6388, %v6388
      %v6501 = vpack.c.bf16 %v6389, %v6389
      %v6502 = vpack.c.bf16 %v6390, %v6390
      %v6503 = vpack.c.bf16 %v6391, %v6391
      %v6504 = vpack.c.bf16 %v6392, %v6392
      %v6505 = vpack.c.bf16 %v6393, %v6393
      %v6506 = vpack.c.bf16 %v6394, %v6394
      %v6507 = vpack.c.bf16 %v6395, %v6395
      %v6508 = vpack.c.bf16 %v6396, %v6396
      %v6509 = vpack.c.bf16 %v6397, %v6397
      %v6510 = vpack.c.bf16 %v6398, %v6398
      %v6511 = vpack.c.bf16 %v6399, %v6399
      %v6512 = vpack.c.bf16 %v6400, %v6400
      %v6513 = vpack.c.bf16 %v6401, %v6401
      %v6514 = vpack.c.bf16 %v6402, %v6402
      %v6515 = vpack.c.bf16 %v6403, %v6403
      %v6516 = vpack.c.bf16 %v6404, %v6404
      %v6517 = vpack.c.bf16 %v6405, %v6405
      %v6518 = vpack.c.bf16 %v6406, %v6406
      %v6519 = vpack.c.bf16 %v6407, %v6407
      %v6520 = vpack.c.bf16 %v6408, %v6408
      %v6521 = vpack.c.bf16 %v6409, %v6409
      %v6522 = vpack.c.bf16 %v6410, %v6410
      %v6523 = vpack.c.bf16 %v6411, %v6411
      %v6524 = vpack.c.bf16 %v6412, %v6412
      %v6525 = vpack.c.bf16 %v6413, %v6413
      %v6526 = vpack.c.bf16 %v6414, %v6414
      %v6527 = vpack.c.bf16 %v6415, %v6415
      %v6528 = vpack.c.bf16 %v6416, %v6416
      %v6529 = vpack.c.bf16 %v6417, %v6417
      %v6530 = vpack.c.bf16 %v6418, %v6418
      %v6531 = vpack.c.bf16 %v6419, %v6419
      %v6532 = vpack.c.bf16 %v6420, %v6420
      %v6533 = vpack.c.bf16 %v6421, %v6421
      %v6534 = vpack.c.bf16 %v6422, %v6422
      %v6535 = vpack.c.bf16 %v6423, %v6423
      %v6536 = vpack.c.bf16 %v6424, %v6424
      %v6537 = vpack.c.bf16 %v6425, %v6425
      %v6538 = vpack.c.bf16 %v6426, %v6426
      %v6539 = vpack.c.bf16 %v6427, %v6427
      %v6540 = vpack.c.bf16 %v6428, %v6428
      %v6541 = vpack.c.bf16 %v6429, %v6429
      %v6542 = vpack.c.bf16 %v6430, %v6430
      %v6543 = vpack.c.bf16 %v6431, %v6431
      %v6544 = vpack.c.bf16 %v6432, %v6432
      %v6545 = vpack.c.bf16 %v6433, %v6433
      %v6546 = vpack.c.bf16 %v6434, %v6434
      %v6547 = vpack.c.bf16 %v6435, %v6435
      %v6548 = vpack.c.bf16 %v6436, %v6436
      %v6549 = vpack.c.bf16 %v6437, %v6437
      %v6550 = vpack.c.bf16 %v6438, %v6438
      %v6551 = vpack.c.bf16 %v6439, %v6439
      %v6552 = vpack.c.bf16 %v6440, %v6440
      %v6553 = vpack.c.bf16 %v6441, %v6441
      %v6554 = vpack.c.bf16 %v6442, %v6442
      %v6555 = vpack.c.bf16 %v6443, %v6443
      %v6556 = vpack.c.bf16 %v6444, %v6444
      %v6557 = vpack.c.bf16 %v6445, %v6445
      %v6558 = vpack.c.bf16 %v6446, %v6446
      %v6559 = vpack.c.bf16 %v6447, %v6447
      %v6560 = vpack.c.bf16 %v6448, %v6448
      %v6561 = vpack.c.bf16 %v6449, %v6449
      %v6562 = vpack.c.bf16 %v6450, %v6450
      %v6563 = vpack.c.bf16 %v6451, %v6451
      %v6564 = vpack.c.bf16 %v6452, %v6452
      %v6565 = vpack.c.bf16 %v6453, %v6453
      %v6566 = vpack.c.bf16 %v6454, %v6454
      %v6567 = vpack.c.bf16 %v6455, %v6455
      %v6568 = vpack.c.bf16 %v6456, %v6456
      %v6569 = vpack.c.bf16 %v6457, %v6457
      %v6570 = vpack.c.bf16 %v6458, %v6458
      %v6571 = vpack.c.bf16 %v6459, %v6459
      %v6572 = vpack.c.bf16 %v6460, %v6460
      %v6573 = vpack.c.bf16 %v6461, %v6461
      %v6574 = vpack.c.bf16 %v6462, %v6462
      %v6575 = vpack.c.bf16 %v6463, %v6463
      %v6576 = vpack.c.bf16 %v6464, %v6464
      %v6577 = vpack.c.bf16 %v6465, %v6465
      %v6578 = vpack.c.bf16 %v6466, %v6466
      %v6579 = vpack.c.bf16 %v6467, %v6467
      %v6580 = vpack.c.bf16 %v6468, %v6468
      %v6581 = vpack.c.bf16 %v6469, %v6469
      %v6582 = vpack.c.bf16 %v6470, %v6470
      %v6583 = vpack.c.bf16 %v6471, %v6471
      %v6584 = vpack.c.bf16 %v6472, %v6472
      %v6585 = vpack.c.bf16 %v6473, %v6473
      %vm6586 = vcmask 519168
      %6587 = vst.msk [vmem:[%s199] sm:$0xf] %vm6586, %v6474
      %6588 = vst.msk [vmem:[%s199 + $0x4] sm:$0xf] %vm6586, %v6475
      %6589 = vst.msk [vmem:[%s199 + $0x8] sm:$0xf] %vm6586, %v6476
      %6590 = vst.msk [vmem:[%s199 + $0xc] sm:$0xf] %vm6586, %v6477
      %6591 = vst.msk [vmem:[%s199 + $0x10] sm:$0xf] %vm6586, %v6478
      %6592 = vst.msk [vmem:[%s199 + $0x14] sm:$0xf] %vm6586, %v6479
      %6593 = vst.msk [vmem:[%s199 + $0x18] sm:$0xf] %vm6586, %v6480
      %6594 = vst.msk [vmem:[%s199 + $0x1c] sm:$0xf] %vm6586, %v6481
      %6595 = vst.msk [vmem:[%s199 + $0x20] sm:$0xf] %vm6586, %v6482
      %6596 = vst.msk [vmem:[%s199 + $0x24] sm:$0xf] %vm6586, %v6483
      %6597 = vst.msk [vmem:[%s199 + $0x28] sm:$0xf] %vm6586, %v6484
      %6598 = vst.msk [vmem:[%s199 + $0x2c] sm:$0xf] %vm6586, %v6485
      %6599 = vst.msk [vmem:[%s199 + $0x30] sm:$0xf] %vm6586, %v6486
      %6600 = vst.msk [vmem:[%s199 + $0x34] sm:$0xf] %vm6586, %v6487
      %6601 = vst.msk [vmem:[%s199 + $0x38] sm:$0xf] %vm6586, %v6488
      %6602 = vst.msk [vmem:[%s199 + $0x3c] sm:$0xf] %vm6586, %v6489
      %6603 = vst.msk [vmem:[%s199 + $0x40] sm:$0xf] %vm6586, %v6490
      %6604 = vst.msk [vmem:[%s199 + $0x44] sm:$0xf] %vm6586, %v6491
      %6605 = vst.msk [vmem:[%s199 + $0x48] sm:$0xf] %vm6586, %v6492
      %6606 = vst.msk [vmem:[%s199 + $0x4c] sm:$0xf] %vm6586, %v6493
      %6607 = vst.msk [vmem:[%s199 + $0x50] sm:$0xf] %vm6586, %v6494
      %6608 = vst.msk [vmem:[%s199 + $0x54] sm:$0xf] %vm6586, %v6495
      %6609 = vst.msk [vmem:[%s199 + $0x58] sm:$0xf] %vm6586, %v6496
      %6610 = vst.msk [vmem:[%s199 + $0x5c] sm:$0xf] %vm6586, %v6497
      %6611 = vst.msk [vmem:[%s199 + $0x60] sm:$0xf] %vm6586, %v6498
      %6612 = vst.msk [vmem:[%s199 + $0x64] sm:$0xf] %vm6586, %v6499
      %6613 = vst.msk [vmem:[%s199 + $0x68] sm:$0xf] %vm6586, %v6500
      %6614 = vst.msk [vmem:[%s199 + $0x6c] sm:$0xf] %vm6586, %v6501
      %6615 = vst.msk [vmem:[%s199 + $0x70] sm:$0xf] %vm6586, %v6502
      %6616 = vst.msk [vmem:[%s199 + $0x74] sm:$0xf] %vm6586, %v6503
      %6617 = vst.msk [vmem:[%s199 + $0x78] sm:$0xf] %vm6586, %v6504
      %6618 = vst.msk [vmem:[%s199 + $0x7c] sm:$0xf] %vm6586, %v6505
      %6619 = vst.msk [vmem:[%s199 + $0x80] sm:$0xf] %vm6586, %v6506
      %6620 = vst.msk [vmem:[%s199 + $0x84] sm:$0xf] %vm6586, %v6507
      %6621 = vst.msk [vmem:[%s199 + $0x88] sm:$0xf] %vm6586, %v6508
      %6622 = vst.msk [vmem:[%s199 + $0x8c] sm:$0xf] %vm6586, %v6509
      %6623 = vst.msk [vmem:[%s199 + $0x90] sm:$0xf] %vm6586, %v6510
      %6624 = vst.msk [vmem:[%s199 + $0x94] sm:$0xf] %vm6586, %v6511
      %6625 = vst.msk [vmem:[%s199 + $0x98] sm:$0xf] %vm6586, %v6512
      %6626 = vst.msk [vmem:[%s199 + $0x9c] sm:$0xf] %vm6586, %v6513
      %6627 = vst.msk [vmem:[%s199 + $0xa0] sm:$0xf] %vm6586, %v6514
      %6628 = vst.msk [vmem:[%s199 + $0xa4] sm:$0xf] %vm6586, %v6515
      %6629 = vst.msk [vmem:[%s199 + $0xa8] sm:$0xf] %vm6586, %v6516
      %6630 = vst.msk [vmem:[%s199 + $0xac] sm:$0xf] %vm6586, %v6517
      %6631 = vst.msk [vmem:[%s199 + $0xb0] sm:$0xf] %vm6586, %v6518
      %6632 = vst.msk [vmem:[%s199 + $0xb4] sm:$0xf] %vm6586, %v6519
      %6633 = vst.msk [vmem:[%s199 + $0xb8] sm:$0xf] %vm6586, %v6520
      %6634 = vst.msk [vmem:[%s199 + $0xbc] sm:$0xf] %vm6586, %v6521
      %6635 = vst.msk [vmem:[%s199 + $0xc0] sm:$0xf] %vm6586, %v6522
      %6636 = vst.msk [vmem:[%s199 + $0xc4] sm:$0xf] %vm6586, %v6523
      %6637 = vst.msk [vmem:[%s199 + $0xc8] sm:$0xf] %vm6586, %v6524
      %6638 = vst.msk [vmem:[%s199 + $0xcc] sm:$0xf] %vm6586, %v6525
      %6639 = vst.msk [vmem:[%s199 + $0xd0] sm:$0xf] %vm6586, %v6526
      %6640 = vst.msk [vmem:[%s199 + $0xd4] sm:$0xf] %vm6586, %v6527
      %6641 = vst.msk [vmem:[%s199 + $0xd8] sm:$0xf] %vm6586, %v6528
      %6642 = vst.msk [vmem:[%s199 + $0xdc] sm:$0xf] %vm6586, %v6529
      %6643 = vst.msk [vmem:[%s199 + $0xe0] sm:$0xf] %vm6586, %v6530
      %6644 = vst.msk [vmem:[%s199 + $0xe4] sm:$0xf] %vm6586, %v6531
      %6645 = vst.msk [vmem:[%s199 + $0xe8] sm:$0xf] %vm6586, %v6532
      %6646 = vst.msk [vmem:[%s199 + $0xec] sm:$0xf] %vm6586, %v6533
      %6647 = vst.msk [vmem:[%s199 + $0xf0] sm:$0xf] %vm6586, %v6534
      %6648 = vst.msk [vmem:[%s199 + $0xf4] sm:$0xf] %vm6586, %v6535
      %6649 = vst.msk [vmem:[%s199 + $0xf8] sm:$0xf] %vm6586, %v6536
      %6650 = vst.msk [vmem:[%s199 + $0xfc] sm:$0xf] %vm6586, %v6537
      %6651 = vst.msk [vmem:[%s199 + $0x100] sm:$0xf] %vm6586, %v6538
      %6652 = vst.msk [vmem:[%s199 + $0x104] sm:$0xf] %vm6586, %v6539
      %6653 = vst.msk [vmem:[%s199 + $0x108] sm:$0xf] %vm6586, %v6540
      %6654 = vst.msk [vmem:[%s199 + $0x10c] sm:$0xf] %vm6586, %v6541
      %6655 = vst.msk [vmem:[%s199 + $0x110] sm:$0xf] %vm6586, %v6542
      %6656 = vst.msk [vmem:[%s199 + $0x114] sm:$0xf] %vm6586, %v6543
      %6657 = vst.msk [vmem:[%s199 + $0x118] sm:$0xf] %vm6586, %v6544
      %6658 = vst.msk [vmem:[%s199 + $0x11c] sm:$0xf] %vm6586, %v6545
      %6659 = vst.msk [vmem:[%s199 + $0x120] sm:$0xf] %vm6586, %v6546
      %6660 = vst.msk [vmem:[%s199 + $0x124] sm:$0xf] %vm6586, %v6547
      %6661 = vst.msk [vmem:[%s199 + $0x128] sm:$0xf] %vm6586, %v6548
      %6662 = vst.msk [vmem:[%s199 + $0x12c] sm:$0xf] %vm6586, %v6549
      %6663 = vst.msk [vmem:[%s199 + $0x130] sm:$0xf] %vm6586, %v6550
      %6664 = vst.msk [vmem:[%s199 + $0x134] sm:$0xf] %vm6586, %v6551
      %6665 = vst.msk [vmem:[%s199 + $0x138] sm:$0xf] %vm6586, %v6552
      %6666 = vst.msk [vmem:[%s199 + $0x13c] sm:$0xf] %vm6586, %v6553
      %6667 = vst.msk [vmem:[%s199 + $0x140] sm:$0xf] %vm6586, %v6554
      %6668 = vst.msk [vmem:[%s199 + $0x144] sm:$0xf] %vm6586, %v6555
      %6669 = vst.msk [vmem:[%s199 + $0x148] sm:$0xf] %vm6586, %v6556
      %6670 = vst.msk [vmem:[%s199 + $0x14c] sm:$0xf] %vm6586, %v6557
      %6671 = vst.msk [vmem:[%s199 + $0x150] sm:$0xf] %vm6586, %v6558
      %6672 = vst.msk [vmem:[%s199 + $0x154] sm:$0xf] %vm6586, %v6559
      %6673 = vst.msk [vmem:[%s199 + $0x158] sm:$0xf] %vm6586, %v6560
      %6674 = vst.msk [vmem:[%s199 + $0x15c] sm:$0xf] %vm6586, %v6561
      %6675 = vst.msk [vmem:[%s199 + $0x160] sm:$0xf] %vm6586, %v6562
      %6676 = vst.msk [vmem:[%s199 + $0x164] sm:$0xf] %vm6586, %v6563
      %6677 = vst.msk [vmem:[%s199 + $0x168] sm:$0xf] %vm6586, %v6564
      %6678 = vst.msk [vmem:[%s199 + $0x16c] sm:$0xf] %vm6586, %v6565
      %6679 = vst.msk [vmem:[%s199 + $0x170] sm:$0xf] %vm6586, %v6566
      %6680 = vst.msk [vmem:[%s199 + $0x174] sm:$0xf] %vm6586, %v6567
      %6681 = vst.msk [vmem:[%s199 + $0x178] sm:$0xf] %vm6586, %v6568
      %6682 = vst.msk [vmem:[%s199 + $0x17c] sm:$0xf] %vm6586, %v6569
      %6683 = vst.msk [vmem:[%s199 + $0x180] sm:$0xf] %vm6586, %v6570
      %6684 = vst.msk [vmem:[%s199 + $0x184] sm:$0xf] %vm6586, %v6571
      %6685 = vst.msk [vmem:[%s199 + $0x188] sm:$0xf] %vm6586, %v6572
      %6686 = vst.msk [vmem:[%s199 + $0x18c] sm:$0xf] %vm6586, %v6573
      %6687 = vst.msk [vmem:[%s199 + $0x190] sm:$0xf] %vm6586, %v6574
      %6688 = vst.msk [vmem:[%s199 + $0x194] sm:$0xf] %vm6586, %v6575
      %6689 = vst.msk [vmem:[%s199 + $0x198] sm:$0xf] %vm6586, %v6576
      %6690 = vst.msk [vmem:[%s199 + $0x19c] sm:$0xf] %vm6586, %v6577
      %6691 = vst.msk [vmem:[%s199 + $0x1a0] sm:$0xf] %vm6586, %v6578
      %6692 = vst.msk [vmem:[%s199 + $0x1a4] sm:$0xf] %vm6586, %v6579
      %6693 = vst.msk [vmem:[%s199 + $0x1a8] sm:$0xf] %vm6586, %v6580
      %6694 = vst.msk [vmem:[%s199 + $0x1ac] sm:$0xf] %vm6586, %v6581
      %6695 = vst.msk [vmem:[%s199 + $0x1b0] sm:$0xf] %vm6586, %v6582
      %6696 = vst.msk [vmem:[%s199 + $0x1b4] sm:$0xf] %vm6586, %v6583
      %6697 = vst.msk [vmem:[%s199 + $0x1b8] sm:$0xf] %vm6586, %v6584
      %6698 = vst.msk [vmem:[%s199 + $0x1bc] sm:$0xf] %vm6586, %v6585
      %s6699 = smul.u32 112, %s15
      %p6700 = scmp.lt.s32.totalorder %s6699, 223
      %s6701 = scalar_select %p6700, %s6699, 223
      %s6702 = smul.addr %s6701, 4
      %s6703 = scalar_lea.vmem %s4, %s6702
      // Predicated region
      $region37: #{tpu_custom_call.1} parent=35 // pred_check
        %p6704 = pneg %p122
      $region38: #{tpu_custom_call.1} parent=35 // pred_check_branch
        %6706 = sbr.rel (%p6704) target = $region40
      $region39: #{tpu_custom_call.1} parent=35 // pred_region
        %s6707 = smul.u32 112, %s15
      $region40: #{tpu_custom_call.1} parent=35 // pred_fallthru
        _
    $region36: #{tpu_custom_call.1} parent=5 // pred_fallthru
      _
    %p6708 = scmp.le.s32.totalorder 2, %s10
    // Predicated region
    $region41: #{tpu_custom_call.1} parent=5 // pred_check
      %p6709 = pneg %p6708
    $region42: #{tpu_custom_call.1} parent=5 // pred_check_branch
      %6711 = sbr.rel (%p6709) target = $region44
    $region43: #{tpu_custom_call.1} parent=5 // pred_region
      %s6712 = ssub.s32 %s10, 2
      // Predicated region
      $region45: #{tpu_custom_call.1} parent=43 // pred_check
        %p6713 = pneg %p128
      $region46: #{tpu_custom_call.1} parent=43 // pred_check_branch
        %6715 = sbr.rel (%p6713) target = $region48
      $region47: #{tpu_custom_call.1} parent=43 // pred_region
        %s6716 = smul.u32 112, %s16
        %p6717 = scmp.lt.s32.totalorder %s6716, 223
        %s6718 = scalar_select %p6717, %s6716, 223
        %s6719 = smul.addr %s6718, 4
        %s6720 = scalar_lea.vmem %s4, %s6719
      $region48: #{tpu_custom_call.1} parent=43 // pred_fallthru
        _
    $region44: #{tpu_custom_call.1} parent=5 // pred_fallthru
      _
  $region6: #{tpu_custom_call.1} parent=0 // loop_footer
    %s14 = sadd.s32 1, %s10
  $region7: #{tpu_custom_call.1} parent=0 // loop_footer_branch
    %9 = sbr.rel target = $region3
  $region8: #{tpu_custom_call.1} parent=0 // loop_exit
    _

</llo_original>
